<compile_context>
chip_gen: v7x
topology: tpu7x:2x2x1
jax: 0.10.0
libtpu: 0.0.40
codegen_flags: <defaults>
</compile_context>

<pallas_src>
import functools

import jax
import jax.numpy as jnp
from jax import lax
from jax.experimental import pallas as pl
from jax.experimental.pallas import tpu as pltpu

HIDDEN = 512
EPS = 1e-5


def _instance_norm(z):
    """Single-pass InstanceNorm over the last (length/lane) axis, f32 math."""
    n = z.shape[-1]
    s = jnp.sum(z, axis=-1, keepdims=True)
    ss = jnp.sum(z * z, axis=-1, keepdims=True)
    mu = s * (1.0 / n)
    var = ss * (1.0 / n) - mu * mu
    return (z - mu) * lax.rsqrt(var + EPS)


def ins_res_block_kernel(x_ref, w1t_ref, w2_ref, o_ref, *, block_n):
    w1t = w1t_ref[...]  # (C, H)  lane-dense
    w2 = w2_ref[...]    # (C, H)  lane-dense

    # Static unroll over the batch elements of this block (block_n is small);
    # each iteration is a (C,L)-slab pipeline kept entirely in VMEM.
    for n in range(block_n):
        xn = x_ref[n]  # (C, L)

        # Conv1d(C_in -> 512, k=1): w1t^T @ x  -> (H, L).
        # Bias omitted: cancelled exactly by the InstanceNorm mean subtraction.
        h = lax.dot_general(w1t, xn, (((0,), (0,)), ((), ())),
                            preferred_element_type=jnp.float32)
        # InstanceNorm1d(512) + ReLU
        h = jnp.maximum(_instance_norm(h), 0.0)

        # Conv1d(512 -> C_in, k=1): w2 @ h -> (C, L). Bias omitted (same reason).
        y = jnp.dot(w2, h, preferred_element_type=jnp.float32)
        # InstanceNorm1d(C_in)
        y = _instance_norm(y)

        # TODO(synk): Dropout(p=0.5) omitted (module used with dropout=False;
        # identity at eval time anyway).

        # residual add
        o_ref[n] = (y + xn).astype(o_ref.dtype)


def ins_res_block(x, w1, w2, *, block_n=2):
    """x: (N, C, L) f32; w1: (HIDDEN, C) conv1 weight (kernel dim squeezed);
    w2: (C, HIDDEN). Conv biases are intentionally not taken: they are no-ops
    under the following InstanceNorm layers."""
    N, C, L = x.shape
    H = w1.shape[0]
    assert N % block_n == 0, "batch must be divisible by block_n"

    w1t = jnp.transpose(w1)  # (C, H): lane-dense weight layout for VMEM

    kernel = functools.partial(ins_res_block_kernel, block_n=block_n)
    return pl.pallas_call(
        kernel,
        out_shape=jax.ShapeDtypeStruct((N, C, L), x.dtype),
        grid_spec=pltpu.PrefetchScalarGridSpec(
            num_scalar_prefetch=0,
            grid=(N // block_n,),
            in_specs=[
                pl.BlockSpec((block_n, C, L), lambda i: (i, 0, 0)),  # x block
                pl.BlockSpec((C, H), lambda i: (0, 0)),              # w1^T
                pl.BlockSpec((C, H), lambda i: (0, 0)),              # w2
            ],
            out_specs=pl.BlockSpec((block_n, C, L), lambda i: (i, 0, 0)),
        ),
        compiler_params=pltpu.CompilerParams(
            dimension_semantics=("parallel",),
        ),
    )(x, w1t, w2)


def reference(x, w1, b1, w2, b2):
    """Pure-JAX reference of the PyTorch forward, *including* the conv biases
    (two-pass InstanceNorm), to verify the bias-elision in the kernel."""
    def two_pass_norm(z):
        mu = jnp.mean(z, axis=-1, keepdims=True)
        var = jnp.mean((z - mu) ** 2, axis=-1, keepdims=True)
        return (z - mu) * lax.rsqrt(var + EPS)

    h = jnp.einsum("oc,ncl->nol", w1, x) + b1[None, :, None]
    h = jnp.maximum(two_pass_norm(h), 0.0)
    y = jnp.einsum("oc,ncl->nol", w2, h) + b2[None, :, None]
    y = two_pass_norm(y)
    return y + x


if __name__ == "__main__":
    key = jax.random.PRNGKey(0)
    k_x, k_w1, k_b1, k_w2, k_b2 = jax.random.split(key, 5)

    N, C_in, L = 4, 8, 128  # small shapes; L lane-aligned for TPU

    x = jax.random.normal(k_x, (N, C_in, L), dtype=jnp.float32)

    # gaussian_weights_init: conv weights ~ N(0, 0.02); kernel_size=1 -> squeezed
    w1 = 0.02 * jax.random.normal(k_w1, (HIDDEN, C_in), dtype=jnp.float32)
    w2 = 0.02 * jax.random.normal(k_w2, (C_in, HIDDEN), dtype=jnp.float32)
    # conv biases (PyTorch default-style uniform bound) — only used by the
    # reference, since InstanceNorm cancels them.
    bound1 = 1.0 / float(C_in) ** 0.5
    bound2 = 1.0 / float(HIDDEN) ** 0.5
    b1 = jax.random.uniform(k_b1, (HIDDEN,), dtype=jnp.float32,
                            minval=-bound1, maxval=bound1)
    b2 = jax.random.uniform(k_b2, (C_in,), dtype=jnp.float32,
                            minval=-bound2, maxval=bound2)

    out = ins_res_block(x, w1, w2, block_n=2)
    out = jax.block_until_ready(out)

    ref = reference(x, w1, b1, w2, b2)
    assert out.shape == (N, C_in, L)
    assert jnp.allclose(out, ref, atol=2e-4, rtol=2e-4), \
        "mismatch vs pure-JAX (biased) reference"

    print("KERNEL_OK")
</pallas_src>

<mosaic_0001>
module attributes {stable_mosaic.version = 11 : i64} {
  func.func @ins_res_block_kernel(%arg0: i32, %arg1: memref<2x8x128xf32, #tpu.memory_space<vmem>>, %arg2: memref<8x512xf32, #tpu.memory_space<vmem>>, %arg3: memref<8x512xf32, #tpu.memory_space<vmem>>, %arg4: memref<2x8x128xf32, #tpu.memory_space<vmem>>) attributes {dimension_semantics = [#tpu.dimension_semantics<parallel>], iteration_bounds = array<i64: 2>, scalar_prefetch = 0 : i64, scratch_operands = 0 : i64, tpu.core_type = #tpu.core_type<tc>, window_params = [{transform_indices = @transform_0, window_bounds = array<i64: 2, 8, 128>}, {pipeline_mode = #tpu.pipeline_mode<synchronous>, transform_indices = @transform_1, window_bounds = array<i64: 8, 512>}, {pipeline_mode = #tpu.pipeline_mode<synchronous>, transform_indices = @transform_2, window_bounds = array<i64: 8, 512>}, {transform_indices = @transform_3, window_bounds = array<i64: 2, 8, 128>}]} {
    %c0 = arith.constant 0 : index
    %c0_0 = arith.constant 0 : index
    %0 = vector.load %arg2[%c0, %c0_0] : memref<8x512xf32, #tpu.memory_space<vmem>>, vector<8x512xf32>
    %c0_1 = arith.constant 0 : index
    %c0_2 = arith.constant 0 : index
    %1 = vector.load %arg3[%c0_1, %c0_2] : memref<8x512xf32, #tpu.memory_space<vmem>>, vector<8x512xf32>
    %c0_3 = arith.constant 0 : index
    %c0_4 = arith.constant 0 : index
    %c0_5 = arith.constant 0 : index
    %2 = vector.load %arg1[%c0_3, %c0_4, %c0_5] : memref<2x8x128xf32, #tpu.memory_space<vmem>>, vector<1x8x128xf32>
    %3 = vector.shape_cast %2 : vector<1x8x128xf32> to vector<8x128xf32>
    %cst = arith.constant dense<0.000000e+00> : vector<512x128xf32>
    %4 = tpu.matmul %0, %3, %cst {dimension_numbers = #tpu.dot_dimension_numbers<[0], [0], [1], [1], [0, 1, 1, 1], [], []>} : vector<8x512xf32>, vector<8x128xf32>, vector<512x128xf32> -> vector<512x128xf32>
    %cst_6 = arith.constant dense<0.000000e+00> : vector<512xf32>
    %5 = vector.multi_reduction <add>, %4, %cst_6 [1] : vector<512x128xf32> to vector<512xf32>
    %6 = vector.shape_cast %5 : vector<512xf32> to vector<512x1xf32>
    %7 = arith.mulf %4, %4 : vector<512x128xf32>
    %cst_7 = arith.constant dense<0.000000e+00> : vector<512xf32>
    %8 = vector.multi_reduction <add>, %7, %cst_7 [1] : vector<512x128xf32> to vector<512xf32>
    %9 = vector.shape_cast %8 : vector<512xf32> to vector<512x1xf32>
    %cst_8 = arith.constant 7.812500e-03 : f32
    %10 = vector.broadcast %cst_8 : f32 to vector<512x1xf32>
    %11 = arith.mulf %6, %10 : vector<512x1xf32>
    %cst_9 = arith.constant 7.812500e-03 : f32
    %12 = vector.broadcast %cst_9 : f32 to vector<512x1xf32>
    %13 = arith.mulf %9, %12 : vector<512x1xf32>
    %14 = arith.mulf %11, %11 : vector<512x1xf32>
    %15 = arith.subf %13, %14 : vector<512x1xf32>
    %16 = vector.broadcast %11 : vector<512x1xf32> to vector<512x128xf32>
    %17 = arith.subf %4, %16 : vector<512x128xf32>
    %cst_10 = arith.constant 9.99999974E-6 : f32
    %18 = vector.broadcast %cst_10 : f32 to vector<512x1xf32>
    %19 = arith.addf %15, %18 : vector<512x1xf32>
    %20 = math.rsqrt %19 : vector<512x1xf32>
    %21 = vector.broadcast %20 : vector<512x1xf32> to vector<512x128xf32>
    %22 = arith.mulf %17, %21 : vector<512x128xf32>
    %cst_11 = arith.constant 0.000000e+00 : f32
    %23 = vector.broadcast %cst_11 : f32 to vector<512x128xf32>
    %24 = arith.maximumf %22, %23 : vector<512x128xf32>
    %cst_12 = arith.constant dense<0.000000e+00> : vector<8x128xf32>
    %25 = tpu.matmul %1, %24, %cst_12 {dimension_numbers = #tpu.dot_dimension_numbers<[1], [0], [0], [1], [0, 0, 1, 1], [], []>} : vector<8x512xf32>, vector<512x128xf32>, vector<8x128xf32> -> vector<8x128xf32>
    %cst_13 = arith.constant dense<0.000000e+00> : vector<8xf32>
    %26 = vector.multi_reduction <add>, %25, %cst_13 [1] : vector<8x128xf32> to vector<8xf32>
    %27 = vector.shape_cast %26 : vector<8xf32> to vector<8x1xf32>
    %28 = arith.mulf %25, %25 : vector<8x128xf32>
    %cst_14 = arith.constant dense<0.000000e+00> : vector<8xf32>
    %29 = vector.multi_reduction <add>, %28, %cst_14 [1] : vector<8x128xf32> to vector<8xf32>
    %30 = vector.shape_cast %29 : vector<8xf32> to vector<8x1xf32>
    %cst_15 = arith.constant 7.812500e-03 : f32
    %31 = vector.broadcast %cst_15 : f32 to vector<8x1xf32>
    %32 = arith.mulf %27, %31 : vector<8x1xf32>
    %cst_16 = arith.constant 7.812500e-03 : f32
    %33 = vector.broadcast %cst_16 : f32 to vector<8x1xf32>
    %34 = arith.mulf %30, %33 : vector<8x1xf32>
    %35 = arith.mulf %32, %32 : vector<8x1xf32>
    %36 = arith.subf %34, %35 : vector<8x1xf32>
    %37 = vector.broadcast %32 : vector<8x1xf32> to vector<8x128xf32>
    %38 = arith.subf %25, %37 : vector<8x128xf32>
    %cst_17 = arith.constant 9.99999974E-6 : f32
    %39 = vector.broadcast %cst_17 : f32 to vector<8x1xf32>
    %40 = arith.addf %36, %39 : vector<8x1xf32>
    %41 = math.rsqrt %40 : vector<8x1xf32>
    %42 = vector.broadcast %41 : vector<8x1xf32> to vector<8x128xf32>
    %43 = arith.mulf %38, %42 : vector<8x128xf32>
    %44 = arith.addf %43, %3 : vector<8x128xf32>
    %c0_18 = arith.constant 0 : index
    %c0_19 = arith.constant 0 : index
    %c0_20 = arith.constant 0 : index
    %45 = vector.load %arg4[%c0_18, %c0_19, %c0_20] : memref<2x8x128xf32, #tpu.memory_space<vmem>>, vector<1x8x128xf32>
    %46 = vector.shape_cast %45 : vector<1x8x128xf32> to vector<8x128xf32>
    %47 = vector.shape_cast %44 : vector<8x128xf32> to vector<1x8x128xf32>
    tpu.vector_store %arg4[%c0_18, %c0_19, %c0_20], %47 {strides = array<i32>} : memref<2x8x128xf32, #tpu.memory_space<vmem>>, vector<1x8x128xf32>,
    %c1 = arith.constant 1 : index
    %c0_21 = arith.constant 0 : index
    %c0_22 = arith.constant 0 : index
    %48 = vector.load %arg1[%c1, %c0_21, %c0_22] : memref<2x8x128xf32, #tpu.memory_space<vmem>>, vector<1x8x128xf32>
    %49 = vector.shape_cast %48 : vector<1x8x128xf32> to vector<8x128xf32>
    %cst_23 = arith.constant dense<0.000000e+00> : vector<512x128xf32>
    %50 = tpu.matmul %0, %49, %cst_23 {dimension_numbers = #tpu.dot_dimension_numbers<[0], [0], [1], [1], [0, 1, 1, 1], [], []>} : vector<8x512xf32>, vector<8x128xf32>, vector<512x128xf32> -> vector<512x128xf32>
    %cst_24 = arith.constant dense<0.000000e+00> : vector<512xf32>
    %51 = vector.multi_reduction <add>, %50, %cst_24 [1] : vector<512x128xf32> to vector<512xf32>
    %52 = vector.shape_cast %51 : vector<512xf32> to vector<512x1xf32>
    %53 = arith.mulf %50, %50 : vector<512x128xf32>
    %cst_25 = arith.constant dense<0.000000e+00> : vector<512xf32>
    %54 = vector.multi_reduction <add>, %53, %cst_25 [1] : vector<512x128xf32> to vector<512xf32>
    %55 = vector.shape_cast %54 : vector<512xf32> to vector<512x1xf32>
    %cst_26 = arith.constant 7.812500e-03 : f32
    %56 = vector.broadcast %cst_26 : f32 to vector<512x1xf32>
    %57 = arith.mulf %52, %56 : vector<512x1xf32>
    %cst_27 = arith.constant 7.812500e-03 : f32
    %58 = vector.broadcast %cst_27 : f32 to vector<512x1xf32>
    %59 = arith.mulf %55, %58 : vector<512x1xf32>
    %60 = arith.mulf %57, %57 : vector<512x1xf32>
    %61 = arith.subf %59, %60 : vector<512x1xf32>
    %62 = vector.broadcast %57 : vector<512x1xf32> to vector<512x128xf32>
    %63 = arith.subf %50, %62 : vector<512x128xf32>
    %cst_28 = arith.constant 9.99999974E-6 : f32
    %64 = vector.broadcast %cst_28 : f32 to vector<512x1xf32>
    %65 = arith.addf %61, %64 : vector<512x1xf32>
    %66 = math.rsqrt %65 : vector<512x1xf32>
    %67 = vector.broadcast %66 : vector<512x1xf32> to vector<512x128xf32>
    %68 = arith.mulf %63, %67 : vector<512x128xf32>
    %cst_29 = arith.constant 0.000000e+00 : f32
    %69 = vector.broadcast %cst_29 : f32 to vector<512x128xf32>
    %70 = arith.maximumf %68, %69 : vector<512x128xf32>
    %cst_30 = arith.constant dense<0.000000e+00> : vector<8x128xf32>
    %71 = tpu.matmul %1, %70, %cst_30 {dimension_numbers = #tpu.dot_dimension_numbers<[1], [0], [0], [1], [0, 0, 1, 1], [], []>} : vector<8x512xf32>, vector<512x128xf32>, vector<8x128xf32> -> vector<8x128xf32>
    %cst_31 = arith.constant dense<0.000000e+00> : vector<8xf32>
    %72 = vector.multi_reduction <add>, %71, %cst_31 [1] : vector<8x128xf32> to vector<8xf32>
    %73 = vector.shape_cast %72 : vector<8xf32> to vector<8x1xf32>
    %74 = arith.mulf %71, %71 : vector<8x128xf32>
    %cst_32 = arith.constant dense<0.000000e+00> : vector<8xf32>
    %75 = vector.multi_reduction <add>, %74, %cst_32 [1] : vector<8x128xf32> to vector<8xf32>
    %76 = vector.shape_cast %75 : vector<8xf32> to vector<8x1xf32>
    %cst_33 = arith.constant 7.812500e-03 : f32
    %77 = vector.broadcast %cst_33 : f32 to vector<8x1xf32>
    %78 = arith.mulf %73, %77 : vector<8x1xf32>
    %cst_34 = arith.constant 7.812500e-03 : f32
    %79 = vector.broadcast %cst_34 : f32 to vector<8x1xf32>
    %80 = arith.mulf %76, %79 : vector<8x1xf32>
    %81 = arith.mulf %78, %78 : vector<8x1xf32>
    %82 = arith.subf %80, %81 : vector<8x1xf32>
    %83 = vector.broadcast %78 : vector<8x1xf32> to vector<8x128xf32>
    %84 = arith.subf %71, %83 : vector<8x128xf32>
    %cst_35 = arith.constant 9.99999974E-6 : f32
    %85 = vector.broadcast %cst_35 : f32 to vector<8x1xf32>
    %86 = arith.addf %82, %85 : vector<8x1xf32>
    %87 = math.rsqrt %86 : vector<8x1xf32>
    %88 = vector.broadcast %87 : vector<8x1xf32> to vector<8x128xf32>
    %89 = arith.mulf %84, %88 : vector<8x128xf32>
    %90 = arith.addf %89, %49 : vector<8x128xf32>
    %c1_36 = arith.constant 1 : index
    %c0_37 = arith.constant 0 : index
    %c0_38 = arith.constant 0 : index
    %91 = vector.load %arg4[%c1_36, %c0_37, %c0_38] : memref<2x8x128xf32, #tpu.memory_space<vmem>>, vector<1x8x128xf32>
    %92 = vector.shape_cast %91 : vector<1x8x128xf32> to vector<8x128xf32>
    %93 = vector.shape_cast %90 : vector<8x128xf32> to vector<1x8x128xf32>
    tpu.vector_store %arg4[%c1_36, %c0_37, %c0_38], %93 {strides = array<i32>} : memref<2x8x128xf32, #tpu.memory_space<vmem>>, vector<1x8x128xf32>,
    return
  }
  func.func @transform_0(%arg0: i32) -> (i32, i32, i32) {
    %c0_i32 = arith.constant 0 : i32
    %c0_i32_0 = arith.constant 0 : i32
    %c0_i32_1 = arith.constant 0 : i32
    return %arg0, %c0_i32, %c0_i32_0 : i32, i32, i32
  }
  func.func @transform_1(%arg0: i32) -> (i32, i32) {
    %c0_i32 = arith.constant 0 : i32
    %c0_i32_0 = arith.constant 0 : i32
    %c0_i32_1 = arith.constant 0 : i32
    return %c0_i32, %c0_i32_0 : i32, i32
  }
  func.func @transform_2(%arg0: i32) -> (i32, i32) {
    %c0_i32 = arith.constant 0 : i32
    %c0_i32_0 = arith.constant 0 : i32
    %c0_i32_1 = arith.constant 0 : i32
    return %c0_i32, %c0_i32_0 : i32, i32
  }
  func.func @transform_3(%arg0: i32) -> (i32, i32, i32) {
    %c0_i32 = arith.constant 0 : i32
    %c0_i32_0 = arith.constant 0 : i32
    %c0_i32_1 = arith.constant 0 : i32
    return %arg0, %c0_i32, %c0_i32_0 : i32, i32, i32
  }
}

</mosaic_0001>

<llo_original>
// kernel: tpu_custom_call.1
$region0: #{tpu_custom_call.1}
  #allocation0 [shape = 'u32[]', space=smem, size = 0x4, offset = 0x4, fixed_abs, tag = 'smem constant byte address 0x4 - core index']
  #allocation1 [shape = 'u32[144,128]{1,0:T(1,128)}', space=vmem, size = 0x12000, scoped, tag = 'internal scratch']
  %s0 = inlined_call_operand.hbm [shape: f32[4,8,128], index: 0, kind: input, shape index: {}]
  %s1 = inlined_call_operand.hbm [shape: f32[8,512], index: 1, kind: input, shape index: {}]
  %s2 = inlined_call_operand.hbm [shape: f32[8,512], index: 2, kind: input, shape index: {}]
  %s3 = inlined_call_operand.hbm [shape: f32[4,8,128], index: 3, kind: output, shape index: {}]
  %s4 = sld [smem:[#allocation0]]
  $region57: #{tpu_custom_call.1} parent=0
    _
  %s6 = ssub.s32 1, %s4
  %s7 = scalar_select 0, %s6, %s4
  $region1: #{tpu_custom_call.1} parent=0
    #allocation2 [shape = 'u8[16384]{0}', space=vmem, size = 0x4000, scoped, tag = 'input window, operand 0']
    #allocation3 [shape = 's32[2]{0}', space=sflag, size = 0x8, scoped, tag = 'scoped memory for tpu_custom_call.1']
    #allocation4 [shape = 's32[2]{0}', space=sflag, size = 0x8, scoped, tag = 'scoped memory for tpu_custom_call.1']
    #allocation5 [shape = 'u8[16384]{0}', space=vmem, size = 0x4000, scoped, tag = 'input window, operand 1, single buffered']
    #allocation6 [shape = 's32[1]{0}', space=sflag, size = 0x4, scoped, tag = 'scoped memory for tpu_custom_call.1']
    #allocation7 [shape = 'u8[16384]{0}', space=vmem, size = 0x4000, scoped, tag = 'input window, operand 2, single buffered']
    #allocation8 [shape = 'u8[16384]{0}', space=vmem, size = 0x4000, scoped, tag = 'output window, operand 0']
    %8 = vsyncpa [#allocation3], 0
    %s9 = scalar_lea.sflag [#allocation3], 1
    %10 = vsyncpa %s9, 0
    %11 = vsyncpa [#allocation6], 0
    %12 = vsyncpa [#allocation4], 0
    %s13 = scalar_lea.sflag [#allocation4], 1
    %14 = vsyncpa %s13, 0
    loop: start=0, step=1, limit=4
    $region2: #{tpu_custom_call.1} parent=1 // loop_pre_header
      _
    $region3: #{tpu_custom_call.1} parent=1 // loop_header
      %s16 = sphi 0, %s20
      %p17 = scmp.ge.s32.totalorder %s16, 4
      %s26 = sphi 0, %s28
      %s29 = sphi 0, %s26
      %s30 = sphi 0, %s29
      %s46 = sphi 0, %s30
      %s50 = sphi 0, %s50
      %s52 = sphi 0, %s50
      %s53 = sphi 0, %s52
      %s67 = sphi 0, %s53
      %s71 = sphi 0, %s71
      %s73 = sphi 0, %s71
      %s74 = sphi 0, %s73
      %s88 = sphi 0, %s74
      %s94 = sphi 0, %s96
      %s97 = sphi 0, %s94
      %s98 = sphi 0, %s97
      %s114 = sphi 0, %s98
    $region4: #{tpu_custom_call.1} parent=1 // loop_header_branch
      %19 = sbr.rel (%p17) target = $region8
    $region5: #{tpu_custom_call.1} parent=1 // loop_body
      %s21 = ssub.s32 %s16, 1
      %s22 = ssub.s32 %s16, 2
      %s23 = sadd.s32 %s16, 1
      %s24 = ssub.s32 %s16, %s23
      %p25 = scmp.eq.s32.totalorder %s24, 0
      %s27 = sadd.s32 %s26, 1
      %s28 = scalar_select %p25, %s26, %s27
      %p31 = pneg %p25
      %p32 = scmp.eq.s32.totalorder %s16, 1
      %p33 = por %p31, %p32
      %p34 = scmp.ne.s32.totalorder %s26, %s29
      %p35 = scmp.eq.s32.totalorder %s16, 0
      %p36 = por %p34, %p35
      %p37 = scmp.ne.s32.totalorder %s26, %s29
      %p38 = scmp.eq.s32.totalorder %s21, 1
      %p39 = por %p37, %p38
      %p40 = scmp.ne.s32.totalorder %s29, %s30
      %p41 = scmp.eq.s32.totalorder %s21, 0
      %p42 = por %p40, %p41
      %p43 = scmp.ne.s32.totalorder %s29, %s30
      %p44 = scmp.eq.s32.totalorder %s22, 1
      %p45 = por %p43, %p44
      %p47 = scmp.ne.s32.totalorder %s30, %s46
      %p48 = scmp.eq.s32.totalorder %s22, 0
      %p49 = por %p47, %p48
      %s51 = sadd.s32 %s50, 1
      %p54 = scmp.eq.s32.totalorder %s16, 1
      %p55 = scmp.ne.s32.totalorder %s50, %s52
      %p56 = scmp.eq.s32.totalorder %s16, 0
      %p57 = por %p55, %p56
      %p58 = scmp.ne.s32.totalorder %s50, %s52
      %p59 = scmp.eq.s32.totalorder %s21, 1
      %p60 = por %p58, %p59
      %p61 = scmp.ne.s32.totalorder %s52, %s53
      %p62 = scmp.eq.s32.totalorder %s21, 0
      %p63 = por %p61, %p62
      %p64 = scmp.ne.s32.totalorder %s52, %s53
      %p65 = scmp.eq.s32.totalorder %s22, 1
      %p66 = por %p64, %p65
      %p68 = scmp.ne.s32.totalorder %s53, %s67
      %p69 = scmp.eq.s32.totalorder %s22, 0
      %p70 = por %p68, %p69
      %s72 = sadd.s32 %s71, 1
      %p75 = scmp.eq.s32.totalorder %s16, 1
      %p76 = scmp.ne.s32.totalorder %s71, %s73
      %p77 = scmp.eq.s32.totalorder %s16, 0
      %p78 = por %p76, %p77
      %p79 = scmp.ne.s32.totalorder %s71, %s73
      %p80 = scmp.eq.s32.totalorder %s21, 1
      %p81 = por %p79, %p80
      %p82 = scmp.ne.s32.totalorder %s73, %s74
      %p83 = scmp.eq.s32.totalorder %s21, 0
      %p84 = por %p82, %p83
      %p85 = scmp.ne.s32.totalorder %s73, %s74
      %p86 = scmp.eq.s32.totalorder %s22, 1
      %p87 = por %p85, %p86
      %p89 = scmp.ne.s32.totalorder %s74, %s88
      %p90 = scmp.eq.s32.totalorder %s22, 0
      %p91 = por %p89, %p90
      %s92 = ssub.s32 %s16, %s23
      %p93 = scmp.eq.s32.totalorder %s92, 0
      %s95 = sadd.s32 %s94, 1
      %s96 = scalar_select %p93, %s94, %s95
      %p99 = pneg %p93
      %p100 = scmp.eq.s32.totalorder %s16, 1
      %p101 = por %p99, %p100
      %p102 = scmp.ne.s32.totalorder %s94, %s97
      %p103 = scmp.eq.s32.totalorder %s16, 0
      %p104 = por %p102, %p103
      %p105 = scmp.ne.s32.totalorder %s94, %s97
      %p106 = scmp.eq.s32.totalorder %s21, 1
      %p107 = por %p105, %p106
      %p108 = scmp.ne.s32.totalorder %s97, %s98
      %p109 = scmp.eq.s32.totalorder %s21, 0
      %p110 = por %p108, %p109
      %p111 = scmp.ne.s32.totalorder %s97, %s98
      %p112 = scmp.eq.s32.totalorder %s22, 1
      %p113 = por %p111, %p112
      %p115 = scmp.ne.s32.totalorder %s98, %s114
      %p116 = scmp.eq.s32.totalorder %s22, 0
      %p117 = por %p115, %p116
      %p118 = scmp.le.s32.totalorder 1, %s16
      %p119 = scmp.lt.s32.totalorder %s16, 3
      %p120 = pnand %p118, %p119
      %p121 = pneg %p120
      // Predicated region
      $region9: #{tpu_custom_call.1} parent=5 // pred_check
        _
      $region10: #{tpu_custom_call.1} parent=5 // pred_check_branch
        %123 = sbr.rel (%p120) target = $region12
      $region11: #{tpu_custom_call.1} parent=5 // pred_region
        %s124 = ssub.s32 %s16, 1
        // Predicated region
        $region13: #{tpu_custom_call.1} parent=11 // pred_check
          %p125 = pneg %p63
        $region14: #{tpu_custom_call.1} parent=11 // pred_check_branch
          %127 = sbr.rel (%p125) target = $region16
        $region15: #{tpu_custom_call.1} parent=11 // pred_region
          %s129 = ssub.s32 512, 512
          %130 = vsyncadd [#allocation6], %s129
          %s132 = sshll.u32 [#allocation5], 4
          %s133 = int_to_ptr.vmem [resolvable:$true] %s132
          %135 = dma.hbm_to_vmem [thread:$0]  %s1, 512, %s133, [#allocation6]
        $region16: #{tpu_custom_call.1} parent=11 // pred_fallthru
          _
        // Predicated region
        $region17: #{tpu_custom_call.1} parent=11 // pred_check
          %p136 = pneg %p84
        $region18: #{tpu_custom_call.1} parent=11 // pred_check_branch
          %138 = sbr.rel (%p136) target = $region20
        $region19: #{tpu_custom_call.1} parent=11 // pred_region
          %s140 = ssub.s32 512, 512
          %141 = vsyncadd [#allocation6], %s140
          %s143 = sshll.u32 [#allocation7], 4
          %s144 = int_to_ptr.vmem [resolvable:$true] %s143
          %146 = dma.hbm_to_vmem [thread:$0]  %s2, 512, %s144, [#allocation6]
        $region20: #{tpu_custom_call.1} parent=11 // pred_fallthru
          _
      $region12: #{tpu_custom_call.1} parent=5 // pred_fallthru
        _
      %p147 = scmp.lt.s32.totalorder %s16, 2
      // Predicated region
      $region21: #{tpu_custom_call.1} parent=5 // pred_check
        %p148 = pneg %p147
      $region22: #{tpu_custom_call.1} parent=5 // pred_check_branch
        %150 = sbr.rel (%p148) target = $region24
      $region23: #{tpu_custom_call.1} parent=5 // pred_region
        // Predicated region
        $region25: #{tpu_custom_call.1} parent=23 // pred_check
          %p151 = pneg %p36
        $region26: #{tpu_custom_call.1} parent=23 // pred_check_branch
          %153 = sbr.rel (%p151) target = $region28
        $region27: #{tpu_custom_call.1} parent=23 // pred_region
          %s154 = sand.u32 %s26, 1
          %s155 = scalar_lea.sflag [#allocation3], %s154
          %s156 = sand.u32 %s26, 1
          %s157 = smul.addr %s156, 16
          %s158 = scalar_lea.vmem [#allocation2], %s157
          %s159 = smul.u32 2, %s16
          %s161 = ssub.s32 256, 256
          %162 = vsyncadd %s155, %s161
          %s163 = smul.addr %s159, 128
          %s164 = scalar_lea.hbm %s0, %s163
          %s165 = sshll.u32 %s158, 4
          %s166 = int_to_ptr.vmem [resolvable:$true] %s165
          %171 = dma.hbm_to_vmem [thread:$0]  %s164, 256, %s166, %s155, 128, 128, 8
        $region28: #{tpu_custom_call.1} parent=23 // pred_fallthru
          _
      $region24: #{tpu_custom_call.1} parent=5 // pred_fallthru
        _
      %p172 = scmp.le.s32.totalorder 1, %s16
      %p173 = scmp.lt.s32.totalorder %s16, 3
      %p174 = pnand %p172, %p173
      %p175 = pneg %p174
      // Predicated region
      $region29: #{tpu_custom_call.1} parent=5 // pred_check
        _
      $region30: #{tpu_custom_call.1} parent=5 // pred_check_branch
        %177 = sbr.rel (%p174) target = $region32
      $region31: #{tpu_custom_call.1} parent=5 // pred_region
        %s178 = ssub.s32 %s16, 1
        %s179 = sand.u32 %s29, 1
        %s180 = scalar_lea.sflag [#allocation3], %s179
        %s181 = sand.u32 %s29, 1
        %s182 = smul.addr %s181, 16
        %s183 = scalar_lea.vmem [#allocation2], %s182
        // Predicated region
        $region33: #{tpu_custom_call.1} parent=31 // pred_check
          %p184 = pneg %p42
        $region34: #{tpu_custom_call.1} parent=31 // pred_check_branch
          %186 = sbr.rel (%p184) target = $region36
        $region35: #{tpu_custom_call.1} parent=31 // pred_region
          %187 = dma.done %s180, 256
        $region36: #{tpu_custom_call.1} parent=31 // pred_fallthru
          _
        // Predicated region
        $region37: #{tpu_custom_call.1} parent=31 // pred_check
          %p188 = pneg %p63
        $region38: #{tpu_custom_call.1} parent=31 // pred_check_branch
          %190 = sbr.rel (%p188) target = $region40
        $region39: #{tpu_custom_call.1} parent=31 // pred_region
          %191 = dma.done [#allocation6], 512
        $region40: #{tpu_custom_call.1} parent=31 // pred_fallthru
          _
        // Predicated region
        $region41: #{tpu_custom_call.1} parent=31 // pred_check
          %p192 = pneg %p84
        $region42: #{tpu_custom_call.1} parent=31 // pred_check_branch
          %194 = sbr.rel (%p192) target = $region44
        $region43: #{tpu_custom_call.1} parent=31 // pred_region
          %195 = dma.done [#allocation6], 512
        $region44: #{tpu_custom_call.1} parent=31 // pred_fallthru
          _
        %s196 = sand.u32 %s29, 1
        %s197 = scalar_lea.sflag [#allocation3], %s196
        %s198 = sand.u32 %s29, 1
        %s199 = smul.addr %s198, 16
        %s200 = scalar_lea.vmem [#allocation2], %s199
        %p201 = pneg %p42
        %p202 = pneg %p39
        %p203 = pneg %p63
        %p204 = pneg %p60
        %p205 = pneg %p84
        %p206 = pneg %p81
        %p207 = pneg %p110
        %p208 = pneg %p107
        %s209 = sand.u32 %s97, 1
        %s210 = scalar_lea.sflag [#allocation4], %s209
        %s211 = sand.u32 %s97, 1
        %s212 = smul.addr %s211, 16
        %s213 = scalar_lea.vmem [#allocation8], %s212
        %s214 = smul.u32 2, %s21
        %s215 = smul.u32 2, %s21
        %v216 = vld [vmem:[#allocation5] sm:$0xff]
        %v217 = vld [vmem:[#allocation5 + $0x8] sm:$0xff]
        %v218 = vld [vmem:[#allocation5 + $0x10] sm:$0xff]
        %v219 = vld [vmem:[#allocation5 + $0x18] sm:$0xff]
        %v220 = vld [vmem:[#allocation7] sm:$0xff]
        %v221 = vld [vmem:[#allocation7 + $0x8] sm:$0xff]
        %v222 = vld [vmem:[#allocation7 + $0x10] sm:$0xff]
        %v223 = vld [vmem:[#allocation7 + $0x18] sm:$0xff]
        %v224 = vld [vmem:[%s183] sm:$0xff]
        %225 = vxpose.xlu0.b32.start [1/16] %v216, 128
        %226 = vxpose.xlu0.b32.cont [2/16] 0.0, 128
        %227 = vxpose.xlu0.b32.cont [3/16] 0.0, 128
        %228 = vxpose.xlu0.b32.cont [4/16] 0.0, 128
        %229 = vxpose.xlu0.b32.cont [5/16] 0.0, 128
        %230 = vxpose.xlu0.b32.cont [6/16] 0.0, 128
        %231 = vxpose.xlu0.b32.cont [7/16] 0.0, 128
        %232 = vxpose.xlu0.b32.cont [8/16] 0.0, 128
        %233 = vxpose.xlu0.b32.cont [9/16] 0.0, 128
        %234 = vxpose.xlu0.b32.cont [10/16] 0.0, 128
        %235 = vxpose.xlu0.b32.cont [11/16] 0.0, 128
        %236 = vxpose.xlu0.b32.cont [12/16] 0.0, 128
        %237 = vxpose.xlu0.b32.cont [13/16] 0.0, 128
        %238 = vxpose.xlu0.b32.cont [14/16] 0.0, 128
        %239 = vxpose.xlu0.b32.cont [15/16] 0.0, 128
        %240 = vxpose.xlu0.b32.end [16/16] 0.0, 128
        %v241 = vpop.trf.xlu0
        %v242 = vpop.trf.xlu0
        %v243 = vpop.trf.xlu0
        %v244 = vpop.trf.xlu0
        %v245 = vpop.trf.xlu0
        %v246 = vpop.trf.xlu0
        %v247 = vpop.trf.xlu0
        %v248 = vpop.trf.xlu0
        %v249 = vpop.trf.xlu0
        %v250 = vpop.trf.xlu0
        %v251 = vpop.trf.xlu0
        %v252 = vpop.trf.xlu0
        %v253 = vpop.trf.xlu0
        %v254 = vpop.trf.xlu0
        %v255 = vpop.trf.xlu0
        %v256 = vpop.trf.xlu0
        %257 = vxpose.xlu0.b32.start [1/16] %v217, 128
        %258 = vxpose.xlu0.b32.cont [2/16] 0.0, 128
        %259 = vxpose.xlu0.b32.cont [3/16] 0.0, 128
        %260 = vxpose.xlu0.b32.cont [4/16] 0.0, 128
        %261 = vxpose.xlu0.b32.cont [5/16] 0.0, 128
        %262 = vxpose.xlu0.b32.cont [6/16] 0.0, 128
        %263 = vxpose.xlu0.b32.cont [7/16] 0.0, 128
        %264 = vxpose.xlu0.b32.cont [8/16] 0.0, 128
        %265 = vxpose.xlu0.b32.cont [9/16] 0.0, 128
        %266 = vxpose.xlu0.b32.cont [10/16] 0.0, 128
        %267 = vxpose.xlu0.b32.cont [11/16] 0.0, 128
        %268 = vxpose.xlu0.b32.cont [12/16] 0.0, 128
        %269 = vxpose.xlu0.b32.cont [13/16] 0.0, 128
        %270 = vxpose.xlu0.b32.cont [14/16] 0.0, 128
        %271 = vxpose.xlu0.b32.cont [15/16] 0.0, 128
        %272 = vxpose.xlu0.b32.end [16/16] 0.0, 128
        %v273 = vpop.trf.xlu0
        %v274 = vpop.trf.xlu0
        %v275 = vpop.trf.xlu0
        %v276 = vpop.trf.xlu0
        %v277 = vpop.trf.xlu0
        %v278 = vpop.trf.xlu0
        %v279 = vpop.trf.xlu0
        %v280 = vpop.trf.xlu0
        %v281 = vpop.trf.xlu0
        %v282 = vpop.trf.xlu0
        %v283 = vpop.trf.xlu0
        %v284 = vpop.trf.xlu0
        %v285 = vpop.trf.xlu0
        %v286 = vpop.trf.xlu0
        %v287 = vpop.trf.xlu0
        %v288 = vpop.trf.xlu0
        %289 = vxpose.xlu0.b32.start [1/16] %v218, 128
        %290 = vxpose.xlu0.b32.cont [2/16] 0.0, 128
        %291 = vxpose.xlu0.b32.cont [3/16] 0.0, 128
        %292 = vxpose.xlu0.b32.cont [4/16] 0.0, 128
        %293 = vxpose.xlu0.b32.cont [5/16] 0.0, 128
        %294 = vxpose.xlu0.b32.cont [6/16] 0.0, 128
        %295 = vxpose.xlu0.b32.cont [7/16] 0.0, 128
        %296 = vxpose.xlu0.b32.cont [8/16] 0.0, 128
        %297 = vxpose.xlu0.b32.cont [9/16] 0.0, 128
        %298 = vxpose.xlu0.b32.cont [10/16] 0.0, 128
        %299 = vxpose.xlu0.b32.cont [11/16] 0.0, 128
        %300 = vxpose.xlu0.b32.cont [12/16] 0.0, 128
        %301 = vxpose.xlu0.b32.cont [13/16] 0.0, 128
        %302 = vxpose.xlu0.b32.cont [14/16] 0.0, 128
        %303 = vxpose.xlu0.b32.cont [15/16] 0.0, 128
        %304 = vxpose.xlu0.b32.end [16/16] 0.0, 128
        %v305 = vpop.trf.xlu0
        %v306 = vpop.trf.xlu0
        %v307 = vpop.trf.xlu0
        %v308 = vpop.trf.xlu0
        %v309 = vpop.trf.xlu0
        %v310 = vpop.trf.xlu0
        %v311 = vpop.trf.xlu0
        %v312 = vpop.trf.xlu0
        %v313 = vpop.trf.xlu0
        %v314 = vpop.trf.xlu0
        %v315 = vpop.trf.xlu0
        %v316 = vpop.trf.xlu0
        %v317 = vpop.trf.xlu0
        %v318 = vpop.trf.xlu0
        %v319 = vpop.trf.xlu0
        %v320 = vpop.trf.xlu0
        %321 = vxpose.xlu0.b32.start [1/16] %v219, 128
        %322 = vxpose.xlu0.b32.cont [2/16] 0.0, 128
        %323 = vxpose.xlu0.b32.cont [3/16] 0.0, 128
        %324 = vxpose.xlu0.b32.cont [4/16] 0.0, 128
        %325 = vxpose.xlu0.b32.cont [5/16] 0.0, 128
        %326 = vxpose.xlu0.b32.cont [6/16] 0.0, 128
        %327 = vxpose.xlu0.b32.cont [7/16] 0.0, 128
        %328 = vxpose.xlu0.b32.cont [8/16] 0.0, 128
        %329 = vxpose.xlu0.b32.cont [9/16] 0.0, 128
        %330 = vxpose.xlu0.b32.cont [10/16] 0.0, 128
        %331 = vxpose.xlu0.b32.cont [11/16] 0.0, 128
        %332 = vxpose.xlu0.b32.cont [12/16] 0.0, 128
        %333 = vxpose.xlu0.b32.cont [13/16] 0.0, 128
        %334 = vxpose.xlu0.b32.cont [14/16] 0.0, 128
        %335 = vxpose.xlu0.b32.cont [15/16] 0.0, 128
        %336 = vxpose.xlu0.b32.end [16/16] 0.0, 128
        %v337 = vpop.trf.xlu0
        %v338 = vpop.trf.xlu0
        %v339 = vpop.trf.xlu0
        %v340 = vpop.trf.xlu0
        %v341 = vpop.trf.xlu0
        %v342 = vpop.trf.xlu0
        %v343 = vpop.trf.xlu0
        %v344 = vpop.trf.xlu0
        %v345 = vpop.trf.xlu0
        %v346 = vpop.trf.xlu0
        %v347 = vpop.trf.xlu0
        %v348 = vpop.trf.xlu0
        %v349 = vpop.trf.xlu0
        %v350 = vpop.trf.xlu0
        %v351 = vpop.trf.xlu0
        %v352 = vpop.trf.xlu0
        %vm353 = vcmask 64512
        %v355 = vsel %vm353, %v241, 0
        %v358 = vsel %vm353, %v242, 0
        %v361 = vsel %vm353, %v243, 0
        %v364 = vsel %vm353, %v244, 0
        %v367 = vsel %vm353, %v245, 0
        %v370 = vsel %vm353, %v246, 0
        %v373 = vsel %vm353, %v247, 0
        %v376 = vsel %vm353, %v248, 0
        %v379 = vsel %vm353, %v249, 0
        %v382 = vsel %vm353, %v250, 0
        %v385 = vsel %vm353, %v251, 0
        %v388 = vsel %vm353, %v252, 0
        %v391 = vsel %vm353, %v253, 0
        %v394 = vsel %vm353, %v254, 0
        %v397 = vsel %vm353, %v255, 0
        %v400 = vsel %vm353, %v256, 0
        %v403 = vsel %vm353, %v273, 0
        %v406 = vsel %vm353, %v274, 0
        %v409 = vsel %vm353, %v275, 0
        %v412 = vsel %vm353, %v276, 0
        %v415 = vsel %vm353, %v277, 0
        %v418 = vsel %vm353, %v278, 0
        %v421 = vsel %vm353, %v279, 0
        %v424 = vsel %vm353, %v280, 0
        %v427 = vsel %vm353, %v281, 0
        %v430 = vsel %vm353, %v282, 0
        %v433 = vsel %vm353, %v283, 0
        %v436 = vsel %vm353, %v284, 0
        %v439 = vsel %vm353, %v285, 0
        %v442 = vsel %vm353, %v286, 0
        %v445 = vsel %vm353, %v287, 0
        %v448 = vsel %vm353, %v288, 0
        %v451 = vsel %vm353, %v305, 0
        %v454 = vsel %vm353, %v306, 0
        %v457 = vsel %vm353, %v307, 0
        %v460 = vsel %vm353, %v308, 0
        %v463 = vsel %vm353, %v309, 0
        %v466 = vsel %vm353, %v310, 0
        %v469 = vsel %vm353, %v311, 0
        %v472 = vsel %vm353, %v312, 0
        %v475 = vsel %vm353, %v313, 0
        %v478 = vsel %vm353, %v314, 0
        %v481 = vsel %vm353, %v315, 0
        %v484 = vsel %vm353, %v316, 0
        %v487 = vsel %vm353, %v317, 0
        %v490 = vsel %vm353, %v318, 0
        %v493 = vsel %vm353, %v319, 0
        %v496 = vsel %vm353, %v320, 0
        %v499 = vsel %vm353, %v337, 0
        %v502 = vsel %vm353, %v338, 0
        %v505 = vsel %vm353, %v339, 0
        %v508 = vsel %vm353, %v340, 0
        %v511 = vsel %vm353, %v341, 0
        %v514 = vsel %vm353, %v342, 0
        %v517 = vsel %vm353, %v343, 0
        %v520 = vsel %vm353, %v344, 0
        %v523 = vsel %vm353, %v345, 0
        %v526 = vsel %vm353, %v346, 0
        %v529 = vsel %vm353, %v347, 0
        %v532 = vsel %vm353, %v348, 0
        %v535 = vsel %vm353, %v349, 0
        %v538 = vsel %vm353, %v350, 0
        %v541 = vsel %vm353, %v351, 0
        %v544 = vsel %vm353, %v352, 0
        %546 = vmatprep.subr.mxu0 0.0
        %547 = vmatpush1.msra.mxu0 %v224
        %548 = vmatprep.subr.mxu0 0.0
        %549 = vmatpush1.msra.mxu0 0.0
        %550 = vmatprep.subr.mxu0 0.0
        %551 = vmatpush1.msra.mxu0 0.0
        %552 = vmatprep.subr.mxu0 0.0
        %553 = vmatpush1.msra.mxu0 0.0
        %554 = vmatprep.subr.mxu0 0.0
        %555 = vmatpush1.msra.mxu0 0.0
        %556 = vmatprep.subr.mxu0 0.0
        %557 = vmatpush1.msra.mxu0 0.0
        %558 = vmatprep.subr.mxu0 0.0
        %559 = vmatpush1.msra.mxu0 0.0
        %560 = vmatprep.subr.mxu0 0.0
        %561 = vmatpush1.msra.mxu0 0.0
        %562 = vmatprep.subr.mxu0 0.0
        %563 = vmatpush1.msra.mxu0 0.0
        %564 = vmatprep.subr.mxu0 0.0
        %565 = vmatpush1.msra.mxu0 0.0
        %566 = vmatprep.subr.mxu0 0.0
        %567 = vmatpush1.msra.mxu0 0.0
        %568 = vmatprep.subr.mxu0 0.0
        %569 = vmatpush1.msra.mxu0 0.0
        %570 = vmatprep.subr.mxu0 0.0
        %571 = vmatpush1.msra.mxu0 0.0
        %572 = vmatprep.subr.mxu0 0.0
        %573 = vmatpush1.msra.mxu0 0.0
        %574 = vmatprep.subr.mxu0 0.0
        %575 = vmatpush1.msra.mxu0 0.0
        %576 = vmatprep.subr.mxu0 0.0
        %577 = vmatpush1.msra.mxu0 0.0
        %578 = vmatprep.subr.mxu0 0.0
        %579 = vmatpush1.msra.mxu0 0.0
        %580 = vmatprep.subr.mxu0 0.0
        %581 = vmatpush1.msra.mxu0 0.0
        %582 = vmatprep.subr.mxu0 0.0
        %583 = vmatpush1.msra.mxu0 0.0
        %584 = vmatprep.subr.mxu0 0.0
        %585 = vmatpush1.msra.mxu0 0.0
        %586 = vmatprep.subr.mxu0 0.0
        %587 = vmatpush1.msra.mxu0 0.0
        %588 = vmatprep.subr.mxu0 0.0
        %589 = vmatpush1.msra.mxu0 0.0
        %590 = vmatprep.subr.mxu0 0.0
        %591 = vmatpush1.msra.mxu0 0.0
        %592 = vmatprep.subr.mxu0 0.0
        %593 = vmatpush1.msra.mxu0 0.0
        %594 = vmatprep.subr.mxu0 0.0
        %595 = vmatpush1.msra.mxu0 0.0
        %596 = vmatprep.subr.mxu0 0.0
        %597 = vmatpush1.msra.mxu0 0.0
        %598 = vmatprep.subr.mxu0 0.0
        %599 = vmatpush1.msra.mxu0 0.0
        %600 = vmatprep.subr.mxu0 0.0
        %601 = vmatpush1.msra.mxu0 0.0
        %602 = vmatprep.subr.mxu0 0.0
        %603 = vmatpush1.msra.mxu0 0.0
        %604 = vmatprep.subr.mxu0 0.0
        %605 = vmatpush1.msra.mxu0 0.0
        %606 = vmatprep.subr.mxu0 0.0
        %607 = vmatpush1.msra.mxu0 0.0
        %608 = vmatprep.subr.mxu0 0.0
        %609 = vmatpush1.msra.mxu0 0.0
        %610 = vmatprep.mubr.f32.mxu0 0.0
        %611 = vmatmul.mubr.f32.gmra.mrb[0].mxu0 %v355
        %v612 = vpop.f32.mrb[0].mxu0
        %v613 = vadd.f32 0.0, %v612
        %v614 = vpop.f32.mrb[0].mxu0
        %615 = vmatprep.mubr.f32.mxu0 0.0
        %616 = vmatmul.mubr.f32.gmra.mrb[0].mxu0 %v358
        %v617 = vpop.f32.mrb[0].mxu0
        %v618 = vadd.f32 0.0, %v617
        %v619 = vpop.f32.mrb[0].mxu0
        %620 = vmatprep.mubr.f32.mxu0 0.0
        %621 = vmatmul.mubr.f32.gmra.mrb[0].mxu0 %v361
        %v622 = vpop.f32.mrb[0].mxu0
        %v623 = vadd.f32 0.0, %v622
        %v624 = vpop.f32.mrb[0].mxu0
        %625 = vmatprep.mubr.f32.mxu0 0.0
        %626 = vmatmul.mubr.f32.gmra.mrb[0].mxu0 %v364
        %v627 = vpop.f32.mrb[0].mxu0
        %v628 = vadd.f32 0.0, %v627
        %v629 = vpop.f32.mrb[0].mxu0
        %630 = vmatprep.mubr.f32.mxu0 0.0
        %631 = vmatmul.mubr.f32.gmra.mrb[0].mxu0 %v367
        %v632 = vpop.f32.mrb[0].mxu0
        %v633 = vadd.f32 0.0, %v632
        %v634 = vpop.f32.mrb[0].mxu0
        %635 = vmatprep.mubr.f32.mxu0 0.0
        %636 = vmatmul.mubr.f32.gmra.mrb[0].mxu0 %v370
        %v637 = vpop.f32.mrb[0].mxu0
        %v638 = vadd.f32 0.0, %v637
        %v639 = vpop.f32.mrb[0].mxu0
        %640 = vmatprep.mubr.f32.mxu0 0.0
        %641 = vmatmul.mubr.f32.gmra.mrb[0].mxu0 %v373
        %v642 = vpop.f32.mrb[0].mxu0
        %v643 = vadd.f32 0.0, %v642
        %v644 = vpop.f32.mrb[0].mxu0
        %645 = vmatprep.mubr.f32.mxu0 0.0
        %646 = vmatmul.mubr.f32.gmra.mrb[0].mxu0 %v376
        %v647 = vpop.f32.mrb[0].mxu0
        %v648 = vadd.f32 0.0, %v647
        %v649 = vpop.f32.mrb[0].mxu0
        %650 = vmatprep.mubr.f32.mxu0 0.0
        %651 = vmatmul.mubr.f32.gmra.mrb[0].mxu0 %v379
        %v652 = vpop.f32.mrb[0].mxu0
        %v653 = vadd.f32 0.0, %v652
        %v654 = vpop.f32.mrb[0].mxu0
        %655 = vmatprep.mubr.f32.mxu0 0.0
        %656 = vmatmul.mubr.f32.gmra.mrb[0].mxu0 %v382
        %v657 = vpop.f32.mrb[0].mxu0
        %v658 = vadd.f32 0.0, %v657
        %v659 = vpop.f32.mrb[0].mxu0
        %660 = vmatprep.mubr.f32.mxu0 0.0
        %661 = vmatmul.mubr.f32.gmra.mrb[0].mxu0 %v385
        %v662 = vpop.f32.mrb[0].mxu0
        %v663 = vadd.f32 0.0, %v662
        %v664 = vpop.f32.mrb[0].mxu0
        %665 = vmatprep.mubr.f32.mxu0 0.0
        %666 = vmatmul.mubr.f32.gmra.mrb[0].mxu0 %v388
        %v667 = vpop.f32.mrb[0].mxu0
        %v668 = vadd.f32 0.0, %v667
        %v669 = vpop.f32.mrb[0].mxu0
        %670 = vmatprep.mubr.f32.mxu0 0.0
        %671 = vmatmul.mubr.f32.gmra.mrb[0].mxu0 %v391
        %v672 = vpop.f32.mrb[0].mxu0
        %v673 = vadd.f32 0.0, %v672
        %v674 = vpop.f32.mrb[0].mxu0
        %675 = vmatprep.mubr.f32.mxu0 0.0
        %676 = vmatmul.mubr.f32.gmra.mrb[0].mxu0 %v394
        %v677 = vpop.f32.mrb[0].mxu0
        %v678 = vadd.f32 0.0, %v677
        %v679 = vpop.f32.mrb[0].mxu0
        %680 = vmatprep.mubr.f32.mxu0 0.0
        %681 = vmatmul.mubr.f32.gmra.mrb[0].mxu0 %v397
        %v682 = vpop.f32.mrb[0].mxu0
        %v683 = vadd.f32 0.0, %v682
        %v684 = vpop.f32.mrb[0].mxu0
        %685 = vmatprep.mubr.f32.mxu0 0.0
        %686 = vmatmul.mubr.f32.gmra.mrb[0].mxu0 %v400
        %v687 = vpop.f32.mrb[0].mxu0
        %v688 = vadd.f32 0.0, %v687
        %v689 = vpop.f32.mrb[0].mxu0
        %690 = vmatprep.mubr.f32.mxu0 0.0
        %691 = vmatmul.mubr.f32.gmra.mrb[0].mxu0 %v403
        %v692 = vpop.f32.mrb[0].mxu0
        %v693 = vadd.f32 0.0, %v692
        %v694 = vpop.f32.mrb[0].mxu0
        %695 = vmatprep.mubr.f32.mxu0 0.0
        %696 = vmatmul.mubr.f32.gmra.mrb[0].mxu0 %v406
        %v697 = vpop.f32.mrb[0].mxu0
        %v698 = vadd.f32 0.0, %v697
        %v699 = vpop.f32.mrb[0].mxu0
        %700 = vmatprep.mubr.f32.mxu0 0.0
        %701 = vmatmul.mubr.f32.gmra.mrb[0].mxu0 %v409
        %v702 = vpop.f32.mrb[0].mxu0
        %v703 = vadd.f32 0.0, %v702
        %v704 = vpop.f32.mrb[0].mxu0
        %705 = vmatprep.mubr.f32.mxu0 0.0
        %706 = vmatmul.mubr.f32.gmra.mrb[0].mxu0 %v412
        %v707 = vpop.f32.mrb[0].mxu0
        %v708 = vadd.f32 0.0, %v707
        %v709 = vpop.f32.mrb[0].mxu0
        %710 = vmatprep.mubr.f32.mxu0 0.0
        %711 = vmatmul.mubr.f32.gmra.mrb[0].mxu0 %v415
        %v712 = vpop.f32.mrb[0].mxu0
        %v713 = vadd.f32 0.0, %v712
        %v714 = vpop.f32.mrb[0].mxu0
        %715 = vmatprep.mubr.f32.mxu0 0.0
        %716 = vmatmul.mubr.f32.gmra.mrb[0].mxu0 %v418
        %v717 = vpop.f32.mrb[0].mxu0
        %v718 = vadd.f32 0.0, %v717
        %v719 = vpop.f32.mrb[0].mxu0
        %720 = vmatprep.mubr.f32.mxu0 0.0
        %721 = vmatmul.mubr.f32.gmra.mrb[0].mxu0 %v421
        %v722 = vpop.f32.mrb[0].mxu0
        %v723 = vadd.f32 0.0, %v722
        %v724 = vpop.f32.mrb[0].mxu0
        %725 = vmatprep.mubr.f32.mxu0 0.0
        %726 = vmatmul.mubr.f32.gmra.mrb[0].mxu0 %v424
        %v727 = vpop.f32.mrb[0].mxu0
        %v728 = vadd.f32 0.0, %v727
        %v729 = vpop.f32.mrb[0].mxu0
        %730 = vmatprep.mubr.f32.mxu0 0.0
        %731 = vmatmul.mubr.f32.gmra.mrb[0].mxu0 %v427
        %v732 = vpop.f32.mrb[0].mxu0
        %v733 = vadd.f32 0.0, %v732
        %v734 = vpop.f32.mrb[0].mxu0
        %735 = vmatprep.mubr.f32.mxu0 0.0
        %736 = vmatmul.mubr.f32.gmra.mrb[0].mxu0 %v430
        %v737 = vpop.f32.mrb[0].mxu0
        %v738 = vadd.f32 0.0, %v737
        %v739 = vpop.f32.mrb[0].mxu0
        %740 = vmatprep.mubr.f32.mxu0 0.0
        %741 = vmatmul.mubr.f32.gmra.mrb[0].mxu0 %v433
        %v742 = vpop.f32.mrb[0].mxu0
        %v743 = vadd.f32 0.0, %v742
        %v744 = vpop.f32.mrb[0].mxu0
        %745 = vmatprep.mubr.f32.mxu0 0.0
        %746 = vmatmul.mubr.f32.gmra.mrb[0].mxu0 %v436
        %v747 = vpop.f32.mrb[0].mxu0
        %v748 = vadd.f32 0.0, %v747
        %v749 = vpop.f32.mrb[0].mxu0
        %750 = vmatprep.mubr.f32.mxu0 0.0
        %751 = vmatmul.mubr.f32.gmra.mrb[0].mxu0 %v439
        %v752 = vpop.f32.mrb[0].mxu0
        %v753 = vadd.f32 0.0, %v752
        %v754 = vpop.f32.mrb[0].mxu0
        %755 = vmatprep.mubr.f32.mxu0 0.0
        %756 = vmatmul.mubr.f32.gmra.mrb[0].mxu0 %v442
        %v757 = vpop.f32.mrb[0].mxu0
        %v758 = vadd.f32 0.0, %v757
        %v759 = vpop.f32.mrb[0].mxu0
        %760 = vmatprep.mubr.f32.mxu0 0.0
        %761 = vmatmul.mubr.f32.gmra.mrb[0].mxu0 %v445
        %v762 = vpop.f32.mrb[0].mxu0
        %v763 = vadd.f32 0.0, %v762
        %v764 = vpop.f32.mrb[0].mxu0
        %765 = vmatprep.mubr.f32.mxu0 0.0
        %766 = vmatmul.mubr.f32.gmra.mrb[0].mxu0 %v448
        %v767 = vpop.f32.mrb[0].mxu0
        %v768 = vadd.f32 0.0, %v767
        %v769 = vpop.f32.mrb[0].mxu0
        %770 = vmatprep.mubr.f32.mxu0 0.0
        %771 = vmatmul.mubr.f32.gmra.mrb[0].mxu0 %v451
        %v772 = vpop.f32.mrb[0].mxu0
        %v773 = vadd.f32 0.0, %v772
        %v774 = vpop.f32.mrb[0].mxu0
        %775 = vmatprep.mubr.f32.mxu0 0.0
        %776 = vmatmul.mubr.f32.gmra.mrb[0].mxu0 %v454
        %v777 = vpop.f32.mrb[0].mxu0
        %v778 = vadd.f32 0.0, %v777
        %v779 = vpop.f32.mrb[0].mxu0
        %780 = vmatprep.mubr.f32.mxu0 0.0
        %781 = vmatmul.mubr.f32.gmra.mrb[0].mxu0 %v457
        %v782 = vpop.f32.mrb[0].mxu0
        %v783 = vadd.f32 0.0, %v782
        %v784 = vpop.f32.mrb[0].mxu0
        %785 = vmatprep.mubr.f32.mxu0 0.0
        %786 = vmatmul.mubr.f32.gmra.mrb[0].mxu0 %v460
        %v787 = vpop.f32.mrb[0].mxu0
        %v788 = vadd.f32 0.0, %v787
        %v789 = vpop.f32.mrb[0].mxu0
        %790 = vmatprep.mubr.f32.mxu0 0.0
        %791 = vmatmul.mubr.f32.gmra.mrb[0].mxu0 %v463
        %v792 = vpop.f32.mrb[0].mxu0
        %v793 = vadd.f32 0.0, %v792
        %v794 = vpop.f32.mrb[0].mxu0
        %795 = vmatprep.mubr.f32.mxu0 0.0
        %796 = vmatmul.mubr.f32.gmra.mrb[0].mxu0 %v466
        %v797 = vpop.f32.mrb[0].mxu0
        %v798 = vadd.f32 0.0, %v797
        %v799 = vpop.f32.mrb[0].mxu0
        %800 = vmatprep.mubr.f32.mxu0 0.0
        %801 = vmatmul.mubr.f32.gmra.mrb[0].mxu0 %v469
        %v802 = vpop.f32.mrb[0].mxu0
        %v803 = vadd.f32 0.0, %v802
        %v804 = vpop.f32.mrb[0].mxu0
        %805 = vmatprep.mubr.f32.mxu0 0.0
        %806 = vmatmul.mubr.f32.gmra.mrb[0].mxu0 %v472
        %v807 = vpop.f32.mrb[0].mxu0
        %v808 = vadd.f32 0.0, %v807
        %v809 = vpop.f32.mrb[0].mxu0
        %810 = vmatprep.mubr.f32.mxu0 0.0
        %811 = vmatmul.mubr.f32.gmra.mrb[0].mxu0 %v475
        %v812 = vpop.f32.mrb[0].mxu0
        %v813 = vadd.f32 0.0, %v812
        %v814 = vpop.f32.mrb[0].mxu0
        %815 = vmatprep.mubr.f32.mxu0 0.0
        %816 = vmatmul.mubr.f32.gmra.mrb[0].mxu0 %v478
        %v817 = vpop.f32.mrb[0].mxu0
        %v818 = vadd.f32 0.0, %v817
        %v819 = vpop.f32.mrb[0].mxu0
        %820 = vmatprep.mubr.f32.mxu0 0.0
        %821 = vmatmul.mubr.f32.gmra.mrb[0].mxu0 %v481
        %v822 = vpop.f32.mrb[0].mxu0
        %v823 = vadd.f32 0.0, %v822
        %v824 = vpop.f32.mrb[0].mxu0
        %825 = vmatprep.mubr.f32.mxu0 0.0
        %826 = vmatmul.mubr.f32.gmra.mrb[0].mxu0 %v484
        %v827 = vpop.f32.mrb[0].mxu0
        %v828 = vadd.f32 0.0, %v827
        %v829 = vpop.f32.mrb[0].mxu0
        %830 = vmatprep.mubr.f32.mxu0 0.0
        %831 = vmatmul.mubr.f32.gmra.mrb[0].mxu0 %v487
        %v832 = vpop.f32.mrb[0].mxu0
        %v833 = vadd.f32 0.0, %v832
        %v834 = vpop.f32.mrb[0].mxu0
        %835 = vmatprep.mubr.f32.mxu0 0.0
        %836 = vmatmul.mubr.f32.gmra.mrb[0].mxu0 %v490
        %v837 = vpop.f32.mrb[0].mxu0
        %v838 = vadd.f32 0.0, %v837
        %v839 = vpop.f32.mrb[0].mxu0
        %840 = vmatprep.mubr.f32.mxu0 0.0
        %841 = vmatmul.mubr.f32.gmra.mrb[0].mxu0 %v493
        %v842 = vpop.f32.mrb[0].mxu0
        %v843 = vadd.f32 0.0, %v842
        %v844 = vpop.f32.mrb[0].mxu0
        %845 = vmatprep.mubr.f32.mxu0 0.0
        %846 = vmatmul.mubr.f32.gmra.mrb[0].mxu0 %v496
        %v847 = vpop.f32.mrb[0].mxu0
        %v848 = vadd.f32 0.0, %v847
        %v849 = vpop.f32.mrb[0].mxu0
        %850 = vmatprep.mubr.f32.mxu0 0.0
        %851 = vmatmul.mubr.f32.gmra.mrb[0].mxu0 %v499
        %v852 = vpop.f32.mrb[0].mxu0
        %v853 = vadd.f32 0.0, %v852
        %v854 = vpop.f32.mrb[0].mxu0
        %855 = vmatprep.mubr.f32.mxu0 0.0
        %856 = vmatmul.mubr.f32.gmra.mrb[0].mxu0 %v502
        %v857 = vpop.f32.mrb[0].mxu0
        %v858 = vadd.f32 0.0, %v857
        %v859 = vpop.f32.mrb[0].mxu0
        %860 = vmatprep.mubr.f32.mxu0 0.0
        %861 = vmatmul.mubr.f32.gmra.mrb[0].mxu0 %v505
        %v862 = vpop.f32.mrb[0].mxu0
        %v863 = vadd.f32 0.0, %v862
        %v864 = vpop.f32.mrb[0].mxu0
        %865 = vmatprep.mubr.f32.mxu0 0.0
        %866 = vmatmul.mubr.f32.gmra.mrb[0].mxu0 %v508
        %v867 = vpop.f32.mrb[0].mxu0
        %v868 = vadd.f32 0.0, %v867
        %v869 = vpop.f32.mrb[0].mxu0
        %870 = vmatprep.mubr.f32.mxu0 0.0
        %871 = vmatmul.mubr.f32.gmra.mrb[0].mxu0 %v511
        %v872 = vpop.f32.mrb[0].mxu0
        %v873 = vadd.f32 0.0, %v872
        %v874 = vpop.f32.mrb[0].mxu0
        %875 = vmatprep.mubr.f32.mxu0 0.0
        %876 = vmatmul.mubr.f32.gmra.mrb[0].mxu0 %v514
        %v877 = vpop.f32.mrb[0].mxu0
        %v878 = vadd.f32 0.0, %v877
        %v879 = vpop.f32.mrb[0].mxu0
        %880 = vmatprep.mubr.f32.mxu0 0.0
        %881 = vmatmul.mubr.f32.gmra.mrb[0].mxu0 %v517
        %v882 = vpop.f32.mrb[0].mxu0
        %v883 = vadd.f32 0.0, %v882
        %v884 = vpop.f32.mrb[0].mxu0
        %885 = vmatprep.mubr.f32.mxu0 0.0
        %886 = vmatmul.mubr.f32.gmra.mrb[0].mxu0 %v520
        %v887 = vpop.f32.mrb[0].mxu0
        %v888 = vadd.f32 0.0, %v887
        %v889 = vpop.f32.mrb[0].mxu0
        %890 = vmatprep.mubr.f32.mxu0 0.0
        %891 = vmatmul.mubr.f32.gmra.mrb[0].mxu0 %v523
        %v892 = vpop.f32.mrb[0].mxu0
        %v893 = vadd.f32 0.0, %v892
        %v894 = vpop.f32.mrb[0].mxu0
        %895 = vmatprep.mubr.f32.mxu0 0.0
        %896 = vmatmul.mubr.f32.gmra.mrb[0].mxu0 %v526
        %v897 = vpop.f32.mrb[0].mxu0
        %v898 = vadd.f32 0.0, %v897
        %v899 = vpop.f32.mrb[0].mxu0
        %900 = vmatprep.mubr.f32.mxu0 0.0
        %901 = vmatmul.mubr.f32.gmra.mrb[0].mxu0 %v529
        %v902 = vpop.f32.mrb[0].mxu0
        %v903 = vadd.f32 0.0, %v902
        %v904 = vpop.f32.mrb[0].mxu0
        %905 = vmatprep.mubr.f32.mxu0 0.0
        %906 = vmatmul.mubr.f32.gmra.mrb[0].mxu0 %v532
        %v907 = vpop.f32.mrb[0].mxu0
        %v908 = vadd.f32 0.0, %v907
        %v909 = vpop.f32.mrb[0].mxu0
        %910 = vmatprep.mubr.f32.mxu0 0.0
        %911 = vmatmul.mubr.f32.gmra.mrb[0].mxu0 %v535
        %v912 = vpop.f32.mrb[0].mxu0
        %v913 = vadd.f32 0.0, %v912
        %v914 = vpop.f32.mrb[0].mxu0
        %915 = vmatprep.mubr.f32.mxu0 0.0
        %916 = vmatmul.mubr.f32.gmra.mrb[0].mxu0 %v538
        %v917 = vpop.f32.mrb[0].mxu0
        %v918 = vadd.f32 0.0, %v917
        %v919 = vpop.f32.mrb[0].mxu0
        %920 = vmatprep.mubr.f32.mxu0 0.0
        %921 = vmatmul.mubr.f32.gmra.mrb[0].mxu0 %v541
        %v922 = vpop.f32.mrb[0].mxu0
        %v923 = vadd.f32 0.0, %v922
        %v924 = vpop.f32.mrb[0].mxu0
        %925 = vmatprep.mubr.f32.mxu0 0.0
        %926 = vmatmul.mubr.f32.gmra.mrb[0].mxu0 %v544
        %v927 = vpop.f32.mrb[0].mxu0
        %v928 = vadd.f32 0.0, %v927
        %v929 = vpop.f32.mrb[0].mxu0
        %930 = vdwg.mxu0
        %931 = vadd.xlane.f32.xlu0 %v613
        %v932 = vpop.xlane.xlu0 %931
        %933 = vadd.xlane.f32.xlu0 %v618
        %v934 = vpop.xlane.xlu0 %933
        %935 = vadd.xlane.f32.xlu0 %v623
        %v936 = vpop.xlane.xlu0 %935
        %937 = vadd.xlane.f32.xlu0 %v628
        %v938 = vpop.xlane.xlu0 %937
        %939 = vadd.xlane.f32.xlu0 %v633
        %v940 = vpop.xlane.xlu0 %939
        %941 = vadd.xlane.f32.xlu0 %v638
        %v942 = vpop.xlane.xlu0 %941
        %943 = vadd.xlane.f32.xlu0 %v643
        %v944 = vpop.xlane.xlu0 %943
        %945 = vadd.xlane.f32.xlu0 %v648
        %v946 = vpop.xlane.xlu0 %945
        %947 = vadd.xlane.f32.xlu0 %v653
        %v948 = vpop.xlane.xlu0 %947
        %949 = vadd.xlane.f32.xlu0 %v658
        %v950 = vpop.xlane.xlu0 %949
        %951 = vadd.xlane.f32.xlu0 %v663
        %v952 = vpop.xlane.xlu0 %951
        %953 = vadd.xlane.f32.xlu0 %v668
        %v954 = vpop.xlane.xlu0 %953
        %955 = vadd.xlane.f32.xlu0 %v673
        %v956 = vpop.xlane.xlu0 %955
        %957 = vadd.xlane.f32.xlu0 %v678
        %v958 = vpop.xlane.xlu0 %957
        %959 = vadd.xlane.f32.xlu0 %v683
        %v960 = vpop.xlane.xlu0 %959
        %961 = vadd.xlane.f32.xlu0 %v688
        %v962 = vpop.xlane.xlu0 %961
        %963 = vadd.xlane.f32.xlu0 %v693
        %v964 = vpop.xlane.xlu0 %963
        %965 = vadd.xlane.f32.xlu0 %v698
        %v966 = vpop.xlane.xlu0 %965
        %967 = vadd.xlane.f32.xlu0 %v703
        %v968 = vpop.xlane.xlu0 %967
        %969 = vadd.xlane.f32.xlu0 %v708
        %v970 = vpop.xlane.xlu0 %969
        %971 = vadd.xlane.f32.xlu0 %v713
        %v972 = vpop.xlane.xlu0 %971
        %973 = vadd.xlane.f32.xlu0 %v718
        %v974 = vpop.xlane.xlu0 %973
        %975 = vadd.xlane.f32.xlu0 %v723
        %v976 = vpop.xlane.xlu0 %975
        %977 = vadd.xlane.f32.xlu0 %v728
        %v978 = vpop.xlane.xlu0 %977
        %979 = vadd.xlane.f32.xlu0 %v733
        %v980 = vpop.xlane.xlu0 %979
        %981 = vadd.xlane.f32.xlu0 %v738
        %v982 = vpop.xlane.xlu0 %981
        %983 = vadd.xlane.f32.xlu0 %v743
        %v984 = vpop.xlane.xlu0 %983
        %985 = vadd.xlane.f32.xlu0 %v748
        %v986 = vpop.xlane.xlu0 %985
        %987 = vadd.xlane.f32.xlu0 %v753
        %v988 = vpop.xlane.xlu0 %987
        %989 = vadd.xlane.f32.xlu0 %v758
        %v990 = vpop.xlane.xlu0 %989
        %991 = vadd.xlane.f32.xlu0 %v763
        %v992 = vpop.xlane.xlu0 %991
        %993 = vadd.xlane.f32.xlu0 %v768
        %v994 = vpop.xlane.xlu0 %993
        %995 = vadd.xlane.f32.xlu0 %v773
        %v996 = vpop.xlane.xlu0 %995
        %997 = vadd.xlane.f32.xlu0 %v778
        %v998 = vpop.xlane.xlu0 %997
        %999 = vadd.xlane.f32.xlu0 %v783
        %v1000 = vpop.xlane.xlu0 %999
        %1001 = vadd.xlane.f32.xlu0 %v788
        %v1002 = vpop.xlane.xlu0 %1001
        %1003 = vadd.xlane.f32.xlu0 %v793
        %v1004 = vpop.xlane.xlu0 %1003
        %1005 = vadd.xlane.f32.xlu0 %v798
        %v1006 = vpop.xlane.xlu0 %1005
        %1007 = vadd.xlane.f32.xlu0 %v803
        %v1008 = vpop.xlane.xlu0 %1007
        %1009 = vadd.xlane.f32.xlu0 %v808
        %v1010 = vpop.xlane.xlu0 %1009
        %1011 = vadd.xlane.f32.xlu0 %v813
        %v1012 = vpop.xlane.xlu0 %1011
        %1013 = vadd.xlane.f32.xlu0 %v818
        %v1014 = vpop.xlane.xlu0 %1013
        %1015 = vadd.xlane.f32.xlu0 %v823
        %v1016 = vpop.xlane.xlu0 %1015
        %1017 = vadd.xlane.f32.xlu0 %v828
        %v1018 = vpop.xlane.xlu0 %1017
        %1019 = vadd.xlane.f32.xlu0 %v833
        %v1020 = vpop.xlane.xlu0 %1019
        %1021 = vadd.xlane.f32.xlu0 %v838
        %v1022 = vpop.xlane.xlu0 %1021
        %1023 = vadd.xlane.f32.xlu0 %v843
        %v1024 = vpop.xlane.xlu0 %1023
        %1025 = vadd.xlane.f32.xlu0 %v848
        %v1026 = vpop.xlane.xlu0 %1025
        %1027 = vadd.xlane.f32.xlu0 %v853
        %v1028 = vpop.xlane.xlu0 %1027
        %1029 = vadd.xlane.f32.xlu0 %v858
        %v1030 = vpop.xlane.xlu0 %1029
        %1031 = vadd.xlane.f32.xlu0 %v863
        %v1032 = vpop.xlane.xlu0 %1031
        %1033 = vadd.xlane.f32.xlu0 %v868
        %v1034 = vpop.xlane.xlu0 %1033
        %1035 = vadd.xlane.f32.xlu0 %v873
        %v1036 = vpop.xlane.xlu0 %1035
        %1037 = vadd.xlane.f32.xlu0 %v878
        %v1038 = vpop.xlane.xlu0 %1037
        %1039 = vadd.xlane.f32.xlu0 %v883
        %v1040 = vpop.xlane.xlu0 %1039
        %1041 = vadd.xlane.f32.xlu0 %v888
        %v1042 = vpop.xlane.xlu0 %1041
        %1043 = vadd.xlane.f32.xlu0 %v893
        %v1044 = vpop.xlane.xlu0 %1043
        %1045 = vadd.xlane.f32.xlu0 %v898
        %v1046 = vpop.xlane.xlu0 %1045
        %1047 = vadd.xlane.f32.xlu0 %v903
        %v1048 = vpop.xlane.xlu0 %1047
        %1049 = vadd.xlane.f32.xlu0 %v908
        %v1050 = vpop.xlane.xlu0 %1049
        %1051 = vadd.xlane.f32.xlu0 %v913
        %v1052 = vpop.xlane.xlu0 %1051
        %1053 = vadd.xlane.f32.xlu0 %v918
        %v1054 = vpop.xlane.xlu0 %1053
        %1055 = vadd.xlane.f32.xlu0 %v923
        %v1056 = vpop.xlane.xlu0 %1055
        %1057 = vadd.xlane.f32.xlu0 %v928
        %v1058 = vpop.xlane.xlu0 %1057
        %v1059 = vmul.f32 %v613, %v613
        %v1060 = vmul.f32 %v618, %v618
        %v1061 = vmul.f32 %v623, %v623
        %v1062 = vmul.f32 %v628, %v628
        %v1063 = vmul.f32 %v633, %v633
        %v1064 = vmul.f32 %v638, %v638
        %v1065 = vmul.f32 %v643, %v643
        %v1066 = vmul.f32 %v648, %v648
        %v1067 = vmul.f32 %v653, %v653
        %v1068 = vmul.f32 %v658, %v658
        %v1069 = vmul.f32 %v663, %v663
        %v1070 = vmul.f32 %v668, %v668
        %v1071 = vmul.f32 %v673, %v673
        %v1072 = vmul.f32 %v678, %v678
        %v1073 = vmul.f32 %v683, %v683
        %v1074 = vmul.f32 %v688, %v688
        %v1075 = vmul.f32 %v693, %v693
        %v1076 = vmul.f32 %v698, %v698
        %v1077 = vmul.f32 %v703, %v703
        %v1078 = vmul.f32 %v708, %v708
        %v1079 = vmul.f32 %v713, %v713
        %v1080 = vmul.f32 %v718, %v718
        %v1081 = vmul.f32 %v723, %v723
        %v1082 = vmul.f32 %v728, %v728
        %v1083 = vmul.f32 %v733, %v733
        %v1084 = vmul.f32 %v738, %v738
        %v1085 = vmul.f32 %v743, %v743
        %v1086 = vmul.f32 %v748, %v748
        %v1087 = vmul.f32 %v753, %v753
        %v1088 = vmul.f32 %v758, %v758
        %v1089 = vmul.f32 %v763, %v763
        %v1090 = vmul.f32 %v768, %v768
        %v1091 = vmul.f32 %v773, %v773
        %v1092 = vmul.f32 %v778, %v778
        %v1093 = vmul.f32 %v783, %v783
        %v1094 = vmul.f32 %v788, %v788
        %v1095 = vmul.f32 %v793, %v793
        %v1096 = vmul.f32 %v798, %v798
        %v1097 = vmul.f32 %v803, %v803
        %v1098 = vmul.f32 %v808, %v808
        %v1099 = vmul.f32 %v813, %v813
        %v1100 = vmul.f32 %v818, %v818
        %v1101 = vmul.f32 %v823, %v823
        %v1102 = vmul.f32 %v828, %v828
        %v1103 = vmul.f32 %v833, %v833
        %v1104 = vmul.f32 %v838, %v838
        %v1105 = vmul.f32 %v843, %v843
        %v1106 = vmul.f32 %v848, %v848
        %v1107 = vmul.f32 %v853, %v853
        %v1108 = vmul.f32 %v858, %v858
        %v1109 = vmul.f32 %v863, %v863
        %v1110 = vmul.f32 %v868, %v868
        %v1111 = vmul.f32 %v873, %v873
        %v1112 = vmul.f32 %v878, %v878
        %v1113 = vmul.f32 %v883, %v883
        %v1114 = vmul.f32 %v888, %v888
        %v1115 = vmul.f32 %v893, %v893
        %v1116 = vmul.f32 %v898, %v898
        %v1117 = vmul.f32 %v903, %v903
        %v1118 = vmul.f32 %v908, %v908
        %v1119 = vmul.f32 %v913, %v913
        %v1120 = vmul.f32 %v918, %v918
        %v1121 = vmul.f32 %v923, %v923
        %v1122 = vmul.f32 %v928, %v928
        %1123 = vadd.xlane.f32.xlu0 %v1059
        %v1124 = vpop.xlane.xlu0 %1123
        %1125 = vadd.xlane.f32.xlu0 %v1060
        %v1126 = vpop.xlane.xlu0 %1125
        %1127 = vadd.xlane.f32.xlu0 %v1061
        %v1128 = vpop.xlane.xlu0 %1127
        %1129 = vadd.xlane.f32.xlu0 %v1062
        %v1130 = vpop.xlane.xlu0 %1129
        %1131 = vadd.xlane.f32.xlu0 %v1063
        %v1132 = vpop.xlane.xlu0 %1131
        %1133 = vadd.xlane.f32.xlu0 %v1064
        %v1134 = vpop.xlane.xlu0 %1133
        %1135 = vadd.xlane.f32.xlu0 %v1065
        %v1136 = vpop.xlane.xlu0 %1135
        %1137 = vadd.xlane.f32.xlu0 %v1066
        %v1138 = vpop.xlane.xlu0 %1137
        %1139 = vadd.xlane.f32.xlu0 %v1067
        %v1140 = vpop.xlane.xlu0 %1139
        %1141 = vadd.xlane.f32.xlu0 %v1068
        %v1142 = vpop.xlane.xlu0 %1141
        %1143 = vadd.xlane.f32.xlu0 %v1069
        %v1144 = vpop.xlane.xlu0 %1143
        %1145 = vadd.xlane.f32.xlu0 %v1070
        %v1146 = vpop.xlane.xlu0 %1145
        %1147 = vadd.xlane.f32.xlu0 %v1071
        %v1148 = vpop.xlane.xlu0 %1147
        %1149 = vadd.xlane.f32.xlu0 %v1072
        %v1150 = vpop.xlane.xlu0 %1149
        %1151 = vadd.xlane.f32.xlu0 %v1073
        %v1152 = vpop.xlane.xlu0 %1151
        %1153 = vadd.xlane.f32.xlu0 %v1074
        %v1154 = vpop.xlane.xlu0 %1153
        %1155 = vadd.xlane.f32.xlu0 %v1075
        %v1156 = vpop.xlane.xlu0 %1155
        %1157 = vadd.xlane.f32.xlu0 %v1076
        %v1158 = vpop.xlane.xlu0 %1157
        %1159 = vadd.xlane.f32.xlu0 %v1077
        %v1160 = vpop.xlane.xlu0 %1159
        %1161 = vadd.xlane.f32.xlu0 %v1078
        %v1162 = vpop.xlane.xlu0 %1161
        %1163 = vadd.xlane.f32.xlu0 %v1079
        %v1164 = vpop.xlane.xlu0 %1163
        %1165 = vadd.xlane.f32.xlu0 %v1080
        %v1166 = vpop.xlane.xlu0 %1165
        %1167 = vadd.xlane.f32.xlu0 %v1081
        %v1168 = vpop.xlane.xlu0 %1167
        %1169 = vadd.xlane.f32.xlu0 %v1082
        %v1170 = vpop.xlane.xlu0 %1169
        %1171 = vadd.xlane.f32.xlu0 %v1083
        %v1172 = vpop.xlane.xlu0 %1171
        %1173 = vadd.xlane.f32.xlu0 %v1084
        %v1174 = vpop.xlane.xlu0 %1173
        %1175 = vadd.xlane.f32.xlu0 %v1085
        %v1176 = vpop.xlane.xlu0 %1175
        %1177 = vadd.xlane.f32.xlu0 %v1086
        %v1178 = vpop.xlane.xlu0 %1177
        %1179 = vadd.xlane.f32.xlu0 %v1087
        %v1180 = vpop.xlane.xlu0 %1179
        %1181 = vadd.xlane.f32.xlu0 %v1088
        %v1182 = vpop.xlane.xlu0 %1181
        %1183 = vadd.xlane.f32.xlu0 %v1089
        %v1184 = vpop.xlane.xlu0 %1183
        %1185 = vadd.xlane.f32.xlu0 %v1090
        %v1186 = vpop.xlane.xlu0 %1185
        %1187 = vadd.xlane.f32.xlu0 %v1091
        %v1188 = vpop.xlane.xlu0 %1187
        %1189 = vadd.xlane.f32.xlu0 %v1092
        %v1190 = vpop.xlane.xlu0 %1189
        %1191 = vadd.xlane.f32.xlu0 %v1093
        %v1192 = vpop.xlane.xlu0 %1191
        %1193 = vadd.xlane.f32.xlu0 %v1094
        %v1194 = vpop.xlane.xlu0 %1193
        %1195 = vadd.xlane.f32.xlu0 %v1095
        %v1196 = vpop.xlane.xlu0 %1195
        %1197 = vadd.xlane.f32.xlu0 %v1096
        %v1198 = vpop.xlane.xlu0 %1197
        %1199 = vadd.xlane.f32.xlu0 %v1097
        %v1200 = vpop.xlane.xlu0 %1199
        %1201 = vadd.xlane.f32.xlu0 %v1098
        %v1202 = vpop.xlane.xlu0 %1201
        %1203 = vadd.xlane.f32.xlu0 %v1099
        %v1204 = vpop.xlane.xlu0 %1203
        %1205 = vadd.xlane.f32.xlu0 %v1100
        %v1206 = vpop.xlane.xlu0 %1205
        %1207 = vadd.xlane.f32.xlu0 %v1101
        %v1208 = vpop.xlane.xlu0 %1207
        %1209 = vadd.xlane.f32.xlu0 %v1102
        %v1210 = vpop.xlane.xlu0 %1209
        %1211 = vadd.xlane.f32.xlu0 %v1103
        %v1212 = vpop.xlane.xlu0 %1211
        %1213 = vadd.xlane.f32.xlu0 %v1104
        %v1214 = vpop.xlane.xlu0 %1213
        %1215 = vadd.xlane.f32.xlu0 %v1105
        %v1216 = vpop.xlane.xlu0 %1215
        %1217 = vadd.xlane.f32.xlu0 %v1106
        %v1218 = vpop.xlane.xlu0 %1217
        %1219 = vadd.xlane.f32.xlu0 %v1107
        %v1220 = vpop.xlane.xlu0 %1219
        %1221 = vadd.xlane.f32.xlu0 %v1108
        %v1222 = vpop.xlane.xlu0 %1221
        %1223 = vadd.xlane.f32.xlu0 %v1109
        %v1224 = vpop.xlane.xlu0 %1223
        %1225 = vadd.xlane.f32.xlu0 %v1110
        %v1226 = vpop.xlane.xlu0 %1225
        %1227 = vadd.xlane.f32.xlu0 %v1111
        %v1228 = vpop.xlane.xlu0 %1227
        %1229 = vadd.xlane.f32.xlu0 %v1112
        %v1230 = vpop.xlane.xlu0 %1229
        %1231 = vadd.xlane.f32.xlu0 %v1113
        %v1232 = vpop.xlane.xlu0 %1231
        %1233 = vadd.xlane.f32.xlu0 %v1114
        %v1234 = vpop.xlane.xlu0 %1233
        %1235 = vadd.xlane.f32.xlu0 %v1115
        %v1236 = vpop.xlane.xlu0 %1235
        %1237 = vadd.xlane.f32.xlu0 %v1116
        %v1238 = vpop.xlane.xlu0 %1237
        %1239 = vadd.xlane.f32.xlu0 %v1117
        %v1240 = vpop.xlane.xlu0 %1239
        %1241 = vadd.xlane.f32.xlu0 %v1118
        %v1242 = vpop.xlane.xlu0 %1241
        %1243 = vadd.xlane.f32.xlu0 %v1119
        %v1244 = vpop.xlane.xlu0 %1243
        %1245 = vadd.xlane.f32.xlu0 %v1120
        %v1246 = vpop.xlane.xlu0 %1245
        %1247 = vadd.xlane.f32.xlu0 %v1121
        %v1248 = vpop.xlane.xlu0 %1247
        %1249 = vadd.xlane.f32.xlu0 %v1122
        %v1250 = vpop.xlane.xlu0 %1249
        %v1251 = vmul.f32 %v932, 0.0078125
        %v1252 = vmul.f32 %v934, 0.0078125
        %v1253 = vmul.f32 %v936, 0.0078125
        %v1254 = vmul.f32 %v938, 0.0078125
        %v1255 = vmul.f32 %v940, 0.0078125
        %v1256 = vmul.f32 %v942, 0.0078125
        %v1257 = vmul.f32 %v944, 0.0078125
        %v1258 = vmul.f32 %v946, 0.0078125
        %v1259 = vmul.f32 %v948, 0.0078125
        %v1260 = vmul.f32 %v950, 0.0078125
        %v1261 = vmul.f32 %v952, 0.0078125
        %v1262 = vmul.f32 %v954, 0.0078125
        %v1263 = vmul.f32 %v956, 0.0078125
        %v1264 = vmul.f32 %v958, 0.0078125
        %v1265 = vmul.f32 %v960, 0.0078125
        %v1266 = vmul.f32 %v962, 0.0078125
        %v1267 = vmul.f32 %v964, 0.0078125
        %v1268 = vmul.f32 %v966, 0.0078125
        %v1269 = vmul.f32 %v968, 0.0078125
        %v1270 = vmul.f32 %v970, 0.0078125
        %v1271 = vmul.f32 %v972, 0.0078125
        %v1272 = vmul.f32 %v974, 0.0078125
        %v1273 = vmul.f32 %v976, 0.0078125
        %v1274 = vmul.f32 %v978, 0.0078125
        %v1275 = vmul.f32 %v980, 0.0078125
        %v1276 = vmul.f32 %v982, 0.0078125
        %v1277 = vmul.f32 %v984, 0.0078125
        %v1278 = vmul.f32 %v986, 0.0078125
        %v1279 = vmul.f32 %v988, 0.0078125
        %v1280 = vmul.f32 %v990, 0.0078125
        %v1281 = vmul.f32 %v992, 0.0078125
        %v1282 = vmul.f32 %v994, 0.0078125
        %v1283 = vmul.f32 %v996, 0.0078125
        %v1284 = vmul.f32 %v998, 0.0078125
        %v1285 = vmul.f32 %v1000, 0.0078125
        %v1286 = vmul.f32 %v1002, 0.0078125
        %v1287 = vmul.f32 %v1004, 0.0078125
        %v1288 = vmul.f32 %v1006, 0.0078125
        %v1289 = vmul.f32 %v1008, 0.0078125
        %v1290 = vmul.f32 %v1010, 0.0078125
        %v1291 = vmul.f32 %v1012, 0.0078125
        %v1292 = vmul.f32 %v1014, 0.0078125
        %v1293 = vmul.f32 %v1016, 0.0078125
        %v1294 = vmul.f32 %v1018, 0.0078125
        %v1295 = vmul.f32 %v1020, 0.0078125
        %v1296 = vmul.f32 %v1022, 0.0078125
        %v1297 = vmul.f32 %v1024, 0.0078125
        %v1298 = vmul.f32 %v1026, 0.0078125
        %v1299 = vmul.f32 %v1028, 0.0078125
        %v1300 = vmul.f32 %v1030, 0.0078125
        %v1301 = vmul.f32 %v1032, 0.0078125
        %v1302 = vmul.f32 %v1034, 0.0078125
        %v1303 = vmul.f32 %v1036, 0.0078125
        %v1304 = vmul.f32 %v1038, 0.0078125
        %v1305 = vmul.f32 %v1040, 0.0078125
        %v1306 = vmul.f32 %v1042, 0.0078125
        %v1307 = vmul.f32 %v1044, 0.0078125
        %v1308 = vmul.f32 %v1046, 0.0078125
        %v1309 = vmul.f32 %v1048, 0.0078125
        %v1310 = vmul.f32 %v1050, 0.0078125
        %v1311 = vmul.f32 %v1052, 0.0078125
        %v1312 = vmul.f32 %v1054, 0.0078125
        %v1313 = vmul.f32 %v1056, 0.0078125
        %v1314 = vmul.f32 %v1058, 0.0078125
        %v1315 = vmul.f32 %v1124, 0.0078125
        %v1316 = vmul.f32 %v1126, 0.0078125
        %v1317 = vmul.f32 %v1128, 0.0078125
        %v1318 = vmul.f32 %v1130, 0.0078125
        %v1319 = vmul.f32 %v1132, 0.0078125
        %v1320 = vmul.f32 %v1134, 0.0078125
        %v1321 = vmul.f32 %v1136, 0.0078125
        %v1322 = vmul.f32 %v1138, 0.0078125
        %v1323 = vmul.f32 %v1140, 0.0078125
        %v1324 = vmul.f32 %v1142, 0.0078125
        %v1325 = vmul.f32 %v1144, 0.0078125
        %v1326 = vmul.f32 %v1146, 0.0078125
        %v1327 = vmul.f32 %v1148, 0.0078125
        %v1328 = vmul.f32 %v1150, 0.0078125
        %v1329 = vmul.f32 %v1152, 0.0078125
        %v1330 = vmul.f32 %v1154, 0.0078125
        %v1331 = vmul.f32 %v1156, 0.0078125
        %v1332 = vmul.f32 %v1158, 0.0078125
        %v1333 = vmul.f32 %v1160, 0.0078125
        %v1334 = vmul.f32 %v1162, 0.0078125
        %v1335 = vmul.f32 %v1164, 0.0078125
        %v1336 = vmul.f32 %v1166, 0.0078125
        %v1337 = vmul.f32 %v1168, 0.0078125
        %v1338 = vmul.f32 %v1170, 0.0078125
        %v1339 = vmul.f32 %v1172, 0.0078125
        %v1340 = vmul.f32 %v1174, 0.0078125
        %v1341 = vmul.f32 %v1176, 0.0078125
        %v1342 = vmul.f32 %v1178, 0.0078125
        %v1343 = vmul.f32 %v1180, 0.0078125
        %v1344 = vmul.f32 %v1182, 0.0078125
        %v1345 = vmul.f32 %v1184, 0.0078125
        %v1346 = vmul.f32 %v1186, 0.0078125
        %v1347 = vmul.f32 %v1188, 0.0078125
        %v1348 = vmul.f32 %v1190, 0.0078125
        %v1349 = vmul.f32 %v1192, 0.0078125
        %v1350 = vmul.f32 %v1194, 0.0078125
        %v1351 = vmul.f32 %v1196, 0.0078125
        %v1352 = vmul.f32 %v1198, 0.0078125
        %v1353 = vmul.f32 %v1200, 0.0078125
        %v1354 = vmul.f32 %v1202, 0.0078125
        %v1355 = vmul.f32 %v1204, 0.0078125
        %v1356 = vmul.f32 %v1206, 0.0078125
        %v1357 = vmul.f32 %v1208, 0.0078125
        %v1358 = vmul.f32 %v1210, 0.0078125
        %v1359 = vmul.f32 %v1212, 0.0078125
        %v1360 = vmul.f32 %v1214, 0.0078125
        %v1361 = vmul.f32 %v1216, 0.0078125
        %v1362 = vmul.f32 %v1218, 0.0078125
        %v1363 = vmul.f32 %v1220, 0.0078125
        %v1364 = vmul.f32 %v1222, 0.0078125
        %v1365 = vmul.f32 %v1224, 0.0078125
        %v1366 = vmul.f32 %v1226, 0.0078125
        %v1367 = vmul.f32 %v1228, 0.0078125
        %v1368 = vmul.f32 %v1230, 0.0078125
        %v1369 = vmul.f32 %v1232, 0.0078125
        %v1370 = vmul.f32 %v1234, 0.0078125
        %v1371 = vmul.f32 %v1236, 0.0078125
        %v1372 = vmul.f32 %v1238, 0.0078125
        %v1373 = vmul.f32 %v1240, 0.0078125
        %v1374 = vmul.f32 %v1242, 0.0078125
        %v1375 = vmul.f32 %v1244, 0.0078125
        %v1376 = vmul.f32 %v1246, 0.0078125
        %v1377 = vmul.f32 %v1248, 0.0078125
        %v1378 = vmul.f32 %v1250, 0.0078125
        %v1379 = vmul.f32 %v1251, %v1251
        %v1380 = vmul.f32 %v1252, %v1252
        %v1381 = vmul.f32 %v1253, %v1253
        %v1382 = vmul.f32 %v1254, %v1254
        %v1383 = vmul.f32 %v1255, %v1255
        %v1384 = vmul.f32 %v1256, %v1256
        %v1385 = vmul.f32 %v1257, %v1257
        %v1386 = vmul.f32 %v1258, %v1258
        %v1387 = vmul.f32 %v1259, %v1259
        %v1388 = vmul.f32 %v1260, %v1260
        %v1389 = vmul.f32 %v1261, %v1261
        %v1390 = vmul.f32 %v1262, %v1262
        %v1391 = vmul.f32 %v1263, %v1263
        %v1392 = vmul.f32 %v1264, %v1264
        %v1393 = vmul.f32 %v1265, %v1265
        %v1394 = vmul.f32 %v1266, %v1266
        %v1395 = vmul.f32 %v1267, %v1267
        %v1396 = vmul.f32 %v1268, %v1268
        %v1397 = vmul.f32 %v1269, %v1269
        %v1398 = vmul.f32 %v1270, %v1270
        %v1399 = vmul.f32 %v1271, %v1271
        %v1400 = vmul.f32 %v1272, %v1272
        %v1401 = vmul.f32 %v1273, %v1273
        %v1402 = vmul.f32 %v1274, %v1274
        %v1403 = vmul.f32 %v1275, %v1275
        %v1404 = vmul.f32 %v1276, %v1276
        %v1405 = vmul.f32 %v1277, %v1277
        %v1406 = vmul.f32 %v1278, %v1278
        %v1407 = vmul.f32 %v1279, %v1279
        %v1408 = vmul.f32 %v1280, %v1280
        %v1409 = vmul.f32 %v1281, %v1281
        %v1410 = vmul.f32 %v1282, %v1282
        %v1411 = vmul.f32 %v1283, %v1283
        %v1412 = vmul.f32 %v1284, %v1284
        %v1413 = vmul.f32 %v1285, %v1285
        %v1414 = vmul.f32 %v1286, %v1286
        %v1415 = vmul.f32 %v1287, %v1287
        %v1416 = vmul.f32 %v1288, %v1288
        %v1417 = vmul.f32 %v1289, %v1289
        %v1418 = vmul.f32 %v1290, %v1290
        %v1419 = vmul.f32 %v1291, %v1291
        %v1420 = vmul.f32 %v1292, %v1292
        %v1421 = vmul.f32 %v1293, %v1293
        %v1422 = vmul.f32 %v1294, %v1294
        %v1423 = vmul.f32 %v1295, %v1295
        %v1424 = vmul.f32 %v1296, %v1296
        %v1425 = vmul.f32 %v1297, %v1297
        %v1426 = vmul.f32 %v1298, %v1298
        %v1427 = vmul.f32 %v1299, %v1299
        %v1428 = vmul.f32 %v1300, %v1300
        %v1429 = vmul.f32 %v1301, %v1301
        %v1430 = vmul.f32 %v1302, %v1302
        %v1431 = vmul.f32 %v1303, %v1303
        %v1432 = vmul.f32 %v1304, %v1304
        %v1433 = vmul.f32 %v1305, %v1305
        %v1434 = vmul.f32 %v1306, %v1306
        %v1435 = vmul.f32 %v1307, %v1307
        %v1436 = vmul.f32 %v1308, %v1308
        %v1437 = vmul.f32 %v1309, %v1309
        %v1438 = vmul.f32 %v1310, %v1310
        %v1439 = vmul.f32 %v1311, %v1311
        %v1440 = vmul.f32 %v1312, %v1312
        %v1441 = vmul.f32 %v1313, %v1313
        %v1442 = vmul.f32 %v1314, %v1314
        %v1443 = vsub.f32 %v1315, %v1379
        %v1444 = vsub.f32 %v1316, %v1380
        %v1445 = vsub.f32 %v1317, %v1381
        %v1446 = vsub.f32 %v1318, %v1382
        %v1447 = vsub.f32 %v1319, %v1383
        %v1448 = vsub.f32 %v1320, %v1384
        %v1449 = vsub.f32 %v1321, %v1385
        %v1450 = vsub.f32 %v1322, %v1386
        %v1451 = vsub.f32 %v1323, %v1387
        %v1452 = vsub.f32 %v1324, %v1388
        %v1453 = vsub.f32 %v1325, %v1389
        %v1454 = vsub.f32 %v1326, %v1390
        %v1455 = vsub.f32 %v1327, %v1391
        %v1456 = vsub.f32 %v1328, %v1392
        %v1457 = vsub.f32 %v1329, %v1393
        %v1458 = vsub.f32 %v1330, %v1394
        %v1459 = vsub.f32 %v1331, %v1395
        %v1460 = vsub.f32 %v1332, %v1396
        %v1461 = vsub.f32 %v1333, %v1397
        %v1462 = vsub.f32 %v1334, %v1398
        %v1463 = vsub.f32 %v1335, %v1399
        %v1464 = vsub.f32 %v1336, %v1400
        %v1465 = vsub.f32 %v1337, %v1401
        %v1466 = vsub.f32 %v1338, %v1402
        %v1467 = vsub.f32 %v1339, %v1403
        %v1468 = vsub.f32 %v1340, %v1404
        %v1469 = vsub.f32 %v1341, %v1405
        %v1470 = vsub.f32 %v1342, %v1406
        %v1471 = vsub.f32 %v1343, %v1407
        %v1472 = vsub.f32 %v1344, %v1408
        %v1473 = vsub.f32 %v1345, %v1409
        %v1474 = vsub.f32 %v1346, %v1410
        %v1475 = vsub.f32 %v1347, %v1411
        %v1476 = vsub.f32 %v1348, %v1412
        %v1477 = vsub.f32 %v1349, %v1413
        %v1478 = vsub.f32 %v1350, %v1414
        %v1479 = vsub.f32 %v1351, %v1415
        %v1480 = vsub.f32 %v1352, %v1416
        %v1481 = vsub.f32 %v1353, %v1417
        %v1482 = vsub.f32 %v1354, %v1418
        %v1483 = vsub.f32 %v1355, %v1419
        %v1484 = vsub.f32 %v1356, %v1420
        %v1485 = vsub.f32 %v1357, %v1421
        %v1486 = vsub.f32 %v1358, %v1422
        %v1487 = vsub.f32 %v1359, %v1423
        %v1488 = vsub.f32 %v1360, %v1424
        %v1489 = vsub.f32 %v1361, %v1425
        %v1490 = vsub.f32 %v1362, %v1426
        %v1491 = vsub.f32 %v1363, %v1427
        %v1492 = vsub.f32 %v1364, %v1428
        %v1493 = vsub.f32 %v1365, %v1429
        %v1494 = vsub.f32 %v1366, %v1430
        %v1495 = vsub.f32 %v1367, %v1431
        %v1496 = vsub.f32 %v1368, %v1432
        %v1497 = vsub.f32 %v1369, %v1433
        %v1498 = vsub.f32 %v1370, %v1434
        %v1499 = vsub.f32 %v1371, %v1435
        %v1500 = vsub.f32 %v1372, %v1436
        %v1501 = vsub.f32 %v1373, %v1437
        %v1502 = vsub.f32 %v1374, %v1438
        %v1503 = vsub.f32 %v1375, %v1439
        %v1504 = vsub.f32 %v1376, %v1440
        %v1505 = vsub.f32 %v1377, %v1441
        %v1506 = vsub.f32 %v1378, %v1442
        %v1507 = vsub.f32 %v613, %v1251
        %v1508 = vsub.f32 %v618, %v1252
        %v1509 = vsub.f32 %v623, %v1253
        %v1510 = vsub.f32 %v628, %v1254
        %v1511 = vsub.f32 %v633, %v1255
        %v1512 = vsub.f32 %v638, %v1256
        %v1513 = vsub.f32 %v643, %v1257
        %v1514 = vsub.f32 %v648, %v1258
        %v1515 = vsub.f32 %v653, %v1259
        %v1516 = vsub.f32 %v658, %v1260
        %v1517 = vsub.f32 %v663, %v1261
        %v1518 = vsub.f32 %v668, %v1262
        %v1519 = vsub.f32 %v673, %v1263
        %v1520 = vsub.f32 %v678, %v1264
        %v1521 = vsub.f32 %v683, %v1265
        %v1522 = vsub.f32 %v688, %v1266
        %v1523 = vsub.f32 %v693, %v1267
        %v1524 = vsub.f32 %v698, %v1268
        %v1525 = vsub.f32 %v703, %v1269
        %v1526 = vsub.f32 %v708, %v1270
        %v1527 = vsub.f32 %v713, %v1271
        %v1528 = vsub.f32 %v718, %v1272
        %v1529 = vsub.f32 %v723, %v1273
        %v1530 = vsub.f32 %v728, %v1274
        %v1531 = vsub.f32 %v733, %v1275
        %v1532 = vsub.f32 %v738, %v1276
        %v1533 = vsub.f32 %v743, %v1277
        %v1534 = vsub.f32 %v748, %v1278
        %v1535 = vsub.f32 %v753, %v1279
        %v1536 = vsub.f32 %v758, %v1280
        %v1537 = vsub.f32 %v763, %v1281
        %v1538 = vsub.f32 %v768, %v1282
        %v1539 = vsub.f32 %v773, %v1283
        %v1540 = vsub.f32 %v778, %v1284
        %v1541 = vsub.f32 %v783, %v1285
        %v1542 = vsub.f32 %v788, %v1286
        %v1543 = vsub.f32 %v793, %v1287
        %v1544 = vsub.f32 %v798, %v1288
        %v1545 = vsub.f32 %v803, %v1289
        %v1546 = vsub.f32 %v808, %v1290
        %v1547 = vsub.f32 %v813, %v1291
        %v1548 = vsub.f32 %v818, %v1292
        %v1549 = vsub.f32 %v823, %v1293
        %v1550 = vsub.f32 %v828, %v1294
        %v1551 = vsub.f32 %v833, %v1295
        %v1552 = vsub.f32 %v838, %v1296
        %v1553 = vsub.f32 %v843, %v1297
        %v1554 = vsub.f32 %v848, %v1298
        %v1555 = vsub.f32 %v853, %v1299
        %v1556 = vsub.f32 %v858, %v1300
        %v1557 = vsub.f32 %v863, %v1301
        %v1558 = vsub.f32 %v868, %v1302
        %v1559 = vsub.f32 %v873, %v1303
        %v1560 = vsub.f32 %v878, %v1304
        %v1561 = vsub.f32 %v883, %v1305
        %v1562 = vsub.f32 %v888, %v1306
        %v1563 = vsub.f32 %v893, %v1307
        %v1564 = vsub.f32 %v898, %v1308
        %v1565 = vsub.f32 %v903, %v1309
        %v1566 = vsub.f32 %v908, %v1310
        %v1567 = vsub.f32 %v913, %v1311
        %v1568 = vsub.f32 %v918, %v1312
        %v1569 = vsub.f32 %v923, %v1313
        %v1570 = vsub.f32 %v928, %v1314
        %v1571 = vadd.f32 %v1443, 1e-05
        %v1572 = vadd.f32 %v1444, 1e-05
        %v1573 = vadd.f32 %v1445, 1e-05
        %v1574 = vadd.f32 %v1446, 1e-05
        %v1575 = vadd.f32 %v1447, 1e-05
        %v1576 = vadd.f32 %v1448, 1e-05
        %v1577 = vadd.f32 %v1449, 1e-05
        %v1578 = vadd.f32 %v1450, 1e-05
        %v1579 = vadd.f32 %v1451, 1e-05
        %v1580 = vadd.f32 %v1452, 1e-05
        %v1581 = vadd.f32 %v1453, 1e-05
        %v1582 = vadd.f32 %v1454, 1e-05
        %v1583 = vadd.f32 %v1455, 1e-05
        %v1584 = vadd.f32 %v1456, 1e-05
        %v1585 = vadd.f32 %v1457, 1e-05
        %v1586 = vadd.f32 %v1458, 1e-05
        %v1587 = vadd.f32 %v1459, 1e-05
        %v1588 = vadd.f32 %v1460, 1e-05
        %v1589 = vadd.f32 %v1461, 1e-05
        %v1590 = vadd.f32 %v1462, 1e-05
        %v1591 = vadd.f32 %v1463, 1e-05
        %v1592 = vadd.f32 %v1464, 1e-05
        %v1593 = vadd.f32 %v1465, 1e-05
        %v1594 = vadd.f32 %v1466, 1e-05
        %v1595 = vadd.f32 %v1467, 1e-05
        %v1596 = vadd.f32 %v1468, 1e-05
        %v1597 = vadd.f32 %v1469, 1e-05
        %v1598 = vadd.f32 %v1470, 1e-05
        %v1599 = vadd.f32 %v1471, 1e-05
        %v1600 = vadd.f32 %v1472, 1e-05
        %v1601 = vadd.f32 %v1473, 1e-05
        %v1602 = vadd.f32 %v1474, 1e-05
        %v1603 = vadd.f32 %v1475, 1e-05
        %v1604 = vadd.f32 %v1476, 1e-05
        %v1605 = vadd.f32 %v1477, 1e-05
        %v1606 = vadd.f32 %v1478, 1e-05
        %v1607 = vadd.f32 %v1479, 1e-05
        %v1608 = vadd.f32 %v1480, 1e-05
        %v1609 = vadd.f32 %v1481, 1e-05
        %v1610 = vadd.f32 %v1482, 1e-05
        %v1611 = vadd.f32 %v1483, 1e-05
        %v1612 = vadd.f32 %v1484, 1e-05
        %v1613 = vadd.f32 %v1485, 1e-05
        %v1614 = vadd.f32 %v1486, 1e-05
        %v1615 = vadd.f32 %v1487, 1e-05
        %v1616 = vadd.f32 %v1488, 1e-05
        %v1617 = vadd.f32 %v1489, 1e-05
        %v1618 = vadd.f32 %v1490, 1e-05
        %v1619 = vadd.f32 %v1491, 1e-05
        %v1620 = vadd.f32 %v1492, 1e-05
        %v1621 = vadd.f32 %v1493, 1e-05
        %v1622 = vadd.f32 %v1494, 1e-05
        %v1623 = vadd.f32 %v1495, 1e-05
        %v1624 = vadd.f32 %v1496, 1e-05
        %v1625 = vadd.f32 %v1497, 1e-05
        %v1626 = vadd.f32 %v1498, 1e-05
        %v1627 = vadd.f32 %v1499, 1e-05
        %v1628 = vadd.f32 %v1500, 1e-05
        %v1629 = vadd.f32 %v1501, 1e-05
        %v1630 = vadd.f32 %v1502, 1e-05
        %v1631 = vadd.f32 %v1503, 1e-05
        %v1632 = vadd.f32 %v1504, 1e-05
        %v1633 = vadd.f32 %v1505, 1e-05
        %v1634 = vadd.f32 %v1506, 1e-05
        %v1635 = vrsqrt.pop %v1571
        %v1636 = vrsqrt.pop %v1572
        %v1637 = vrsqrt.pop %v1573
        %v1638 = vrsqrt.pop %v1574
        %v1639 = vrsqrt.pop %v1575
        %v1640 = vrsqrt.pop %v1576
        %v1641 = vrsqrt.pop %v1577
        %v1642 = vrsqrt.pop %v1578
        %v1643 = vrsqrt.pop %v1579
        %v1644 = vrsqrt.pop %v1580
        %v1645 = vrsqrt.pop %v1581
        %v1646 = vrsqrt.pop %v1582
        %v1647 = vrsqrt.pop %v1583
        %v1648 = vrsqrt.pop %v1584
        %v1649 = vrsqrt.pop %v1585
        %v1650 = vrsqrt.pop %v1586
        %v1651 = vrsqrt.pop %v1587
        %v1652 = vrsqrt.pop %v1588
        %v1653 = vrsqrt.pop %v1589
        %v1654 = vrsqrt.pop %v1590
        %v1655 = vrsqrt.pop %v1591
        %v1656 = vrsqrt.pop %v1592
        %v1657 = vrsqrt.pop %v1593
        %v1658 = vrsqrt.pop %v1594
        %v1659 = vrsqrt.pop %v1595
        %v1660 = vrsqrt.pop %v1596
        %v1661 = vrsqrt.pop %v1597
        %v1662 = vrsqrt.pop %v1598
        %v1663 = vrsqrt.pop %v1599
        %v1664 = vrsqrt.pop %v1600
        %v1665 = vrsqrt.pop %v1601
        %v1666 = vrsqrt.pop %v1602
        %v1667 = vrsqrt.pop %v1603
        %v1668 = vrsqrt.pop %v1604
        %v1669 = vrsqrt.pop %v1605
        %v1670 = vrsqrt.pop %v1606
        %v1671 = vrsqrt.pop %v1607
        %v1672 = vrsqrt.pop %v1608
        %v1673 = vrsqrt.pop %v1609
        %v1674 = vrsqrt.pop %v1610
        %v1675 = vrsqrt.pop %v1611
        %v1676 = vrsqrt.pop %v1612
        %v1677 = vrsqrt.pop %v1613
        %v1678 = vrsqrt.pop %v1614
        %v1679 = vrsqrt.pop %v1615
        %v1680 = vrsqrt.pop %v1616
        %v1681 = vrsqrt.pop %v1617
        %v1682 = vrsqrt.pop %v1618
        %v1683 = vrsqrt.pop %v1619
        %v1684 = vrsqrt.pop %v1620
        %v1685 = vrsqrt.pop %v1621
        %v1686 = vrsqrt.pop %v1622
        %v1687 = vrsqrt.pop %v1623
        %v1688 = vrsqrt.pop %v1624
        %v1689 = vrsqrt.pop %v1625
        %v1690 = vrsqrt.pop %v1626
        %v1691 = vrsqrt.pop %v1627
        %v1692 = vrsqrt.pop %v1628
        %v1693 = vrsqrt.pop %v1629
        %v1694 = vrsqrt.pop %v1630
        %v1695 = vrsqrt.pop %v1631
        %v1696 = vrsqrt.pop %v1632
        %v1697 = vrsqrt.pop %v1633
        %v1698 = vrsqrt.pop %v1634
        %v1699 = vmul.f32 %v1507, %v1635
        %v1700 = vmul.f32 %v1508, %v1636
        %v1701 = vmul.f32 %v1509, %v1637
        %v1702 = vmul.f32 %v1510, %v1638
        %v1703 = vmul.f32 %v1511, %v1639
        %v1704 = vmul.f32 %v1512, %v1640
        %v1705 = vmul.f32 %v1513, %v1641
        %v1706 = vmul.f32 %v1514, %v1642
        %v1707 = vmul.f32 %v1515, %v1643
        %v1708 = vmul.f32 %v1516, %v1644
        %v1709 = vmul.f32 %v1517, %v1645
        %v1710 = vmul.f32 %v1518, %v1646
        %v1711 = vmul.f32 %v1519, %v1647
        %v1712 = vmul.f32 %v1520, %v1648
        %v1713 = vmul.f32 %v1521, %v1649
        %v1714 = vmul.f32 %v1522, %v1650
        %v1715 = vmul.f32 %v1523, %v1651
        %v1716 = vmul.f32 %v1524, %v1652
        %v1717 = vmul.f32 %v1525, %v1653
        %v1718 = vmul.f32 %v1526, %v1654
        %v1719 = vmul.f32 %v1527, %v1655
        %v1720 = vmul.f32 %v1528, %v1656
        %v1721 = vmul.f32 %v1529, %v1657
        %v1722 = vmul.f32 %v1530, %v1658
        %v1723 = vmul.f32 %v1531, %v1659
        %v1724 = vmul.f32 %v1532, %v1660
        %v1725 = vmul.f32 %v1533, %v1661
        %v1726 = vmul.f32 %v1534, %v1662
        %v1727 = vmul.f32 %v1535, %v1663
        %v1728 = vmul.f32 %v1536, %v1664
        %v1729 = vmul.f32 %v1537, %v1665
        %v1730 = vmul.f32 %v1538, %v1666
        %v1731 = vmul.f32 %v1539, %v1667
        %v1732 = vmul.f32 %v1540, %v1668
        %v1733 = vmul.f32 %v1541, %v1669
        %v1734 = vmul.f32 %v1542, %v1670
        %v1735 = vmul.f32 %v1543, %v1671
        %v1736 = vmul.f32 %v1544, %v1672
        %v1737 = vmul.f32 %v1545, %v1673
        %v1738 = vmul.f32 %v1546, %v1674
        %v1739 = vmul.f32 %v1547, %v1675
        %v1740 = vmul.f32 %v1548, %v1676
        %v1741 = vmul.f32 %v1549, %v1677
        %v1742 = vmul.f32 %v1550, %v1678
        %v1743 = vmul.f32 %v1551, %v1679
        %v1744 = vmul.f32 %v1552, %v1680
        %v1745 = vmul.f32 %v1553, %v1681
        %v1746 = vmul.f32 %v1554, %v1682
        %v1747 = vmul.f32 %v1555, %v1683
        %v1748 = vmul.f32 %v1556, %v1684
        %v1749 = vmul.f32 %v1557, %v1685
        %v1750 = vmul.f32 %v1558, %v1686
        %v1751 = vmul.f32 %v1559, %v1687
        %v1752 = vmul.f32 %v1560, %v1688
        %v1753 = vmul.f32 %v1561, %v1689
        %v1754 = vmul.f32 %v1562, %v1690
        %v1755 = vmul.f32 %v1563, %v1691
        %v1756 = vmul.f32 %v1564, %v1692
        %v1757 = vmul.f32 %v1565, %v1693
        %v1758 = vmul.f32 %v1566, %v1694
        %v1759 = vmul.f32 %v1567, %v1695
        %v1760 = vmul.f32 %v1568, %v1696
        %v1761 = vmul.f32 %v1569, %v1697
        %v1762 = vmul.f32 %v1570, %v1698
        %v1763 = vmax.f32 %v1699, 0.0
        %v1764 = vmax.f32 %v1700, 0.0
        %v1765 = vmax.f32 %v1701, 0.0
        %v1766 = vmax.f32 %v1702, 0.0
        %v1767 = vmax.f32 %v1703, 0.0
        %v1768 = vmax.f32 %v1704, 0.0
        %v1769 = vmax.f32 %v1705, 0.0
        %v1770 = vmax.f32 %v1706, 0.0
        %v1771 = vmax.f32 %v1707, 0.0
        %v1772 = vmax.f32 %v1708, 0.0
        %v1773 = vmax.f32 %v1709, 0.0
        %v1774 = vmax.f32 %v1710, 0.0
        %v1775 = vmax.f32 %v1711, 0.0
        %v1776 = vmax.f32 %v1712, 0.0
        %v1777 = vmax.f32 %v1713, 0.0
        %v1778 = vmax.f32 %v1714, 0.0
        %v1779 = vmax.f32 %v1715, 0.0
        %v1780 = vmax.f32 %v1716, 0.0
        %v1781 = vmax.f32 %v1717, 0.0
        %v1782 = vmax.f32 %v1718, 0.0
        %v1783 = vmax.f32 %v1719, 0.0
        %v1784 = vmax.f32 %v1720, 0.0
        %v1785 = vmax.f32 %v1721, 0.0
        %v1786 = vmax.f32 %v1722, 0.0
        %v1787 = vmax.f32 %v1723, 0.0
        %v1788 = vmax.f32 %v1724, 0.0
        %v1789 = vmax.f32 %v1725, 0.0
        %v1790 = vmax.f32 %v1726, 0.0
        %v1791 = vmax.f32 %v1727, 0.0
        %v1792 = vmax.f32 %v1728, 0.0
        %v1793 = vmax.f32 %v1729, 0.0
        %v1794 = vmax.f32 %v1730, 0.0
        %v1795 = vmax.f32 %v1731, 0.0
        %v1796 = vmax.f32 %v1732, 0.0
        %v1797 = vmax.f32 %v1733, 0.0
        %v1798 = vmax.f32 %v1734, 0.0
        %v1799 = vmax.f32 %v1735, 0.0
        %v1800 = vmax.f32 %v1736, 0.0
        %v1801 = vmax.f32 %v1737, 0.0
        %v1802 = vmax.f32 %v1738, 0.0
        %v1803 = vmax.f32 %v1739, 0.0
        %v1804 = vmax.f32 %v1740, 0.0
        %v1805 = vmax.f32 %v1741, 0.0
        %v1806 = vmax.f32 %v1742, 0.0
        %v1807 = vmax.f32 %v1743, 0.0
        %v1808 = vmax.f32 %v1744, 0.0
        %v1809 = vmax.f32 %v1745, 0.0
        %v1810 = vmax.f32 %v1746, 0.0
        %v1811 = vmax.f32 %v1747, 0.0
        %v1812 = vmax.f32 %v1748, 0.0
        %v1813 = vmax.f32 %v1749, 0.0
        %v1814 = vmax.f32 %v1750, 0.0
        %v1815 = vmax.f32 %v1751, 0.0
        %v1816 = vmax.f32 %v1752, 0.0
        %v1817 = vmax.f32 %v1753, 0.0
        %v1818 = vmax.f32 %v1754, 0.0
        %v1819 = vmax.f32 %v1755, 0.0
        %v1820 = vmax.f32 %v1756, 0.0
        %v1821 = vmax.f32 %v1757, 0.0
        %v1822 = vmax.f32 %v1758, 0.0
        %v1823 = vmax.f32 %v1759, 0.0
        %v1824 = vmax.f32 %v1760, 0.0
        %v1825 = vmax.f32 %v1761, 0.0
        %v1826 = vmax.f32 %v1762, 0.0
        %1827 = vmatprep.subr.mxu0 0.0
        %1828 = vmatpush1.msra.mxu0 %v1763
        %1829 = vmatprep.subr.mxu0 0.0
        %1830 = vmatpush1.msra.mxu0 %v1764
        %1831 = vmatprep.subr.mxu0 0.0
        %1832 = vmatpush1.msra.mxu0 %v1765
        %1833 = vmatprep.subr.mxu0 0.0
        %1834 = vmatpush1.msra.mxu0 %v1766
        %1835 = vmatprep.subr.mxu0 0.0
        %1836 = vmatpush1.msra.mxu0 %v1767
        %1837 = vmatprep.subr.mxu0 0.0
        %1838 = vmatpush1.msra.mxu0 %v1768
        %1839 = vmatprep.subr.mxu0 0.0
        %1840 = vmatpush1.msra.mxu0 %v1769
        %1841 = vmatprep.subr.mxu0 0.0
        %1842 = vmatpush1.msra.mxu0 %v1770
        %1843 = vmatprep.subr.mxu0 0.0
        %1844 = vmatpush1.msra.mxu0 %v1771
        %1845 = vmatprep.subr.mxu0 0.0
        %1846 = vmatpush1.msra.mxu0 %v1772
        %1847 = vmatprep.subr.mxu0 0.0
        %1848 = vmatpush1.msra.mxu0 %v1773
        %1849 = vmatprep.subr.mxu0 0.0
        %1850 = vmatpush1.msra.mxu0 %v1774
        %1851 = vmatprep.subr.mxu0 0.0
        %1852 = vmatpush1.msra.mxu0 %v1775
        %1853 = vmatprep.subr.mxu0 0.0
        %1854 = vmatpush1.msra.mxu0 %v1776
        %1855 = vmatprep.subr.mxu0 0.0
        %1856 = vmatpush1.msra.mxu0 %v1777
        %1857 = vmatprep.subr.mxu0 0.0
        %1858 = vmatpush1.msra.mxu0 %v1778
        %1859 = vmatprep.subr.mxu0 0.0
        %1860 = vmatpush1.msra.mxu0 %v1779
        %1861 = vmatprep.subr.mxu0 0.0
        %1862 = vmatpush1.msra.mxu0 %v1780
        %1863 = vmatprep.subr.mxu0 0.0
        %1864 = vmatpush1.msra.mxu0 %v1781
        %1865 = vmatprep.subr.mxu0 0.0
        %1866 = vmatpush1.msra.mxu0 %v1782
        %1867 = vmatprep.subr.mxu0 0.0
        %1868 = vmatpush1.msra.mxu0 %v1783
        %1869 = vmatprep.subr.mxu0 0.0
        %1870 = vmatpush1.msra.mxu0 %v1784
        %1871 = vmatprep.subr.mxu0 0.0
        %1872 = vmatpush1.msra.mxu0 %v1785
        %1873 = vmatprep.subr.mxu0 0.0
        %1874 = vmatpush1.msra.mxu0 %v1786
        %1875 = vmatprep.subr.mxu0 0.0
        %1876 = vmatpush1.msra.mxu0 %v1787
        %1877 = vmatprep.subr.mxu0 0.0
        %1878 = vmatpush1.msra.mxu0 %v1788
        %1879 = vmatprep.subr.mxu0 0.0
        %1880 = vmatpush1.msra.mxu0 %v1789
        %1881 = vmatprep.subr.mxu0 0.0
        %1882 = vmatpush1.msra.mxu0 %v1790
        %1883 = vmatprep.subr.mxu0 0.0
        %1884 = vmatpush1.msra.mxu0 %v1791
        %1885 = vmatprep.subr.mxu0 0.0
        %1886 = vmatpush1.msra.mxu0 %v1792
        %1887 = vmatprep.subr.mxu0 0.0
        %1888 = vmatpush1.msra.mxu0 %v1793
        %1889 = vmatprep.subr.mxu0 0.0
        %1890 = vmatpush1.msra.mxu0 %v1794
        %1891 = vmatprep.mubr.f32.mxu0 %v221
        %1892 = vmatmul.mubr.f32.gmra.mrb[0].mxu0 %v220
        %v1893 = vpop.f32.mrb[0].mxu0
        %v1894 = vadd.f32 0.0, %v1893
        %v1895 = vpop.f32.mrb[0].mxu0
        %1896 = vdwg.mxu0
        %1897 = vmatprep.subr.mxu0 0.0
        %1898 = vmatpush1.msra.mxu0 %v1795
        %1899 = vmatprep.subr.mxu0 0.0
        %1900 = vmatpush1.msra.mxu0 %v1796
        %1901 = vmatprep.subr.mxu0 0.0
        %1902 = vmatpush1.msra.mxu0 %v1797
        %1903 = vmatprep.subr.mxu0 0.0
        %1904 = vmatpush1.msra.mxu0 %v1798
        %1905 = vmatprep.subr.mxu0 0.0
        %1906 = vmatpush1.msra.mxu0 %v1799
        %1907 = vmatprep.subr.mxu0 0.0
        %1908 = vmatpush1.msra.mxu0 %v1800
        %1909 = vmatprep.subr.mxu0 0.0
        %1910 = vmatpush1.msra.mxu0 %v1801
        %1911 = vmatprep.subr.mxu0 0.0
        %1912 = vmatpush1.msra.mxu0 %v1802
        %1913 = vmatprep.subr.mxu0 0.0
        %1914 = vmatpush1.msra.mxu0 %v1803
        %1915 = vmatprep.subr.mxu0 0.0
        %1916 = vmatpush1.msra.mxu0 %v1804
        %1917 = vmatprep.subr.mxu0 0.0
        %1918 = vmatpush1.msra.mxu0 %v1805
        %1919 = vmatprep.subr.mxu0 0.0
        %1920 = vmatpush1.msra.mxu0 %v1806
        %1921 = vmatprep.subr.mxu0 0.0
        %1922 = vmatpush1.msra.mxu0 %v1807
        %1923 = vmatprep.subr.mxu0 0.0
        %1924 = vmatpush1.msra.mxu0 %v1808
        %1925 = vmatprep.subr.mxu0 0.0
        %1926 = vmatpush1.msra.mxu0 %v1809
        %1927 = vmatprep.subr.mxu0 0.0
        %1928 = vmatpush1.msra.mxu0 %v1810
        %1929 = vmatprep.subr.mxu0 0.0
        %1930 = vmatpush1.msra.mxu0 %v1811
        %1931 = vmatprep.subr.mxu0 0.0
        %1932 = vmatpush1.msra.mxu0 %v1812
        %1933 = vmatprep.subr.mxu0 0.0
        %1934 = vmatpush1.msra.mxu0 %v1813
        %1935 = vmatprep.subr.mxu0 0.0
        %1936 = vmatpush1.msra.mxu0 %v1814
        %1937 = vmatprep.subr.mxu0 0.0
        %1938 = vmatpush1.msra.mxu0 %v1815
        %1939 = vmatprep.subr.mxu0 0.0
        %1940 = vmatpush1.msra.mxu0 %v1816
        %1941 = vmatprep.subr.mxu0 0.0
        %1942 = vmatpush1.msra.mxu0 %v1817
        %1943 = vmatprep.subr.mxu0 0.0
        %1944 = vmatpush1.msra.mxu0 %v1818
        %1945 = vmatprep.subr.mxu0 0.0
        %1946 = vmatpush1.msra.mxu0 %v1819
        %1947 = vmatprep.subr.mxu0 0.0
        %1948 = vmatpush1.msra.mxu0 %v1820
        %1949 = vmatprep.subr.mxu0 0.0
        %1950 = vmatpush1.msra.mxu0 %v1821
        %1951 = vmatprep.subr.mxu0 0.0
        %1952 = vmatpush1.msra.mxu0 %v1822
        %1953 = vmatprep.subr.mxu0 0.0
        %1954 = vmatpush1.msra.mxu0 %v1823
        %1955 = vmatprep.subr.mxu0 0.0
        %1956 = vmatpush1.msra.mxu0 %v1824
        %1957 = vmatprep.subr.mxu0 0.0
        %1958 = vmatpush1.msra.mxu0 %v1825
        %1959 = vmatprep.subr.mxu0 0.0
        %1960 = vmatpush1.msra.mxu0 %v1826
        %1961 = vmatprep.mubr.f32.mxu0 %v223
        %1962 = vmatmul.mubr.f32.gmra.mrb[0].mxu0 %v222
        %v1963 = vpop.f32.mrb[0].mxu0
        %v1964 = vadd.f32 %v1894, %v1963
        %v1965 = vpop.f32.mrb[0].mxu0
        %1966 = vdwg.mxu0
        %1967 = vadd.xlane.f32.xlu0 %v1964
        %v1968 = vpop.xlane.xlu0 %1967
        %v1969 = vmul.f32 %v1964, %v1964
        %1970 = vadd.xlane.f32.xlu0 %v1969
        %v1971 = vpop.xlane.xlu0 %1970
        %v1972 = vmul.f32 %v1968, 0.0078125
        %v1973 = vmul.f32 %v1971, 0.0078125
        %v1974 = vmul.f32 %v1972, %v1972
        %v1975 = vsub.f32 %v1973, %v1974
        %v1976 = vsub.f32 %v1964, %v1972
        %v1977 = vadd.f32 %v1975, 1e-05
        %v1978 = vrsqrt.pop %v1977
        %v1979 = vmul.f32 %v1976, %v1978
        %v1980 = vadd.f32 %v1979, %v224
        %1981 = vst [vmem:[%s213] sm:$0xff] %v1980
        %s1982 = scalar_lea.vmem %s183, 8 [#allocation2]
        %v1983 = vld [vmem:[%s1982] sm:$0xff]
        %1984 = vmatprep.subr.mxu0 0.0
        %1985 = vmatpush1.msra.mxu0 %v1983
        %1986 = vmatprep.subr.mxu0 0.0
        %1987 = vmatpush1.msra.mxu0 0.0
        %1988 = vmatprep.subr.mxu0 0.0
        %1989 = vmatpush1.msra.mxu0 0.0
        %1990 = vmatprep.subr.mxu0 0.0
        %1991 = vmatpush1.msra.mxu0 0.0
        %1992 = vmatprep.subr.mxu0 0.0
        %1993 = vmatpush1.msra.mxu0 0.0
        %1994 = vmatprep.subr.mxu0 0.0
        %1995 = vmatpush1.msra.mxu0 0.0
        %1996 = vmatprep.subr.mxu0 0.0
        %1997 = vmatpush1.msra.mxu0 0.0
        %1998 = vmatprep.subr.mxu0 0.0
        %1999 = vmatpush1.msra.mxu0 0.0
        %2000 = vmatprep.subr.mxu0 0.0
        %2001 = vmatpush1.msra.mxu0 0.0
        %2002 = vmatprep.subr.mxu0 0.0
        %2003 = vmatpush1.msra.mxu0 0.0
        %2004 = vmatprep.subr.mxu0 0.0
        %2005 = vmatpush1.msra.mxu0 0.0
        %2006 = vmatprep.subr.mxu0 0.0
        %2007 = vmatpush1.msra.mxu0 0.0
        %2008 = vmatprep.subr.mxu0 0.0
        %2009 = vmatpush1.msra.mxu0 0.0
        %2010 = vmatprep.subr.mxu0 0.0
        %2011 = vmatpush1.msra.mxu0 0.0
        %2012 = vmatprep.subr.mxu0 0.0
        %2013 = vmatpush1.msra.mxu0 0.0
        %2014 = vmatprep.subr.mxu0 0.0
        %2015 = vmatpush1.msra.mxu0 0.0
        %2016 = vmatprep.subr.mxu0 0.0
        %2017 = vmatpush1.msra.mxu0 0.0
        %2018 = vmatprep.subr.mxu0 0.0
        %2019 = vmatpush1.msra.mxu0 0.0
        %2020 = vmatprep.subr.mxu0 0.0
        %2021 = vmatpush1.msra.mxu0 0.0
        %2022 = vmatprep.subr.mxu0 0.0
        %2023 = vmatpush1.msra.mxu0 0.0
        %2024 = vmatprep.subr.mxu0 0.0
        %2025 = vmatpush1.msra.mxu0 0.0
        %2026 = vmatprep.subr.mxu0 0.0
        %2027 = vmatpush1.msra.mxu0 0.0
        %2028 = vmatprep.subr.mxu0 0.0
        %2029 = vmatpush1.msra.mxu0 0.0
        %2030 = vmatprep.subr.mxu0 0.0
        %2031 = vmatpush1.msra.mxu0 0.0
        %2032 = vmatprep.subr.mxu0 0.0
        %2033 = vmatpush1.msra.mxu0 0.0
        %2034 = vmatprep.subr.mxu0 0.0
        %2035 = vmatpush1.msra.mxu0 0.0
        %2036 = vmatprep.subr.mxu0 0.0
        %2037 = vmatpush1.msra.mxu0 0.0
        %2038 = vmatprep.subr.mxu0 0.0
        %2039 = vmatpush1.msra.mxu0 0.0
        %2040 = vmatprep.subr.mxu0 0.0
        %2041 = vmatpush1.msra.mxu0 0.0
        %2042 = vmatprep.subr.mxu0 0.0
        %2043 = vmatpush1.msra.mxu0 0.0
        %2044 = vmatprep.subr.mxu0 0.0
        %2045 = vmatpush1.msra.mxu0 0.0
        %2046 = vmatprep.subr.mxu0 0.0
        %2047 = vmatpush1.msra.mxu0 0.0
        %2048 = vmatprep.mubr.f32.mxu0 0.0
        %2049 = vmatmul.mubr.f32.gmra.mrb[0].mxu0 %v355
        %v2050 = vpop.f32.mrb[0].mxu0
        %v2051 = vadd.f32 0.0, %v2050
        %v2052 = vpop.f32.mrb[0].mxu0
        %2053 = vmatprep.mubr.f32.mxu0 0.0
        %2054 = vmatmul.mubr.f32.gmra.mrb[0].mxu0 %v358
        %v2055 = vpop.f32.mrb[0].mxu0
        %v2056 = vadd.f32 0.0, %v2055
        %v2057 = vpop.f32.mrb[0].mxu0
        %2058 = vmatprep.mubr.f32.mxu0 0.0
        %2059 = vmatmul.mubr.f32.gmra.mrb[0].mxu0 %v361
        %v2060 = vpop.f32.mrb[0].mxu0
        %v2061 = vadd.f32 0.0, %v2060
        %v2062 = vpop.f32.mrb[0].mxu0
        %2063 = vmatprep.mubr.f32.mxu0 0.0
        %2064 = vmatmul.mubr.f32.gmra.mrb[0].mxu0 %v364
        %v2065 = vpop.f32.mrb[0].mxu0
        %v2066 = vadd.f32 0.0, %v2065
        %v2067 = vpop.f32.mrb[0].mxu0
        %2068 = vmatprep.mubr.f32.mxu0 0.0
        %2069 = vmatmul.mubr.f32.gmra.mrb[0].mxu0 %v367
        %v2070 = vpop.f32.mrb[0].mxu0
        %v2071 = vadd.f32 0.0, %v2070
        %v2072 = vpop.f32.mrb[0].mxu0
        %2073 = vmatprep.mubr.f32.mxu0 0.0
        %2074 = vmatmul.mubr.f32.gmra.mrb[0].mxu0 %v370
        %v2075 = vpop.f32.mrb[0].mxu0
        %v2076 = vadd.f32 0.0, %v2075
        %v2077 = vpop.f32.mrb[0].mxu0
        %2078 = vmatprep.mubr.f32.mxu0 0.0
        %2079 = vmatmul.mubr.f32.gmra.mrb[0].mxu0 %v373
        %v2080 = vpop.f32.mrb[0].mxu0
        %v2081 = vadd.f32 0.0, %v2080
        %v2082 = vpop.f32.mrb[0].mxu0
        %2083 = vmatprep.mubr.f32.mxu0 0.0
        %2084 = vmatmul.mubr.f32.gmra.mrb[0].mxu0 %v376
        %v2085 = vpop.f32.mrb[0].mxu0
        %v2086 = vadd.f32 0.0, %v2085
        %v2087 = vpop.f32.mrb[0].mxu0
        %2088 = vmatprep.mubr.f32.mxu0 0.0
        %2089 = vmatmul.mubr.f32.gmra.mrb[0].mxu0 %v379
        %v2090 = vpop.f32.mrb[0].mxu0
        %v2091 = vadd.f32 0.0, %v2090
        %v2092 = vpop.f32.mrb[0].mxu0
        %2093 = vmatprep.mubr.f32.mxu0 0.0
        %2094 = vmatmul.mubr.f32.gmra.mrb[0].mxu0 %v382
        %v2095 = vpop.f32.mrb[0].mxu0
        %v2096 = vadd.f32 0.0, %v2095
        %v2097 = vpop.f32.mrb[0].mxu0
        %2098 = vmatprep.mubr.f32.mxu0 0.0
        %2099 = vmatmul.mubr.f32.gmra.mrb[0].mxu0 %v385
        %v2100 = vpop.f32.mrb[0].mxu0
        %v2101 = vadd.f32 0.0, %v2100
        %v2102 = vpop.f32.mrb[0].mxu0
        %2103 = vmatprep.mubr.f32.mxu0 0.0
        %2104 = vmatmul.mubr.f32.gmra.mrb[0].mxu0 %v388
        %v2105 = vpop.f32.mrb[0].mxu0
        %v2106 = vadd.f32 0.0, %v2105
        %v2107 = vpop.f32.mrb[0].mxu0
        %2108 = vmatprep.mubr.f32.mxu0 0.0
        %2109 = vmatmul.mubr.f32.gmra.mrb[0].mxu0 %v391
        %v2110 = vpop.f32.mrb[0].mxu0
        %v2111 = vadd.f32 0.0, %v2110
        %v2112 = vpop.f32.mrb[0].mxu0
        %2113 = vmatprep.mubr.f32.mxu0 0.0
        %2114 = vmatmul.mubr.f32.gmra.mrb[0].mxu0 %v394
        %v2115 = vpop.f32.mrb[0].mxu0
        %v2116 = vadd.f32 0.0, %v2115
        %v2117 = vpop.f32.mrb[0].mxu0
        %2118 = vmatprep.mubr.f32.mxu0 0.0
        %2119 = vmatmul.mubr.f32.gmra.mrb[0].mxu0 %v397
        %v2120 = vpop.f32.mrb[0].mxu0
        %v2121 = vadd.f32 0.0, %v2120
        %v2122 = vpop.f32.mrb[0].mxu0
        %2123 = vmatprep.mubr.f32.mxu0 0.0
        %2124 = vmatmul.mubr.f32.gmra.mrb[0].mxu0 %v400
        %v2125 = vpop.f32.mrb[0].mxu0
        %v2126 = vadd.f32 0.0, %v2125
        %v2127 = vpop.f32.mrb[0].mxu0
        %2128 = vmatprep.mubr.f32.mxu0 0.0
        %2129 = vmatmul.mubr.f32.gmra.mrb[0].mxu0 %v403
        %v2130 = vpop.f32.mrb[0].mxu0
        %v2131 = vadd.f32 0.0, %v2130
        %v2132 = vpop.f32.mrb[0].mxu0
        %2133 = vmatprep.mubr.f32.mxu0 0.0
        %2134 = vmatmul.mubr.f32.gmra.mrb[0].mxu0 %v406
        %v2135 = vpop.f32.mrb[0].mxu0
        %v2136 = vadd.f32 0.0, %v2135
        %v2137 = vpop.f32.mrb[0].mxu0
        %2138 = vmatprep.mubr.f32.mxu0 0.0
        %2139 = vmatmul.mubr.f32.gmra.mrb[0].mxu0 %v409
        %v2140 = vpop.f32.mrb[0].mxu0
        %v2141 = vadd.f32 0.0, %v2140
        %v2142 = vpop.f32.mrb[0].mxu0
        %2143 = vmatprep.mubr.f32.mxu0 0.0
        %2144 = vmatmul.mubr.f32.gmra.mrb[0].mxu0 %v412
        %v2145 = vpop.f32.mrb[0].mxu0
        %v2146 = vadd.f32 0.0, %v2145
        %v2147 = vpop.f32.mrb[0].mxu0
        %2148 = vmatprep.mubr.f32.mxu0 0.0
        %2149 = vmatmul.mubr.f32.gmra.mrb[0].mxu0 %v415
        %v2150 = vpop.f32.mrb[0].mxu0
        %v2151 = vadd.f32 0.0, %v2150
        %v2152 = vpop.f32.mrb[0].mxu0
        %2153 = vmatprep.mubr.f32.mxu0 0.0
        %2154 = vmatmul.mubr.f32.gmra.mrb[0].mxu0 %v418
        %v2155 = vpop.f32.mrb[0].mxu0
        %v2156 = vadd.f32 0.0, %v2155
        %v2157 = vpop.f32.mrb[0].mxu0
        %2158 = vmatprep.mubr.f32.mxu0 0.0
        %2159 = vmatmul.mubr.f32.gmra.mrb[0].mxu0 %v421
        %v2160 = vpop.f32.mrb[0].mxu0
        %v2161 = vadd.f32 0.0, %v2160
        %v2162 = vpop.f32.mrb[0].mxu0
        %2163 = vmatprep.mubr.f32.mxu0 0.0
        %2164 = vmatmul.mubr.f32.gmra.mrb[0].mxu0 %v424
        %v2165 = vpop.f32.mrb[0].mxu0
        %v2166 = vadd.f32 0.0, %v2165
        %v2167 = vpop.f32.mrb[0].mxu0
        %2168 = vmatprep.mubr.f32.mxu0 0.0
        %2169 = vmatmul.mubr.f32.gmra.mrb[0].mxu0 %v427
        %v2170 = vpop.f32.mrb[0].mxu0
        %v2171 = vadd.f32 0.0, %v2170
        %v2172 = vpop.f32.mrb[0].mxu0
        %2173 = vmatprep.mubr.f32.mxu0 0.0
        %2174 = vmatmul.mubr.f32.gmra.mrb[0].mxu0 %v430
        %v2175 = vpop.f32.mrb[0].mxu0
        %v2176 = vadd.f32 0.0, %v2175
        %v2177 = vpop.f32.mrb[0].mxu0
        %2178 = vmatprep.mubr.f32.mxu0 0.0
        %2179 = vmatmul.mubr.f32.gmra.mrb[0].mxu0 %v433
        %v2180 = vpop.f32.mrb[0].mxu0
        %v2181 = vadd.f32 0.0, %v2180
        %v2182 = vpop.f32.mrb[0].mxu0
        %2183 = vmatprep.mubr.f32.mxu0 0.0
        %2184 = vmatmul.mubr.f32.gmra.mrb[0].mxu0 %v436
        %v2185 = vpop.f32.mrb[0].mxu0
        %v2186 = vadd.f32 0.0, %v2185
        %v2187 = vpop.f32.mrb[0].mxu0
        %2188 = vmatprep.mubr.f32.mxu0 0.0
        %2189 = vmatmul.mubr.f32.gmra.mrb[0].mxu0 %v439
        %v2190 = vpop.f32.mrb[0].mxu0
        %v2191 = vadd.f32 0.0, %v2190
        %v2192 = vpop.f32.mrb[0].mxu0
        %2193 = vmatprep.mubr.f32.mxu0 0.0
        %2194 = vmatmul.mubr.f32.gmra.mrb[0].mxu0 %v442
        %v2195 = vpop.f32.mrb[0].mxu0
        %v2196 = vadd.f32 0.0, %v2195
        %v2197 = vpop.f32.mrb[0].mxu0
        %2198 = vmatprep.mubr.f32.mxu0 0.0
        %2199 = vmatmul.mubr.f32.gmra.mrb[0].mxu0 %v445
        %v2200 = vpop.f32.mrb[0].mxu0
        %v2201 = vadd.f32 0.0, %v2200
        %v2202 = vpop.f32.mrb[0].mxu0
        %2203 = vmatprep.mubr.f32.mxu0 0.0
        %2204 = vmatmul.mubr.f32.gmra.mrb[0].mxu0 %v448
        %v2205 = vpop.f32.mrb[0].mxu0
        %v2206 = vadd.f32 0.0, %v2205
        %v2207 = vpop.f32.mrb[0].mxu0
        %2208 = vmatprep.mubr.f32.mxu0 0.0
        %2209 = vmatmul.mubr.f32.gmra.mrb[0].mxu0 %v451
        %v2210 = vpop.f32.mrb[0].mxu0
        %v2211 = vadd.f32 0.0, %v2210
        %v2212 = vpop.f32.mrb[0].mxu0
        %2213 = vmatprep.mubr.f32.mxu0 0.0
        %2214 = vmatmul.mubr.f32.gmra.mrb[0].mxu0 %v454
        %v2215 = vpop.f32.mrb[0].mxu0
        %v2216 = vadd.f32 0.0, %v2215
        %v2217 = vpop.f32.mrb[0].mxu0
        %2218 = vmatprep.mubr.f32.mxu0 0.0
        %2219 = vmatmul.mubr.f32.gmra.mrb[0].mxu0 %v457
        %v2220 = vpop.f32.mrb[0].mxu0
        %v2221 = vadd.f32 0.0, %v2220
        %v2222 = vpop.f32.mrb[0].mxu0
        %2223 = vmatprep.mubr.f32.mxu0 0.0
        %2224 = vmatmul.mubr.f32.gmra.mrb[0].mxu0 %v460
        %v2225 = vpop.f32.mrb[0].mxu0
        %v2226 = vadd.f32 0.0, %v2225
        %v2227 = vpop.f32.mrb[0].mxu0
        %2228 = vmatprep.mubr.f32.mxu0 0.0
        %2229 = vmatmul.mubr.f32.gmra.mrb[0].mxu0 %v463
        %v2230 = vpop.f32.mrb[0].mxu0
        %v2231 = vadd.f32 0.0, %v2230
        %v2232 = vpop.f32.mrb[0].mxu0
        %2233 = vmatprep.mubr.f32.mxu0 0.0
        %2234 = vmatmul.mubr.f32.gmra.mrb[0].mxu0 %v466
        %v2235 = vpop.f32.mrb[0].mxu0
        %v2236 = vadd.f32 0.0, %v2235
        %v2237 = vpop.f32.mrb[0].mxu0
        %2238 = vmatprep.mubr.f32.mxu0 0.0
        %2239 = vmatmul.mubr.f32.gmra.mrb[0].mxu0 %v469
        %v2240 = vpop.f32.mrb[0].mxu0
        %v2241 = vadd.f32 0.0, %v2240
        %v2242 = vpop.f32.mrb[0].mxu0
        %2243 = vmatprep.mubr.f32.mxu0 0.0
        %2244 = vmatmul.mubr.f32.gmra.mrb[0].mxu0 %v472
        %v2245 = vpop.f32.mrb[0].mxu0
        %v2246 = vadd.f32 0.0, %v2245
        %v2247 = vpop.f32.mrb[0].mxu0
        %2248 = vmatprep.mubr.f32.mxu0 0.0
        %2249 = vmatmul.mubr.f32.gmra.mrb[0].mxu0 %v475
        %v2250 = vpop.f32.mrb[0].mxu0
        %v2251 = vadd.f32 0.0, %v2250
        %v2252 = vpop.f32.mrb[0].mxu0
        %2253 = vmatprep.mubr.f32.mxu0 0.0
        %2254 = vmatmul.mubr.f32.gmra.mrb[0].mxu0 %v478
        %v2255 = vpop.f32.mrb[0].mxu0
        %v2256 = vadd.f32 0.0, %v2255
        %v2257 = vpop.f32.mrb[0].mxu0
        %2258 = vmatprep.mubr.f32.mxu0 0.0
        %2259 = vmatmul.mubr.f32.gmra.mrb[0].mxu0 %v481
        %v2260 = vpop.f32.mrb[0].mxu0
        %v2261 = vadd.f32 0.0, %v2260
        %v2262 = vpop.f32.mrb[0].mxu0
        %2263 = vmatprep.mubr.f32.mxu0 0.0
        %2264 = vmatmul.mubr.f32.gmra.mrb[0].mxu0 %v484
        %v2265 = vpop.f32.mrb[0].mxu0
        %v2266 = vadd.f32 0.0, %v2265
        %v2267 = vpop.f32.mrb[0].mxu0
        %2268 = vmatprep.mubr.f32.mxu0 0.0
        %2269 = vmatmul.mubr.f32.gmra.mrb[0].mxu0 %v487
        %v2270 = vpop.f32.mrb[0].mxu0
        %v2271 = vadd.f32 0.0, %v2270
        %v2272 = vpop.f32.mrb[0].mxu0
        %2273 = vmatprep.mubr.f32.mxu0 0.0
        %2274 = vmatmul.mubr.f32.gmra.mrb[0].mxu0 %v490
        %v2275 = vpop.f32.mrb[0].mxu0
        %v2276 = vadd.f32 0.0, %v2275
        %v2277 = vpop.f32.mrb[0].mxu0
        %2278 = vmatprep.mubr.f32.mxu0 0.0
        %2279 = vmatmul.mubr.f32.gmra.mrb[0].mxu0 %v493
        %v2280 = vpop.f32.mrb[0].mxu0
        %v2281 = vadd.f32 0.0, %v2280
        %v2282 = vpop.f32.mrb[0].mxu0
        %2283 = vmatprep.mubr.f32.mxu0 0.0
        %2284 = vmatmul.mubr.f32.gmra.mrb[0].mxu0 %v496
        %v2285 = vpop.f32.mrb[0].mxu0
        %v2286 = vadd.f32 0.0, %v2285
        %v2287 = vpop.f32.mrb[0].mxu0
        %2288 = vmatprep.mubr.f32.mxu0 0.0
        %2289 = vmatmul.mubr.f32.gmra.mrb[0].mxu0 %v499
        %v2290 = vpop.f32.mrb[0].mxu0
        %v2291 = vadd.f32 0.0, %v2290
        %v2292 = vpop.f32.mrb[0].mxu0
        %2293 = vmatprep.mubr.f32.mxu0 0.0
        %2294 = vmatmul.mubr.f32.gmra.mrb[0].mxu0 %v502
        %v2295 = vpop.f32.mrb[0].mxu0
        %v2296 = vadd.f32 0.0, %v2295
        %v2297 = vpop.f32.mrb[0].mxu0
        %2298 = vmatprep.mubr.f32.mxu0 0.0
        %2299 = vmatmul.mubr.f32.gmra.mrb[0].mxu0 %v505
        %v2300 = vpop.f32.mrb[0].mxu0
        %v2301 = vadd.f32 0.0, %v2300
        %v2302 = vpop.f32.mrb[0].mxu0
        %2303 = vmatprep.mubr.f32.mxu0 0.0
        %2304 = vmatmul.mubr.f32.gmra.mrb[0].mxu0 %v508
        %v2305 = vpop.f32.mrb[0].mxu0
        %v2306 = vadd.f32 0.0, %v2305
        %v2307 = vpop.f32.mrb[0].mxu0
        %2308 = vmatprep.mubr.f32.mxu0 0.0
        %2309 = vmatmul.mubr.f32.gmra.mrb[0].mxu0 %v511
        %v2310 = vpop.f32.mrb[0].mxu0
        %v2311 = vadd.f32 0.0, %v2310
        %v2312 = vpop.f32.mrb[0].mxu0
        %2313 = vmatprep.mubr.f32.mxu0 0.0
        %2314 = vmatmul.mubr.f32.gmra.mrb[0].mxu0 %v514
        %v2315 = vpop.f32.mrb[0].mxu0
        %v2316 = vadd.f32 0.0, %v2315
        %v2317 = vpop.f32.mrb[0].mxu0
        %2318 = vmatprep.mubr.f32.mxu0 0.0
        %2319 = vmatmul.mubr.f32.gmra.mrb[0].mxu0 %v517
        %v2320 = vpop.f32.mrb[0].mxu0
        %v2321 = vadd.f32 0.0, %v2320
        %v2322 = vpop.f32.mrb[0].mxu0
        %2323 = vmatprep.mubr.f32.mxu0 0.0
        %2324 = vmatmul.mubr.f32.gmra.mrb[0].mxu0 %v520
        %v2325 = vpop.f32.mrb[0].mxu0
        %v2326 = vadd.f32 0.0, %v2325
        %v2327 = vpop.f32.mrb[0].mxu0
        %2328 = vmatprep.mubr.f32.mxu0 0.0
        %2329 = vmatmul.mubr.f32.gmra.mrb[0].mxu0 %v523
        %v2330 = vpop.f32.mrb[0].mxu0
        %v2331 = vadd.f32 0.0, %v2330
        %v2332 = vpop.f32.mrb[0].mxu0
        %2333 = vmatprep.mubr.f32.mxu0 0.0
        %2334 = vmatmul.mubr.f32.gmra.mrb[0].mxu0 %v526
        %v2335 = vpop.f32.mrb[0].mxu0
        %v2336 = vadd.f32 0.0, %v2335
        %v2337 = vpop.f32.mrb[0].mxu0
        %2338 = vmatprep.mubr.f32.mxu0 0.0
        %2339 = vmatmul.mubr.f32.gmra.mrb[0].mxu0 %v529
        %v2340 = vpop.f32.mrb[0].mxu0
        %v2341 = vadd.f32 0.0, %v2340
        %v2342 = vpop.f32.mrb[0].mxu0
        %2343 = vmatprep.mubr.f32.mxu0 0.0
        %2344 = vmatmul.mubr.f32.gmra.mrb[0].mxu0 %v532
        %v2345 = vpop.f32.mrb[0].mxu0
        %v2346 = vadd.f32 0.0, %v2345
        %v2347 = vpop.f32.mrb[0].mxu0
        %2348 = vmatprep.mubr.f32.mxu0 0.0
        %2349 = vmatmul.mubr.f32.gmra.mrb[0].mxu0 %v535
        %v2350 = vpop.f32.mrb[0].mxu0
        %v2351 = vadd.f32 0.0, %v2350
        %v2352 = vpop.f32.mrb[0].mxu0
        %2353 = vmatprep.mubr.f32.mxu0 0.0
        %2354 = vmatmul.mubr.f32.gmra.mrb[0].mxu0 %v538
        %v2355 = vpop.f32.mrb[0].mxu0
        %v2356 = vadd.f32 0.0, %v2355
        %v2357 = vpop.f32.mrb[0].mxu0
        %2358 = vmatprep.mubr.f32.mxu0 0.0
        %2359 = vmatmul.mubr.f32.gmra.mrb[0].mxu0 %v541
        %v2360 = vpop.f32.mrb[0].mxu0
        %v2361 = vadd.f32 0.0, %v2360
        %v2362 = vpop.f32.mrb[0].mxu0
        %2363 = vmatprep.mubr.f32.mxu0 0.0
        %2364 = vmatmul.mubr.f32.gmra.mrb[0].mxu0 %v544
        %v2365 = vpop.f32.mrb[0].mxu0
        %v2366 = vadd.f32 0.0, %v2365
        %v2367 = vpop.f32.mrb[0].mxu0
        %2368 = vdwg.mxu0
        %2369 = vadd.xlane.f32.xlu0 %v2051
        %v2370 = vpop.xlane.xlu0 %2369
        %2371 = vadd.xlane.f32.xlu0 %v2056
        %v2372 = vpop.xlane.xlu0 %2371
        %2373 = vadd.xlane.f32.xlu0 %v2061
        %v2374 = vpop.xlane.xlu0 %2373
        %2375 = vadd.xlane.f32.xlu0 %v2066
        %v2376 = vpop.xlane.xlu0 %2375
        %2377 = vadd.xlane.f32.xlu0 %v2071
        %v2378 = vpop.xlane.xlu0 %2377
        %2379 = vadd.xlane.f32.xlu0 %v2076
        %v2380 = vpop.xlane.xlu0 %2379
        %2381 = vadd.xlane.f32.xlu0 %v2081
        %v2382 = vpop.xlane.xlu0 %2381
        %2383 = vadd.xlane.f32.xlu0 %v2086
        %v2384 = vpop.xlane.xlu0 %2383
        %2385 = vadd.xlane.f32.xlu0 %v2091
        %v2386 = vpop.xlane.xlu0 %2385
        %2387 = vadd.xlane.f32.xlu0 %v2096
        %v2388 = vpop.xlane.xlu0 %2387
        %2389 = vadd.xlane.f32.xlu0 %v2101
        %v2390 = vpop.xlane.xlu0 %2389
        %2391 = vadd.xlane.f32.xlu0 %v2106
        %v2392 = vpop.xlane.xlu0 %2391
        %2393 = vadd.xlane.f32.xlu0 %v2111
        %v2394 = vpop.xlane.xlu0 %2393
        %2395 = vadd.xlane.f32.xlu0 %v2116
        %v2396 = vpop.xlane.xlu0 %2395
        %2397 = vadd.xlane.f32.xlu0 %v2121
        %v2398 = vpop.xlane.xlu0 %2397
        %2399 = vadd.xlane.f32.xlu0 %v2126
        %v2400 = vpop.xlane.xlu0 %2399
        %2401 = vadd.xlane.f32.xlu0 %v2131
        %v2402 = vpop.xlane.xlu0 %2401
        %2403 = vadd.xlane.f32.xlu0 %v2136
        %v2404 = vpop.xlane.xlu0 %2403
        %2405 = vadd.xlane.f32.xlu0 %v2141
        %v2406 = vpop.xlane.xlu0 %2405
        %2407 = vadd.xlane.f32.xlu0 %v2146
        %v2408 = vpop.xlane.xlu0 %2407
        %2409 = vadd.xlane.f32.xlu0 %v2151
        %v2410 = vpop.xlane.xlu0 %2409
        %2411 = vadd.xlane.f32.xlu0 %v2156
        %v2412 = vpop.xlane.xlu0 %2411
        %2413 = vadd.xlane.f32.xlu0 %v2161
        %v2414 = vpop.xlane.xlu0 %2413
        %2415 = vadd.xlane.f32.xlu0 %v2166
        %v2416 = vpop.xlane.xlu0 %2415
        %2417 = vadd.xlane.f32.xlu0 %v2171
        %v2418 = vpop.xlane.xlu0 %2417
        %2419 = vadd.xlane.f32.xlu0 %v2176
        %v2420 = vpop.xlane.xlu0 %2419
        %2421 = vadd.xlane.f32.xlu0 %v2181
        %v2422 = vpop.xlane.xlu0 %2421
        %2423 = vadd.xlane.f32.xlu0 %v2186
        %v2424 = vpop.xlane.xlu0 %2423
        %2425 = vadd.xlane.f32.xlu0 %v2191
        %v2426 = vpop.xlane.xlu0 %2425
        %2427 = vadd.xlane.f32.xlu0 %v2196
        %v2428 = vpop.xlane.xlu0 %2427
        %2429 = vadd.xlane.f32.xlu0 %v2201
        %v2430 = vpop.xlane.xlu0 %2429
        %2431 = vadd.xlane.f32.xlu0 %v2206
        %v2432 = vpop.xlane.xlu0 %2431
        %2433 = vadd.xlane.f32.xlu0 %v2211
        %v2434 = vpop.xlane.xlu0 %2433
        %2435 = vadd.xlane.f32.xlu0 %v2216
        %v2436 = vpop.xlane.xlu0 %2435
        %2437 = vadd.xlane.f32.xlu0 %v2221
        %v2438 = vpop.xlane.xlu0 %2437
        %2439 = vadd.xlane.f32.xlu0 %v2226
        %v2440 = vpop.xlane.xlu0 %2439
        %2441 = vadd.xlane.f32.xlu0 %v2231
        %v2442 = vpop.xlane.xlu0 %2441
        %2443 = vadd.xlane.f32.xlu0 %v2236
        %v2444 = vpop.xlane.xlu0 %2443
        %2445 = vadd.xlane.f32.xlu0 %v2241
        %v2446 = vpop.xlane.xlu0 %2445
        %2447 = vadd.xlane.f32.xlu0 %v2246
        %v2448 = vpop.xlane.xlu0 %2447
        %2449 = vadd.xlane.f32.xlu0 %v2251
        %v2450 = vpop.xlane.xlu0 %2449
        %2451 = vadd.xlane.f32.xlu0 %v2256
        %v2452 = vpop.xlane.xlu0 %2451
        %2453 = vadd.xlane.f32.xlu0 %v2261
        %v2454 = vpop.xlane.xlu0 %2453
        %2455 = vadd.xlane.f32.xlu0 %v2266
        %v2456 = vpop.xlane.xlu0 %2455
        %2457 = vadd.xlane.f32.xlu0 %v2271
        %v2458 = vpop.xlane.xlu0 %2457
        %2459 = vadd.xlane.f32.xlu0 %v2276
        %v2460 = vpop.xlane.xlu0 %2459
        %2461 = vadd.xlane.f32.xlu0 %v2281
        %v2462 = vpop.xlane.xlu0 %2461
        %2463 = vadd.xlane.f32.xlu0 %v2286
        %v2464 = vpop.xlane.xlu0 %2463
        %2465 = vadd.xlane.f32.xlu0 %v2291
        %v2466 = vpop.xlane.xlu0 %2465
        %2467 = vadd.xlane.f32.xlu0 %v2296
        %v2468 = vpop.xlane.xlu0 %2467
        %2469 = vadd.xlane.f32.xlu0 %v2301
        %v2470 = vpop.xlane.xlu0 %2469
        %2471 = vadd.xlane.f32.xlu0 %v2306
        %v2472 = vpop.xlane.xlu0 %2471
        %2473 = vadd.xlane.f32.xlu0 %v2311
        %v2474 = vpop.xlane.xlu0 %2473
        %2475 = vadd.xlane.f32.xlu0 %v2316
        %v2476 = vpop.xlane.xlu0 %2475
        %2477 = vadd.xlane.f32.xlu0 %v2321
        %v2478 = vpop.xlane.xlu0 %2477
        %2479 = vadd.xlane.f32.xlu0 %v2326
        %v2480 = vpop.xlane.xlu0 %2479
        %2481 = vadd.xlane.f32.xlu0 %v2331
        %v2482 = vpop.xlane.xlu0 %2481
        %2483 = vadd.xlane.f32.xlu0 %v2336
        %v2484 = vpop.xlane.xlu0 %2483
        %2485 = vadd.xlane.f32.xlu0 %v2341
        %v2486 = vpop.xlane.xlu0 %2485
        %2487 = vadd.xlane.f32.xlu0 %v2346
        %v2488 = vpop.xlane.xlu0 %2487
        %2489 = vadd.xlane.f32.xlu0 %v2351
        %v2490 = vpop.xlane.xlu0 %2489
        %2491 = vadd.xlane.f32.xlu0 %v2356
        %v2492 = vpop.xlane.xlu0 %2491
        %2493 = vadd.xlane.f32.xlu0 %v2361
        %v2494 = vpop.xlane.xlu0 %2493
        %2495 = vadd.xlane.f32.xlu0 %v2366
        %v2496 = vpop.xlane.xlu0 %2495
        %v2497 = vmul.f32 %v2051, %v2051
        %v2498 = vmul.f32 %v2056, %v2056
        %v2499 = vmul.f32 %v2061, %v2061
        %v2500 = vmul.f32 %v2066, %v2066
        %v2501 = vmul.f32 %v2071, %v2071
        %v2502 = vmul.f32 %v2076, %v2076
        %v2503 = vmul.f32 %v2081, %v2081
        %v2504 = vmul.f32 %v2086, %v2086
        %v2505 = vmul.f32 %v2091, %v2091
        %v2506 = vmul.f32 %v2096, %v2096
        %v2507 = vmul.f32 %v2101, %v2101
        %v2508 = vmul.f32 %v2106, %v2106
        %v2509 = vmul.f32 %v2111, %v2111
        %v2510 = vmul.f32 %v2116, %v2116
        %v2511 = vmul.f32 %v2121, %v2121
        %v2512 = vmul.f32 %v2126, %v2126
        %v2513 = vmul.f32 %v2131, %v2131
        %v2514 = vmul.f32 %v2136, %v2136
        %v2515 = vmul.f32 %v2141, %v2141
        %v2516 = vmul.f32 %v2146, %v2146
        %v2517 = vmul.f32 %v2151, %v2151
        %v2518 = vmul.f32 %v2156, %v2156
        %v2519 = vmul.f32 %v2161, %v2161
        %v2520 = vmul.f32 %v2166, %v2166
        %v2521 = vmul.f32 %v2171, %v2171
        %v2522 = vmul.f32 %v2176, %v2176
        %v2523 = vmul.f32 %v2181, %v2181
        %v2524 = vmul.f32 %v2186, %v2186
        %v2525 = vmul.f32 %v2191, %v2191
        %v2526 = vmul.f32 %v2196, %v2196
        %v2527 = vmul.f32 %v2201, %v2201
        %v2528 = vmul.f32 %v2206, %v2206
        %v2529 = vmul.f32 %v2211, %v2211
        %v2530 = vmul.f32 %v2216, %v2216
        %v2531 = vmul.f32 %v2221, %v2221
        %v2532 = vmul.f32 %v2226, %v2226
        %v2533 = vmul.f32 %v2231, %v2231
        %v2534 = vmul.f32 %v2236, %v2236
        %v2535 = vmul.f32 %v2241, %v2241
        %v2536 = vmul.f32 %v2246, %v2246
        %v2537 = vmul.f32 %v2251, %v2251
        %v2538 = vmul.f32 %v2256, %v2256
        %v2539 = vmul.f32 %v2261, %v2261
        %v2540 = vmul.f32 %v2266, %v2266
        %v2541 = vmul.f32 %v2271, %v2271
        %v2542 = vmul.f32 %v2276, %v2276
        %v2543 = vmul.f32 %v2281, %v2281
        %v2544 = vmul.f32 %v2286, %v2286
        %v2545 = vmul.f32 %v2291, %v2291
        %v2546 = vmul.f32 %v2296, %v2296
        %v2547 = vmul.f32 %v2301, %v2301
        %v2548 = vmul.f32 %v2306, %v2306
        %v2549 = vmul.f32 %v2311, %v2311
        %v2550 = vmul.f32 %v2316, %v2316
        %v2551 = vmul.f32 %v2321, %v2321
        %v2552 = vmul.f32 %v2326, %v2326
        %v2553 = vmul.f32 %v2331, %v2331
        %v2554 = vmul.f32 %v2336, %v2336
        %v2555 = vmul.f32 %v2341, %v2341
        %v2556 = vmul.f32 %v2346, %v2346
        %v2557 = vmul.f32 %v2351, %v2351
        %v2558 = vmul.f32 %v2356, %v2356
        %v2559 = vmul.f32 %v2361, %v2361
        %v2560 = vmul.f32 %v2366, %v2366
        %2561 = vadd.xlane.f32.xlu0 %v2497
        %v2562 = vpop.xlane.xlu0 %2561
        %2563 = vadd.xlane.f32.xlu0 %v2498
        %v2564 = vpop.xlane.xlu0 %2563
        %2565 = vadd.xlane.f32.xlu0 %v2499
        %v2566 = vpop.xlane.xlu0 %2565
        %2567 = vadd.xlane.f32.xlu0 %v2500
        %v2568 = vpop.xlane.xlu0 %2567
        %2569 = vadd.xlane.f32.xlu0 %v2501
        %v2570 = vpop.xlane.xlu0 %2569
        %2571 = vadd.xlane.f32.xlu0 %v2502
        %v2572 = vpop.xlane.xlu0 %2571
        %2573 = vadd.xlane.f32.xlu0 %v2503
        %v2574 = vpop.xlane.xlu0 %2573
        %2575 = vadd.xlane.f32.xlu0 %v2504
        %v2576 = vpop.xlane.xlu0 %2575
        %2577 = vadd.xlane.f32.xlu0 %v2505
        %v2578 = vpop.xlane.xlu0 %2577
        %2579 = vadd.xlane.f32.xlu0 %v2506
        %v2580 = vpop.xlane.xlu0 %2579
        %2581 = vadd.xlane.f32.xlu0 %v2507
        %v2582 = vpop.xlane.xlu0 %2581
        %2583 = vadd.xlane.f32.xlu0 %v2508
        %v2584 = vpop.xlane.xlu0 %2583
        %2585 = vadd.xlane.f32.xlu0 %v2509
        %v2586 = vpop.xlane.xlu0 %2585
        %2587 = vadd.xlane.f32.xlu0 %v2510
        %v2588 = vpop.xlane.xlu0 %2587
        %2589 = vadd.xlane.f32.xlu0 %v2511
        %v2590 = vpop.xlane.xlu0 %2589
        %2591 = vadd.xlane.f32.xlu0 %v2512
        %v2592 = vpop.xlane.xlu0 %2591
        %2593 = vadd.xlane.f32.xlu0 %v2513
        %v2594 = vpop.xlane.xlu0 %2593
        %2595 = vadd.xlane.f32.xlu0 %v2514
        %v2596 = vpop.xlane.xlu0 %2595
        %2597 = vadd.xlane.f32.xlu0 %v2515
        %v2598 = vpop.xlane.xlu0 %2597
        %2599 = vadd.xlane.f32.xlu0 %v2516
        %v2600 = vpop.xlane.xlu0 %2599
        %2601 = vadd.xlane.f32.xlu0 %v2517
        %v2602 = vpop.xlane.xlu0 %2601
        %2603 = vadd.xlane.f32.xlu0 %v2518
        %v2604 = vpop.xlane.xlu0 %2603
        %2605 = vadd.xlane.f32.xlu0 %v2519
        %v2606 = vpop.xlane.xlu0 %2605
        %2607 = vadd.xlane.f32.xlu0 %v2520
        %v2608 = vpop.xlane.xlu0 %2607
        %2609 = vadd.xlane.f32.xlu0 %v2521
        %v2610 = vpop.xlane.xlu0 %2609
        %2611 = vadd.xlane.f32.xlu0 %v2522
        %v2612 = vpop.xlane.xlu0 %2611
        %2613 = vadd.xlane.f32.xlu0 %v2523
        %v2614 = vpop.xlane.xlu0 %2613
        %2615 = vadd.xlane.f32.xlu0 %v2524
        %v2616 = vpop.xlane.xlu0 %2615
        %2617 = vadd.xlane.f32.xlu0 %v2525
        %v2618 = vpop.xlane.xlu0 %2617
        %2619 = vadd.xlane.f32.xlu0 %v2526
        %v2620 = vpop.xlane.xlu0 %2619
        %2621 = vadd.xlane.f32.xlu0 %v2527
        %v2622 = vpop.xlane.xlu0 %2621
        %2623 = vadd.xlane.f32.xlu0 %v2528
        %v2624 = vpop.xlane.xlu0 %2623
        %2625 = vadd.xlane.f32.xlu0 %v2529
        %v2626 = vpop.xlane.xlu0 %2625
        %2627 = vadd.xlane.f32.xlu0 %v2530
        %v2628 = vpop.xlane.xlu0 %2627
        %2629 = vadd.xlane.f32.xlu0 %v2531
        %v2630 = vpop.xlane.xlu0 %2629
        %2631 = vadd.xlane.f32.xlu0 %v2532
        %v2632 = vpop.xlane.xlu0 %2631
        %2633 = vadd.xlane.f32.xlu0 %v2533
        %v2634 = vpop.xlane.xlu0 %2633
        %2635 = vadd.xlane.f32.xlu0 %v2534
        %v2636 = vpop.xlane.xlu0 %2635
        %2637 = vadd.xlane.f32.xlu0 %v2535
        %v2638 = vpop.xlane.xlu0 %2637
        %2639 = vadd.xlane.f32.xlu0 %v2536
        %v2640 = vpop.xlane.xlu0 %2639
        %2641 = vadd.xlane.f32.xlu0 %v2537
        %v2642 = vpop.xlane.xlu0 %2641
        %2643 = vadd.xlane.f32.xlu0 %v2538
        %v2644 = vpop.xlane.xlu0 %2643
        %2645 = vadd.xlane.f32.xlu0 %v2539
        %v2646 = vpop.xlane.xlu0 %2645
        %2647 = vadd.xlane.f32.xlu0 %v2540
        %v2648 = vpop.xlane.xlu0 %2647
        %2649 = vadd.xlane.f32.xlu0 %v2541
        %v2650 = vpop.xlane.xlu0 %2649
        %2651 = vadd.xlane.f32.xlu0 %v2542
        %v2652 = vpop.xlane.xlu0 %2651
        %2653 = vadd.xlane.f32.xlu0 %v2543
        %v2654 = vpop.xlane.xlu0 %2653
        %2655 = vadd.xlane.f32.xlu0 %v2544
        %v2656 = vpop.xlane.xlu0 %2655
        %2657 = vadd.xlane.f32.xlu0 %v2545
        %v2658 = vpop.xlane.xlu0 %2657
        %2659 = vadd.xlane.f32.xlu0 %v2546
        %v2660 = vpop.xlane.xlu0 %2659
        %2661 = vadd.xlane.f32.xlu0 %v2547
        %v2662 = vpop.xlane.xlu0 %2661
        %2663 = vadd.xlane.f32.xlu0 %v2548
        %v2664 = vpop.xlane.xlu0 %2663
        %2665 = vadd.xlane.f32.xlu0 %v2549
        %v2666 = vpop.xlane.xlu0 %2665
        %2667 = vadd.xlane.f32.xlu0 %v2550
        %v2668 = vpop.xlane.xlu0 %2667
        %2669 = vadd.xlane.f32.xlu0 %v2551
        %v2670 = vpop.xlane.xlu0 %2669
        %2671 = vadd.xlane.f32.xlu0 %v2552
        %v2672 = vpop.xlane.xlu0 %2671
        %2673 = vadd.xlane.f32.xlu0 %v2553
        %v2674 = vpop.xlane.xlu0 %2673
        %2675 = vadd.xlane.f32.xlu0 %v2554
        %v2676 = vpop.xlane.xlu0 %2675
        %2677 = vadd.xlane.f32.xlu0 %v2555
        %v2678 = vpop.xlane.xlu0 %2677
        %2679 = vadd.xlane.f32.xlu0 %v2556
        %v2680 = vpop.xlane.xlu0 %2679
        %2681 = vadd.xlane.f32.xlu0 %v2557
        %v2682 = vpop.xlane.xlu0 %2681
        %2683 = vadd.xlane.f32.xlu0 %v2558
        %v2684 = vpop.xlane.xlu0 %2683
        %2685 = vadd.xlane.f32.xlu0 %v2559
        %v2686 = vpop.xlane.xlu0 %2685
        %2687 = vadd.xlane.f32.xlu0 %v2560
        %v2688 = vpop.xlane.xlu0 %2687
        %v2689 = vmul.f32 %v2370, 0.0078125
        %v2690 = vmul.f32 %v2372, 0.0078125
        %v2691 = vmul.f32 %v2374, 0.0078125
        %v2692 = vmul.f32 %v2376, 0.0078125
        %v2693 = vmul.f32 %v2378, 0.0078125
        %v2694 = vmul.f32 %v2380, 0.0078125
        %v2695 = vmul.f32 %v2382, 0.0078125
        %v2696 = vmul.f32 %v2384, 0.0078125
        %v2697 = vmul.f32 %v2386, 0.0078125
        %v2698 = vmul.f32 %v2388, 0.0078125
        %v2699 = vmul.f32 %v2390, 0.0078125
        %v2700 = vmul.f32 %v2392, 0.0078125
        %v2701 = vmul.f32 %v2394, 0.0078125
        %v2702 = vmul.f32 %v2396, 0.0078125
        %v2703 = vmul.f32 %v2398, 0.0078125
        %v2704 = vmul.f32 %v2400, 0.0078125
        %v2705 = vmul.f32 %v2402, 0.0078125
        %v2706 = vmul.f32 %v2404, 0.0078125
        %v2707 = vmul.f32 %v2406, 0.0078125
        %v2708 = vmul.f32 %v2408, 0.0078125
        %v2709 = vmul.f32 %v2410, 0.0078125
        %v2710 = vmul.f32 %v2412, 0.0078125
        %v2711 = vmul.f32 %v2414, 0.0078125
        %v2712 = vmul.f32 %v2416, 0.0078125
        %v2713 = vmul.f32 %v2418, 0.0078125
        %v2714 = vmul.f32 %v2420, 0.0078125
        %v2715 = vmul.f32 %v2422, 0.0078125
        %v2716 = vmul.f32 %v2424, 0.0078125
        %v2717 = vmul.f32 %v2426, 0.0078125
        %v2718 = vmul.f32 %v2428, 0.0078125
        %v2719 = vmul.f32 %v2430, 0.0078125
        %v2720 = vmul.f32 %v2432, 0.0078125
        %v2721 = vmul.f32 %v2434, 0.0078125
        %v2722 = vmul.f32 %v2436, 0.0078125
        %v2723 = vmul.f32 %v2438, 0.0078125
        %v2724 = vmul.f32 %v2440, 0.0078125
        %v2725 = vmul.f32 %v2442, 0.0078125
        %v2726 = vmul.f32 %v2444, 0.0078125
        %v2727 = vmul.f32 %v2446, 0.0078125
        %v2728 = vmul.f32 %v2448, 0.0078125
        %v2729 = vmul.f32 %v2450, 0.0078125
        %v2730 = vmul.f32 %v2452, 0.0078125
        %v2731 = vmul.f32 %v2454, 0.0078125
        %v2732 = vmul.f32 %v2456, 0.0078125
        %v2733 = vmul.f32 %v2458, 0.0078125
        %v2734 = vmul.f32 %v2460, 0.0078125
        %v2735 = vmul.f32 %v2462, 0.0078125
        %v2736 = vmul.f32 %v2464, 0.0078125
        %v2737 = vmul.f32 %v2466, 0.0078125
        %v2738 = vmul.f32 %v2468, 0.0078125
        %v2739 = vmul.f32 %v2470, 0.0078125
        %v2740 = vmul.f32 %v2472, 0.0078125
        %v2741 = vmul.f32 %v2474, 0.0078125
        %v2742 = vmul.f32 %v2476, 0.0078125
        %v2743 = vmul.f32 %v2478, 0.0078125
        %v2744 = vmul.f32 %v2480, 0.0078125
        %v2745 = vmul.f32 %v2482, 0.0078125
        %v2746 = vmul.f32 %v2484, 0.0078125
        %v2747 = vmul.f32 %v2486, 0.0078125
        %v2748 = vmul.f32 %v2488, 0.0078125
        %v2749 = vmul.f32 %v2490, 0.0078125
        %v2750 = vmul.f32 %v2492, 0.0078125
        %v2751 = vmul.f32 %v2494, 0.0078125
        %v2752 = vmul.f32 %v2496, 0.0078125
        %v2753 = vmul.f32 %v2562, 0.0078125
        %v2754 = vmul.f32 %v2564, 0.0078125
        %v2755 = vmul.f32 %v2566, 0.0078125
        %v2756 = vmul.f32 %v2568, 0.0078125
        %v2757 = vmul.f32 %v2570, 0.0078125
        %v2758 = vmul.f32 %v2572, 0.0078125
        %v2759 = vmul.f32 %v2574, 0.0078125
        %v2760 = vmul.f32 %v2576, 0.0078125
        %v2761 = vmul.f32 %v2578, 0.0078125
        %v2762 = vmul.f32 %v2580, 0.0078125
        %v2763 = vmul.f32 %v2582, 0.0078125
        %v2764 = vmul.f32 %v2584, 0.0078125
        %v2765 = vmul.f32 %v2586, 0.0078125
        %v2766 = vmul.f32 %v2588, 0.0078125
        %v2767 = vmul.f32 %v2590, 0.0078125
        %v2768 = vmul.f32 %v2592, 0.0078125
        %v2769 = vmul.f32 %v2594, 0.0078125
        %v2770 = vmul.f32 %v2596, 0.0078125
        %v2771 = vmul.f32 %v2598, 0.0078125
        %v2772 = vmul.f32 %v2600, 0.0078125
        %v2773 = vmul.f32 %v2602, 0.0078125
        %v2774 = vmul.f32 %v2604, 0.0078125
        %v2775 = vmul.f32 %v2606, 0.0078125
        %v2776 = vmul.f32 %v2608, 0.0078125
        %v2777 = vmul.f32 %v2610, 0.0078125
        %v2778 = vmul.f32 %v2612, 0.0078125
        %v2779 = vmul.f32 %v2614, 0.0078125
        %v2780 = vmul.f32 %v2616, 0.0078125
        %v2781 = vmul.f32 %v2618, 0.0078125
        %v2782 = vmul.f32 %v2620, 0.0078125
        %v2783 = vmul.f32 %v2622, 0.0078125
        %v2784 = vmul.f32 %v2624, 0.0078125
        %v2785 = vmul.f32 %v2626, 0.0078125
        %v2786 = vmul.f32 %v2628, 0.0078125
        %v2787 = vmul.f32 %v2630, 0.0078125
        %v2788 = vmul.f32 %v2632, 0.0078125
        %v2789 = vmul.f32 %v2634, 0.0078125
        %v2790 = vmul.f32 %v2636, 0.0078125
        %v2791 = vmul.f32 %v2638, 0.0078125
        %v2792 = vmul.f32 %v2640, 0.0078125
        %v2793 = vmul.f32 %v2642, 0.0078125
        %v2794 = vmul.f32 %v2644, 0.0078125
        %v2795 = vmul.f32 %v2646, 0.0078125
        %v2796 = vmul.f32 %v2648, 0.0078125
        %v2797 = vmul.f32 %v2650, 0.0078125
        %v2798 = vmul.f32 %v2652, 0.0078125
        %v2799 = vmul.f32 %v2654, 0.0078125
        %v2800 = vmul.f32 %v2656, 0.0078125
        %v2801 = vmul.f32 %v2658, 0.0078125
        %v2802 = vmul.f32 %v2660, 0.0078125
        %v2803 = vmul.f32 %v2662, 0.0078125
        %v2804 = vmul.f32 %v2664, 0.0078125
        %v2805 = vmul.f32 %v2666, 0.0078125
        %v2806 = vmul.f32 %v2668, 0.0078125
        %v2807 = vmul.f32 %v2670, 0.0078125
        %v2808 = vmul.f32 %v2672, 0.0078125
        %v2809 = vmul.f32 %v2674, 0.0078125
        %v2810 = vmul.f32 %v2676, 0.0078125
        %v2811 = vmul.f32 %v2678, 0.0078125
        %v2812 = vmul.f32 %v2680, 0.0078125
        %v2813 = vmul.f32 %v2682, 0.0078125
        %v2814 = vmul.f32 %v2684, 0.0078125
        %v2815 = vmul.f32 %v2686, 0.0078125
        %v2816 = vmul.f32 %v2688, 0.0078125
        %v2817 = vmul.f32 %v2689, %v2689
        %v2818 = vmul.f32 %v2690, %v2690
        %v2819 = vmul.f32 %v2691, %v2691
        %v2820 = vmul.f32 %v2692, %v2692
        %v2821 = vmul.f32 %v2693, %v2693
        %v2822 = vmul.f32 %v2694, %v2694
        %v2823 = vmul.f32 %v2695, %v2695
        %v2824 = vmul.f32 %v2696, %v2696
        %v2825 = vmul.f32 %v2697, %v2697
        %v2826 = vmul.f32 %v2698, %v2698
        %v2827 = vmul.f32 %v2699, %v2699
        %v2828 = vmul.f32 %v2700, %v2700
        %v2829 = vmul.f32 %v2701, %v2701
        %v2830 = vmul.f32 %v2702, %v2702
        %v2831 = vmul.f32 %v2703, %v2703
        %v2832 = vmul.f32 %v2704, %v2704
        %v2833 = vmul.f32 %v2705, %v2705
        %v2834 = vmul.f32 %v2706, %v2706
        %v2835 = vmul.f32 %v2707, %v2707
        %v2836 = vmul.f32 %v2708, %v2708
        %v2837 = vmul.f32 %v2709, %v2709
        %v2838 = vmul.f32 %v2710, %v2710
        %v2839 = vmul.f32 %v2711, %v2711
        %v2840 = vmul.f32 %v2712, %v2712
        %v2841 = vmul.f32 %v2713, %v2713
        %v2842 = vmul.f32 %v2714, %v2714
        %v2843 = vmul.f32 %v2715, %v2715
        %v2844 = vmul.f32 %v2716, %v2716
        %v2845 = vmul.f32 %v2717, %v2717
        %v2846 = vmul.f32 %v2718, %v2718
        %v2847 = vmul.f32 %v2719, %v2719
        %v2848 = vmul.f32 %v2720, %v2720
        %v2849 = vmul.f32 %v2721, %v2721
        %v2850 = vmul.f32 %v2722, %v2722
        %v2851 = vmul.f32 %v2723, %v2723
        %v2852 = vmul.f32 %v2724, %v2724
        %v2853 = vmul.f32 %v2725, %v2725
        %v2854 = vmul.f32 %v2726, %v2726
        %v2855 = vmul.f32 %v2727, %v2727
        %v2856 = vmul.f32 %v2728, %v2728
        %v2857 = vmul.f32 %v2729, %v2729
        %v2858 = vmul.f32 %v2730, %v2730
        %v2859 = vmul.f32 %v2731, %v2731
        %v2860 = vmul.f32 %v2732, %v2732
        %v2861 = vmul.f32 %v2733, %v2733
        %v2862 = vmul.f32 %v2734, %v2734
        %v2863 = vmul.f32 %v2735, %v2735
        %v2864 = vmul.f32 %v2736, %v2736
        %v2865 = vmul.f32 %v2737, %v2737
        %v2866 = vmul.f32 %v2738, %v2738
        %v2867 = vmul.f32 %v2739, %v2739
        %v2868 = vmul.f32 %v2740, %v2740
        %v2869 = vmul.f32 %v2741, %v2741
        %v2870 = vmul.f32 %v2742, %v2742
        %v2871 = vmul.f32 %v2743, %v2743
        %v2872 = vmul.f32 %v2744, %v2744
        %v2873 = vmul.f32 %v2745, %v2745
        %v2874 = vmul.f32 %v2746, %v2746
        %v2875 = vmul.f32 %v2747, %v2747
        %v2876 = vmul.f32 %v2748, %v2748
        %v2877 = vmul.f32 %v2749, %v2749
        %v2878 = vmul.f32 %v2750, %v2750
        %v2879 = vmul.f32 %v2751, %v2751
        %v2880 = vmul.f32 %v2752, %v2752
        %v2881 = vsub.f32 %v2753, %v2817
        %v2882 = vsub.f32 %v2754, %v2818
        %v2883 = vsub.f32 %v2755, %v2819
        %v2884 = vsub.f32 %v2756, %v2820
        %v2885 = vsub.f32 %v2757, %v2821
        %v2886 = vsub.f32 %v2758, %v2822
        %v2887 = vsub.f32 %v2759, %v2823
        %v2888 = vsub.f32 %v2760, %v2824
        %v2889 = vsub.f32 %v2761, %v2825
        %v2890 = vsub.f32 %v2762, %v2826
        %v2891 = vsub.f32 %v2763, %v2827
        %v2892 = vsub.f32 %v2764, %v2828
        %v2893 = vsub.f32 %v2765, %v2829
        %v2894 = vsub.f32 %v2766, %v2830
        %v2895 = vsub.f32 %v2767, %v2831
        %v2896 = vsub.f32 %v2768, %v2832
        %v2897 = vsub.f32 %v2769, %v2833
        %v2898 = vsub.f32 %v2770, %v2834
        %v2899 = vsub.f32 %v2771, %v2835
        %v2900 = vsub.f32 %v2772, %v2836
        %v2901 = vsub.f32 %v2773, %v2837
        %v2902 = vsub.f32 %v2774, %v2838
        %v2903 = vsub.f32 %v2775, %v2839
        %v2904 = vsub.f32 %v2776, %v2840
        %v2905 = vsub.f32 %v2777, %v2841
        %v2906 = vsub.f32 %v2778, %v2842
        %v2907 = vsub.f32 %v2779, %v2843
        %v2908 = vsub.f32 %v2780, %v2844
        %v2909 = vsub.f32 %v2781, %v2845
        %v2910 = vsub.f32 %v2782, %v2846
        %v2911 = vsub.f32 %v2783, %v2847
        %v2912 = vsub.f32 %v2784, %v2848
        %v2913 = vsub.f32 %v2785, %v2849
        %v2914 = vsub.f32 %v2786, %v2850
        %v2915 = vsub.f32 %v2787, %v2851
        %v2916 = vsub.f32 %v2788, %v2852
        %v2917 = vsub.f32 %v2789, %v2853
        %v2918 = vsub.f32 %v2790, %v2854
        %v2919 = vsub.f32 %v2791, %v2855
        %v2920 = vsub.f32 %v2792, %v2856
        %v2921 = vsub.f32 %v2793, %v2857
        %v2922 = vsub.f32 %v2794, %v2858
        %v2923 = vsub.f32 %v2795, %v2859
        %v2924 = vsub.f32 %v2796, %v2860
        %v2925 = vsub.f32 %v2797, %v2861
        %v2926 = vsub.f32 %v2798, %v2862
        %v2927 = vsub.f32 %v2799, %v2863
        %v2928 = vsub.f32 %v2800, %v2864
        %v2929 = vsub.f32 %v2801, %v2865
        %v2930 = vsub.f32 %v2802, %v2866
        %v2931 = vsub.f32 %v2803, %v2867
        %v2932 = vsub.f32 %v2804, %v2868
        %v2933 = vsub.f32 %v2805, %v2869
        %v2934 = vsub.f32 %v2806, %v2870
        %v2935 = vsub.f32 %v2807, %v2871
        %v2936 = vsub.f32 %v2808, %v2872
        %v2937 = vsub.f32 %v2809, %v2873
        %v2938 = vsub.f32 %v2810, %v2874
        %v2939 = vsub.f32 %v2811, %v2875
        %v2940 = vsub.f32 %v2812, %v2876
        %v2941 = vsub.f32 %v2813, %v2877
        %v2942 = vsub.f32 %v2814, %v2878
        %v2943 = vsub.f32 %v2815, %v2879
        %v2944 = vsub.f32 %v2816, %v2880
        %v2945 = vsub.f32 %v2051, %v2689
        %v2946 = vsub.f32 %v2056, %v2690
        %v2947 = vsub.f32 %v2061, %v2691
        %v2948 = vsub.f32 %v2066, %v2692
        %v2949 = vsub.f32 %v2071, %v2693
        %v2950 = vsub.f32 %v2076, %v2694
        %v2951 = vsub.f32 %v2081, %v2695
        %v2952 = vsub.f32 %v2086, %v2696
        %v2953 = vsub.f32 %v2091, %v2697
        %v2954 = vsub.f32 %v2096, %v2698
        %v2955 = vsub.f32 %v2101, %v2699
        %v2956 = vsub.f32 %v2106, %v2700
        %v2957 = vsub.f32 %v2111, %v2701
        %v2958 = vsub.f32 %v2116, %v2702
        %v2959 = vsub.f32 %v2121, %v2703
        %v2960 = vsub.f32 %v2126, %v2704
        %v2961 = vsub.f32 %v2131, %v2705
        %v2962 = vsub.f32 %v2136, %v2706
        %v2963 = vsub.f32 %v2141, %v2707
        %v2964 = vsub.f32 %v2146, %v2708
        %v2965 = vsub.f32 %v2151, %v2709
        %v2966 = vsub.f32 %v2156, %v2710
        %v2967 = vsub.f32 %v2161, %v2711
        %v2968 = vsub.f32 %v2166, %v2712
        %v2969 = vsub.f32 %v2171, %v2713
        %v2970 = vsub.f32 %v2176, %v2714
        %v2971 = vsub.f32 %v2181, %v2715
        %v2972 = vsub.f32 %v2186, %v2716
        %v2973 = vsub.f32 %v2191, %v2717
        %v2974 = vsub.f32 %v2196, %v2718
        %v2975 = vsub.f32 %v2201, %v2719
        %v2976 = vsub.f32 %v2206, %v2720
        %v2977 = vsub.f32 %v2211, %v2721
        %v2978 = vsub.f32 %v2216, %v2722
        %v2979 = vsub.f32 %v2221, %v2723
        %v2980 = vsub.f32 %v2226, %v2724
        %v2981 = vsub.f32 %v2231, %v2725
        %v2982 = vsub.f32 %v2236, %v2726
        %v2983 = vsub.f32 %v2241, %v2727
        %v2984 = vsub.f32 %v2246, %v2728
        %v2985 = vsub.f32 %v2251, %v2729
        %v2986 = vsub.f32 %v2256, %v2730
        %v2987 = vsub.f32 %v2261, %v2731
        %v2988 = vsub.f32 %v2266, %v2732
        %v2989 = vsub.f32 %v2271, %v2733
        %v2990 = vsub.f32 %v2276, %v2734
        %v2991 = vsub.f32 %v2281, %v2735
        %v2992 = vsub.f32 %v2286, %v2736
        %v2993 = vsub.f32 %v2291, %v2737
        %v2994 = vsub.f32 %v2296, %v2738
        %v2995 = vsub.f32 %v2301, %v2739
        %v2996 = vsub.f32 %v2306, %v2740
        %v2997 = vsub.f32 %v2311, %v2741
        %v2998 = vsub.f32 %v2316, %v2742
        %v2999 = vsub.f32 %v2321, %v2743
        %v3000 = vsub.f32 %v2326, %v2744
        %v3001 = vsub.f32 %v2331, %v2745
        %v3002 = vsub.f32 %v2336, %v2746
        %v3003 = vsub.f32 %v2341, %v2747
        %v3004 = vsub.f32 %v2346, %v2748
        %v3005 = vsub.f32 %v2351, %v2749
        %v3006 = vsub.f32 %v2356, %v2750
        %v3007 = vsub.f32 %v2361, %v2751
        %v3008 = vsub.f32 %v2366, %v2752
        %v3009 = vadd.f32 %v2881, 1e-05
        %v3010 = vadd.f32 %v2882, 1e-05
        %v3011 = vadd.f32 %v2883, 1e-05
        %v3012 = vadd.f32 %v2884, 1e-05
        %v3013 = vadd.f32 %v2885, 1e-05
        %v3014 = vadd.f32 %v2886, 1e-05
        %v3015 = vadd.f32 %v2887, 1e-05
        %v3016 = vadd.f32 %v2888, 1e-05
        %v3017 = vadd.f32 %v2889, 1e-05
        %v3018 = vadd.f32 %v2890, 1e-05
        %v3019 = vadd.f32 %v2891, 1e-05
        %v3020 = vadd.f32 %v2892, 1e-05
        %v3021 = vadd.f32 %v2893, 1e-05
        %v3022 = vadd.f32 %v2894, 1e-05
        %v3023 = vadd.f32 %v2895, 1e-05
        %v3024 = vadd.f32 %v2896, 1e-05
        %v3025 = vadd.f32 %v2897, 1e-05
        %v3026 = vadd.f32 %v2898, 1e-05
        %v3027 = vadd.f32 %v2899, 1e-05
        %v3028 = vadd.f32 %v2900, 1e-05
        %v3029 = vadd.f32 %v2901, 1e-05
        %v3030 = vadd.f32 %v2902, 1e-05
        %v3031 = vadd.f32 %v2903, 1e-05
        %v3032 = vadd.f32 %v2904, 1e-05
        %v3033 = vadd.f32 %v2905, 1e-05
        %v3034 = vadd.f32 %v2906, 1e-05
        %v3035 = vadd.f32 %v2907, 1e-05
        %v3036 = vadd.f32 %v2908, 1e-05
        %v3037 = vadd.f32 %v2909, 1e-05
        %v3038 = vadd.f32 %v2910, 1e-05
        %v3039 = vadd.f32 %v2911, 1e-05
        %v3040 = vadd.f32 %v2912, 1e-05
        %v3041 = vadd.f32 %v2913, 1e-05
        %v3042 = vadd.f32 %v2914, 1e-05
        %v3043 = vadd.f32 %v2915, 1e-05
        %v3044 = vadd.f32 %v2916, 1e-05
        %v3045 = vadd.f32 %v2917, 1e-05
        %v3046 = vadd.f32 %v2918, 1e-05
        %v3047 = vadd.f32 %v2919, 1e-05
        %v3048 = vadd.f32 %v2920, 1e-05
        %v3049 = vadd.f32 %v2921, 1e-05
        %v3050 = vadd.f32 %v2922, 1e-05
        %v3051 = vadd.f32 %v2923, 1e-05
        %v3052 = vadd.f32 %v2924, 1e-05
        %v3053 = vadd.f32 %v2925, 1e-05
        %v3054 = vadd.f32 %v2926, 1e-05
        %v3055 = vadd.f32 %v2927, 1e-05
        %v3056 = vadd.f32 %v2928, 1e-05
        %v3057 = vadd.f32 %v2929, 1e-05
        %v3058 = vadd.f32 %v2930, 1e-05
        %v3059 = vadd.f32 %v2931, 1e-05
        %v3060 = vadd.f32 %v2932, 1e-05
        %v3061 = vadd.f32 %v2933, 1e-05
        %v3062 = vadd.f32 %v2934, 1e-05
        %v3063 = vadd.f32 %v2935, 1e-05
        %v3064 = vadd.f32 %v2936, 1e-05
        %v3065 = vadd.f32 %v2937, 1e-05
        %v3066 = vadd.f32 %v2938, 1e-05
        %v3067 = vadd.f32 %v2939, 1e-05
        %v3068 = vadd.f32 %v2940, 1e-05
        %v3069 = vadd.f32 %v2941, 1e-05
        %v3070 = vadd.f32 %v2942, 1e-05
        %v3071 = vadd.f32 %v2943, 1e-05
        %v3072 = vadd.f32 %v2944, 1e-05
        %v3073 = vrsqrt.pop %v3009
        %v3074 = vrsqrt.pop %v3010
        %v3075 = vrsqrt.pop %v3011
        %v3076 = vrsqrt.pop %v3012
        %v3077 = vrsqrt.pop %v3013
        %v3078 = vrsqrt.pop %v3014
        %v3079 = vrsqrt.pop %v3015
        %v3080 = vrsqrt.pop %v3016
        %v3081 = vrsqrt.pop %v3017
        %v3082 = vrsqrt.pop %v3018
        %v3083 = vrsqrt.pop %v3019
        %v3084 = vrsqrt.pop %v3020
        %v3085 = vrsqrt.pop %v3021
        %v3086 = vrsqrt.pop %v3022
        %v3087 = vrsqrt.pop %v3023
        %v3088 = vrsqrt.pop %v3024
        %v3089 = vrsqrt.pop %v3025
        %v3090 = vrsqrt.pop %v3026
        %v3091 = vrsqrt.pop %v3027
        %v3092 = vrsqrt.pop %v3028
        %v3093 = vrsqrt.pop %v3029
        %v3094 = vrsqrt.pop %v3030
        %v3095 = vrsqrt.pop %v3031
        %v3096 = vrsqrt.pop %v3032
        %v3097 = vrsqrt.pop %v3033
        %v3098 = vrsqrt.pop %v3034
        %v3099 = vrsqrt.pop %v3035
        %v3100 = vrsqrt.pop %v3036
        %v3101 = vrsqrt.pop %v3037
        %v3102 = vrsqrt.pop %v3038
        %v3103 = vrsqrt.pop %v3039
        %v3104 = vrsqrt.pop %v3040
        %v3105 = vrsqrt.pop %v3041
        %v3106 = vrsqrt.pop %v3042
        %v3107 = vrsqrt.pop %v3043
        %v3108 = vrsqrt.pop %v3044
        %v3109 = vrsqrt.pop %v3045
        %v3110 = vrsqrt.pop %v3046
        %v3111 = vrsqrt.pop %v3047
        %v3112 = vrsqrt.pop %v3048
        %v3113 = vrsqrt.pop %v3049
        %v3114 = vrsqrt.pop %v3050
        %v3115 = vrsqrt.pop %v3051
        %v3116 = vrsqrt.pop %v3052
        %v3117 = vrsqrt.pop %v3053
        %v3118 = vrsqrt.pop %v3054
        %v3119 = vrsqrt.pop %v3055
        %v3120 = vrsqrt.pop %v3056
        %v3121 = vrsqrt.pop %v3057
        %v3122 = vrsqrt.pop %v3058
        %v3123 = vrsqrt.pop %v3059
        %v3124 = vrsqrt.pop %v3060
        %v3125 = vrsqrt.pop %v3061
        %v3126 = vrsqrt.pop %v3062
        %v3127 = vrsqrt.pop %v3063
        %v3128 = vrsqrt.pop %v3064
        %v3129 = vrsqrt.pop %v3065
        %v3130 = vrsqrt.pop %v3066
        %v3131 = vrsqrt.pop %v3067
        %v3132 = vrsqrt.pop %v3068
        %v3133 = vrsqrt.pop %v3069
        %v3134 = vrsqrt.pop %v3070
        %v3135 = vrsqrt.pop %v3071
        %v3136 = vrsqrt.pop %v3072
        %v3137 = vmul.f32 %v2945, %v3073
        %v3138 = vmul.f32 %v2946, %v3074
        %v3139 = vmul.f32 %v2947, %v3075
        %v3140 = vmul.f32 %v2948, %v3076
        %v3141 = vmul.f32 %v2949, %v3077
        %v3142 = vmul.f32 %v2950, %v3078
        %v3143 = vmul.f32 %v2951, %v3079
        %v3144 = vmul.f32 %v2952, %v3080
        %v3145 = vmul.f32 %v2953, %v3081
        %v3146 = vmul.f32 %v2954, %v3082
        %v3147 = vmul.f32 %v2955, %v3083
        %v3148 = vmul.f32 %v2956, %v3084
        %v3149 = vmul.f32 %v2957, %v3085
        %v3150 = vmul.f32 %v2958, %v3086
        %v3151 = vmul.f32 %v2959, %v3087
        %v3152 = vmul.f32 %v2960, %v3088
        %v3153 = vmul.f32 %v2961, %v3089
        %v3154 = vmul.f32 %v2962, %v3090
        %v3155 = vmul.f32 %v2963, %v3091
        %v3156 = vmul.f32 %v2964, %v3092
        %v3157 = vmul.f32 %v2965, %v3093
        %v3158 = vmul.f32 %v2966, %v3094
        %v3159 = vmul.f32 %v2967, %v3095
        %v3160 = vmul.f32 %v2968, %v3096
        %v3161 = vmul.f32 %v2969, %v3097
        %v3162 = vmul.f32 %v2970, %v3098
        %v3163 = vmul.f32 %v2971, %v3099
        %v3164 = vmul.f32 %v2972, %v3100
        %v3165 = vmul.f32 %v2973, %v3101
        %v3166 = vmul.f32 %v2974, %v3102
        %v3167 = vmul.f32 %v2975, %v3103
        %v3168 = vmul.f32 %v2976, %v3104
        %v3169 = vmul.f32 %v2977, %v3105
        %v3170 = vmul.f32 %v2978, %v3106
        %v3171 = vmul.f32 %v2979, %v3107
        %v3172 = vmul.f32 %v2980, %v3108
        %v3173 = vmul.f32 %v2981, %v3109
        %v3174 = vmul.f32 %v2982, %v3110
        %v3175 = vmul.f32 %v2983, %v3111
        %v3176 = vmul.f32 %v2984, %v3112
        %v3177 = vmul.f32 %v2985, %v3113
        %v3178 = vmul.f32 %v2986, %v3114
        %v3179 = vmul.f32 %v2987, %v3115
        %v3180 = vmul.f32 %v2988, %v3116
        %v3181 = vmul.f32 %v2989, %v3117
        %v3182 = vmul.f32 %v2990, %v3118
        %v3183 = vmul.f32 %v2991, %v3119
        %v3184 = vmul.f32 %v2992, %v3120
        %v3185 = vmul.f32 %v2993, %v3121
        %v3186 = vmul.f32 %v2994, %v3122
        %v3187 = vmul.f32 %v2995, %v3123
        %v3188 = vmul.f32 %v2996, %v3124
        %v3189 = vmul.f32 %v2997, %v3125
        %v3190 = vmul.f32 %v2998, %v3126
        %v3191 = vmul.f32 %v2999, %v3127
        %v3192 = vmul.f32 %v3000, %v3128
        %v3193 = vmul.f32 %v3001, %v3129
        %v3194 = vmul.f32 %v3002, %v3130
        %v3195 = vmul.f32 %v3003, %v3131
        %v3196 = vmul.f32 %v3004, %v3132
        %v3197 = vmul.f32 %v3005, %v3133
        %v3198 = vmul.f32 %v3006, %v3134
        %v3199 = vmul.f32 %v3007, %v3135
        %v3200 = vmul.f32 %v3008, %v3136
        %v3201 = vmax.f32 %v3137, 0.0
        %v3202 = vmax.f32 %v3138, 0.0
        %v3203 = vmax.f32 %v3139, 0.0
        %v3204 = vmax.f32 %v3140, 0.0
        %v3205 = vmax.f32 %v3141, 0.0
        %v3206 = vmax.f32 %v3142, 0.0
        %v3207 = vmax.f32 %v3143, 0.0
        %v3208 = vmax.f32 %v3144, 0.0
        %v3209 = vmax.f32 %v3145, 0.0
        %v3210 = vmax.f32 %v3146, 0.0
        %v3211 = vmax.f32 %v3147, 0.0
        %v3212 = vmax.f32 %v3148, 0.0
        %v3213 = vmax.f32 %v3149, 0.0
        %v3214 = vmax.f32 %v3150, 0.0
        %v3215 = vmax.f32 %v3151, 0.0
        %v3216 = vmax.f32 %v3152, 0.0
        %v3217 = vmax.f32 %v3153, 0.0
        %v3218 = vmax.f32 %v3154, 0.0
        %v3219 = vmax.f32 %v3155, 0.0
        %v3220 = vmax.f32 %v3156, 0.0
        %v3221 = vmax.f32 %v3157, 0.0
        %v3222 = vmax.f32 %v3158, 0.0
        %v3223 = vmax.f32 %v3159, 0.0
        %v3224 = vmax.f32 %v3160, 0.0
        %v3225 = vmax.f32 %v3161, 0.0
        %v3226 = vmax.f32 %v3162, 0.0
        %v3227 = vmax.f32 %v3163, 0.0
        %v3228 = vmax.f32 %v3164, 0.0
        %v3229 = vmax.f32 %v3165, 0.0
        %v3230 = vmax.f32 %v3166, 0.0
        %v3231 = vmax.f32 %v3167, 0.0
        %v3232 = vmax.f32 %v3168, 0.0
        %v3233 = vmax.f32 %v3169, 0.0
        %v3234 = vmax.f32 %v3170, 0.0
        %v3235 = vmax.f32 %v3171, 0.0
        %v3236 = vmax.f32 %v3172, 0.0
        %v3237 = vmax.f32 %v3173, 0.0
        %v3238 = vmax.f32 %v3174, 0.0
        %v3239 = vmax.f32 %v3175, 0.0
        %v3240 = vmax.f32 %v3176, 0.0
        %v3241 = vmax.f32 %v3177, 0.0
        %v3242 = vmax.f32 %v3178, 0.0
        %v3243 = vmax.f32 %v3179, 0.0
        %v3244 = vmax.f32 %v3180, 0.0
        %v3245 = vmax.f32 %v3181, 0.0
        %v3246 = vmax.f32 %v3182, 0.0
        %v3247 = vmax.f32 %v3183, 0.0
        %v3248 = vmax.f32 %v3184, 0.0
        %v3249 = vmax.f32 %v3185, 0.0
        %v3250 = vmax.f32 %v3186, 0.0
        %v3251 = vmax.f32 %v3187, 0.0
        %v3252 = vmax.f32 %v3188, 0.0
        %v3253 = vmax.f32 %v3189, 0.0
        %v3254 = vmax.f32 %v3190, 0.0
        %v3255 = vmax.f32 %v3191, 0.0
        %v3256 = vmax.f32 %v3192, 0.0
        %v3257 = vmax.f32 %v3193, 0.0
        %v3258 = vmax.f32 %v3194, 0.0
        %v3259 = vmax.f32 %v3195, 0.0
        %v3260 = vmax.f32 %v3196, 0.0
        %v3261 = vmax.f32 %v3197, 0.0
        %v3262 = vmax.f32 %v3198, 0.0
        %v3263 = vmax.f32 %v3199, 0.0
        %v3264 = vmax.f32 %v3200, 0.0
        %3265 = vmatprep.subr.mxu0 0.0
        %3266 = vmatpush1.msra.mxu0 %v3201
        %3267 = vmatprep.subr.mxu0 0.0
        %3268 = vmatpush1.msra.mxu0 %v3202
        %3269 = vmatprep.subr.mxu0 0.0
        %3270 = vmatpush1.msra.mxu0 %v3203
        %3271 = vmatprep.subr.mxu0 0.0
        %3272 = vmatpush1.msra.mxu0 %v3204
        %3273 = vmatprep.subr.mxu0 0.0
        %3274 = vmatpush1.msra.mxu0 %v3205
        %3275 = vmatprep.subr.mxu0 0.0
        %3276 = vmatpush1.msra.mxu0 %v3206
        %3277 = vmatprep.subr.mxu0 0.0
        %3278 = vmatpush1.msra.mxu0 %v3207
        %3279 = vmatprep.subr.mxu0 0.0
        %3280 = vmatpush1.msra.mxu0 %v3208
        %3281 = vmatprep.subr.mxu0 0.0
        %3282 = vmatpush1.msra.mxu0 %v3209
        %3283 = vmatprep.subr.mxu0 0.0
        %3284 = vmatpush1.msra.mxu0 %v3210
        %3285 = vmatprep.subr.mxu0 0.0
        %3286 = vmatpush1.msra.mxu0 %v3211
        %3287 = vmatprep.subr.mxu0 0.0
        %3288 = vmatpush1.msra.mxu0 %v3212
        %3289 = vmatprep.subr.mxu0 0.0
        %3290 = vmatpush1.msra.mxu0 %v3213
        %3291 = vmatprep.subr.mxu0 0.0
        %3292 = vmatpush1.msra.mxu0 %v3214
        %3293 = vmatprep.subr.mxu0 0.0
        %3294 = vmatpush1.msra.mxu0 %v3215
        %3295 = vmatprep.subr.mxu0 0.0
        %3296 = vmatpush1.msra.mxu0 %v3216
        %3297 = vmatprep.subr.mxu0 0.0
        %3298 = vmatpush1.msra.mxu0 %v3217
        %3299 = vmatprep.subr.mxu0 0.0
        %3300 = vmatpush1.msra.mxu0 %v3218
        %3301 = vmatprep.subr.mxu0 0.0
        %3302 = vmatpush1.msra.mxu0 %v3219
        %3303 = vmatprep.subr.mxu0 0.0
        %3304 = vmatpush1.msra.mxu0 %v3220
        %3305 = vmatprep.subr.mxu0 0.0
        %3306 = vmatpush1.msra.mxu0 %v3221
        %3307 = vmatprep.subr.mxu0 0.0
        %3308 = vmatpush1.msra.mxu0 %v3222
        %3309 = vmatprep.subr.mxu0 0.0
        %3310 = vmatpush1.msra.mxu0 %v3223
        %3311 = vmatprep.subr.mxu0 0.0
        %3312 = vmatpush1.msra.mxu0 %v3224
        %3313 = vmatprep.subr.mxu0 0.0
        %3314 = vmatpush1.msra.mxu0 %v3225
        %3315 = vmatprep.subr.mxu0 0.0
        %3316 = vmatpush1.msra.mxu0 %v3226
        %3317 = vmatprep.subr.mxu0 0.0
        %3318 = vmatpush1.msra.mxu0 %v3227
        %3319 = vmatprep.subr.mxu0 0.0
        %3320 = vmatpush1.msra.mxu0 %v3228
        %3321 = vmatprep.subr.mxu0 0.0
        %3322 = vmatpush1.msra.mxu0 %v3229
        %3323 = vmatprep.subr.mxu0 0.0
        %3324 = vmatpush1.msra.mxu0 %v3230
        %3325 = vmatprep.subr.mxu0 0.0
        %3326 = vmatpush1.msra.mxu0 %v3231
        %3327 = vmatprep.subr.mxu0 0.0
        %3328 = vmatpush1.msra.mxu0 %v3232
        %3329 = vmatprep.mubr.f32.mxu0 %v221
        %3330 = vmatmul.mubr.f32.gmra.mrb[0].mxu0 %v220
        %v3331 = vpop.f32.mrb[0].mxu0
        %v3332 = vadd.f32 0.0, %v3331
        %v3333 = vpop.f32.mrb[0].mxu0
        %3334 = vdwg.mxu0
        %3335 = vmatprep.subr.mxu0 0.0
        %3336 = vmatpush1.msra.mxu0 %v3233
        %3337 = vmatprep.subr.mxu0 0.0
        %3338 = vmatpush1.msra.mxu0 %v3234
        %3339 = vmatprep.subr.mxu0 0.0
        %3340 = vmatpush1.msra.mxu0 %v3235
        %3341 = vmatprep.subr.mxu0 0.0
        %3342 = vmatpush1.msra.mxu0 %v3236
        %3343 = vmatprep.subr.mxu0 0.0
        %3344 = vmatpush1.msra.mxu0 %v3237
        %3345 = vmatprep.subr.mxu0 0.0
        %3346 = vmatpush1.msra.mxu0 %v3238
        %3347 = vmatprep.subr.mxu0 0.0
        %3348 = vmatpush1.msra.mxu0 %v3239
        %3349 = vmatprep.subr.mxu0 0.0
        %3350 = vmatpush1.msra.mxu0 %v3240
        %3351 = vmatprep.subr.mxu0 0.0
        %3352 = vmatpush1.msra.mxu0 %v3241
        %3353 = vmatprep.subr.mxu0 0.0
        %3354 = vmatpush1.msra.mxu0 %v3242
        %3355 = vmatprep.subr.mxu0 0.0
        %3356 = vmatpush1.msra.mxu0 %v3243
        %3357 = vmatprep.subr.mxu0 0.0
        %3358 = vmatpush1.msra.mxu0 %v3244
        %3359 = vmatprep.subr.mxu0 0.0
        %3360 = vmatpush1.msra.mxu0 %v3245
        %3361 = vmatprep.subr.mxu0 0.0
        %3362 = vmatpush1.msra.mxu0 %v3246
        %3363 = vmatprep.subr.mxu0 0.0
        %3364 = vmatpush1.msra.mxu0 %v3247
        %3365 = vmatprep.subr.mxu0 0.0
        %3366 = vmatpush1.msra.mxu0 %v3248
        %3367 = vmatprep.subr.mxu0 0.0
        %3368 = vmatpush1.msra.mxu0 %v3249
        %3369 = vmatprep.subr.mxu0 0.0
        %3370 = vmatpush1.msra.mxu0 %v3250
        %3371 = vmatprep.subr.mxu0 0.0
        %3372 = vmatpush1.msra.mxu0 %v3251
        %3373 = vmatprep.subr.mxu0 0.0
        %3374 = vmatpush1.msra.mxu0 %v3252
        %3375 = vmatprep.subr.mxu0 0.0
        %3376 = vmatpush1.msra.mxu0 %v3253
        %3377 = vmatprep.subr.mxu0 0.0
        %3378 = vmatpush1.msra.mxu0 %v3254
        %3379 = vmatprep.subr.mxu0 0.0
        %3380 = vmatpush1.msra.mxu0 %v3255
        %3381 = vmatprep.subr.mxu0 0.0
        %3382 = vmatpush1.msra.mxu0 %v3256
        %3383 = vmatprep.subr.mxu0 0.0
        %3384 = vmatpush1.msra.mxu0 %v3257
        %3385 = vmatprep.subr.mxu0 0.0
        %3386 = vmatpush1.msra.mxu0 %v3258
        %3387 = vmatprep.subr.mxu0 0.0
        %3388 = vmatpush1.msra.mxu0 %v3259
        %3389 = vmatprep.subr.mxu0 0.0
        %3390 = vmatpush1.msra.mxu0 %v3260
        %3391 = vmatprep.subr.mxu0 0.0
        %3392 = vmatpush1.msra.mxu0 %v3261
        %3393 = vmatprep.subr.mxu0 0.0
        %3394 = vmatpush1.msra.mxu0 %v3262
        %3395 = vmatprep.subr.mxu0 0.0
        %3396 = vmatpush1.msra.mxu0 %v3263
        %3397 = vmatprep.subr.mxu0 0.0
        %3398 = vmatpush1.msra.mxu0 %v3264
        %3399 = vmatprep.mubr.f32.mxu0 %v223
        %3400 = vmatmul.mubr.f32.gmra.mrb[0].mxu0 %v222
        %v3401 = vpop.f32.mrb[0].mxu0
        %v3402 = vadd.f32 %v3332, %v3401
        %v3403 = vpop.f32.mrb[0].mxu0
        %3404 = vdwg.mxu0
        %3405 = vadd.xlane.f32.xlu0 %v3402
        %v3406 = vpop.xlane.xlu0 %3405
        %v3407 = vmul.f32 %v3402, %v3402
        %3408 = vadd.xlane.f32.xlu0 %v3407
        %v3409 = vpop.xlane.xlu0 %3408
        %v3410 = vmul.f32 %v3406, 0.0078125
        %v3411 = vmul.f32 %v3409, 0.0078125
        %v3412 = vmul.f32 %v3410, %v3410
        %v3413 = vsub.f32 %v3411, %v3412
        %v3414 = vsub.f32 %v3402, %v3410
        %v3415 = vadd.f32 %v3413, 1e-05
        %v3416 = vrsqrt.pop %v3415
        %v3417 = vmul.f32 %v3414, %v3416
        %v3418 = vadd.f32 %v3417, %v1983
        %s3419 = scalar_lea.vmem %s213, 8 [#allocation8]
        %3420 = vst [vmem:[%s3419] sm:$0xff] %v3418
        %s3421 = sand.u32 %s97, 1
        %s3422 = scalar_lea.sflag [#allocation4], %s3421
        %s3423 = sand.u32 %s97, 1
        %s3424 = smul.addr %s3423, 16
        %s3425 = scalar_lea.vmem [#allocation8], %s3424
        // Predicated region
        $region45: #{tpu_custom_call.1} parent=31 // pred_check
          %p3426 = pneg %p107
        $region46: #{tpu_custom_call.1} parent=31 // pred_check_branch
          %3428 = sbr.rel (%p3426) target = $region48
        $region47: #{tpu_custom_call.1} parent=31 // pred_region
          %s3429 = smul.u32 2, %s21
          %s3431 = ssub.s32 256, 256
          %3432 = vsyncadd %s3422, %s3431
          %s3433 = smul.addr %s3429, 128
          %s3434 = scalar_lea.hbm %s3, %s3433
          %s3435 = sshll.u32 %s3425, 4
          %s3436 = int_to_ptr.vmem [resolvable:$true] %s3435
          %3441 = dma.vmem_to_hbm [thread:$0]  %s3436, 256, %s3434, %s3422, 128, 128, 8
        $region48: #{tpu_custom_call.1} parent=31 // pred_fallthru
          _
      $region32: #{tpu_custom_call.1} parent=5 // pred_fallthru
        _
      %p3442 = scmp.le.s32.totalorder 2, %s16
      // Predicated region
      $region49: #{tpu_custom_call.1} parent=5 // pred_check
        %p3443 = pneg %p3442
      $region50: #{tpu_custom_call.1} parent=5 // pred_check_branch
        %3445 = sbr.rel (%p3443) target = $region52
      $region51: #{tpu_custom_call.1} parent=5 // pred_region
        %s3446 = ssub.s32 %s16, 2
        // Predicated region
        $region53: #{tpu_custom_call.1} parent=51 // pred_check
          %p3447 = pneg %p113
        $region54: #{tpu_custom_call.1} parent=51 // pred_check_branch
          %3449 = sbr.rel (%p3447) target = $region56
        $region55: #{tpu_custom_call.1} parent=51 // pred_region
          %s3450 = sand.u32 %s98, 1
          %s3451 = scalar_lea.sflag [#allocation4], %s3450
          %s3452 = sand.u32 %s98, 1
          %s3453 = smul.addr %s3452, 16
          %s3454 = scalar_lea.vmem [#allocation8], %s3453
          %3455 = dma.done %s3451, 256
        $region56: #{tpu_custom_call.1} parent=51 // pred_fallthru
          _
      $region52: #{tpu_custom_call.1} parent=5 // pred_fallthru
        _
    $region6: #{tpu_custom_call.1} parent=1 // loop_footer
      %s20 = sadd.s32 1, %s16
    $region7: #{tpu_custom_call.1} parent=1 // loop_footer_branch
      %15 = sbr.rel target = $region3
    $region8: #{tpu_custom_call.1} parent=1 // loop_exit
      _
    %3456 = vsyncpa [#allocation3], 1
    %s3457 = scalar_lea.sflag [#allocation3], 1
    %3458 = vsyncpa %s3457, 1
    %3459 = vsyncpa [#allocation6], 1
    %3460 = vsyncpa [#allocation4], 1
    %s3461 = scalar_lea.sflag [#allocation4], 1
    %3462 = vsyncpa %s3461, 1

</llo_original>
